<compile_context>
chip_gen: v5e
topology: v5e:2x2
jax: 0.10.0
libtpu: 0.0.40
codegen_flags: <defaults>
</compile_context>

<pallas_src>
import functools
import math

import numpy as np
import jax
import jax.numpy as jnp
from jax.experimental import pallas as pl
from jax.experimental.pallas import tpu as pltpu


# ---------------------------------------------------------------------------
# Generation-aware VMEM budget (v5e/v6e: 128 MiB, v7x: 64 MiB per TensorCore).
# ---------------------------------------------------------------------------
def _vmem_capacity_bytes():
    try:
        info = pltpu.get_tpu_info()
        for name in ("vmem_capacity_bytes", "vmem_bytes", "vmem_size_bytes"):
            v = getattr(info, name, None)
            if v:
                return int(v)
    except Exception:
        pass
    return 64 * 1024 * 1024          # conservative fallback, fits every generation


_VMEM_CAP = _vmem_capacity_bytes()
_VMEM_LIMIT = int(min(0.75 * _VMEM_CAP, 112 * 2**20))   # scoped-VMEM limit requested
_BLOCK_BUDGET = _VMEM_CAP // 4                          # streamed bytes per grid step
_COL_TILE_CAP = 8192                                    # lanes per step (narrow C)


def _mosaic_params(*dims):
    return pltpu.CompilerParams(dimension_semantics=tuple(dims),
                                vmem_limit_bytes=_VMEM_LIMIT)


def _col_tile(n, bytes_per_col, cap=_COL_TILE_CAP):
    """Lane tile: multiple of 128, sized so double-buffered blocks fit the VMEM
    budget, capped, and (when possible) >= 2 grid steps for v7x's 2 TensorCores."""
    if n <= 128:
        return n                                        # block == full array width
    t = _BLOCK_BUDGET // max(1, 2 * bytes_per_col)      # 2x: double buffering
    t = max(128, min(cap, (t // 128) * 128))
    t = min(t, ((n + 127) // 128) * 128)
    while t > 128 and -(-n // t) < 2:                   # aim for >= 2 grid steps
        t = max(128, ((t // 2) // 128) * 128)
    return t


# ---------------------------------------------------------------------------
# Pallas kernels (channel-first, lane-dense outputs, f32 accumulation)
# ---------------------------------------------------------------------------
def _linear_kernel(x_ref, w_ref, b_ref, o_ref, *, relu):
    x = x_ref[...].astype(jnp.float32)
    y = jnp.dot(w_ref[...], x, preferred_element_type=jnp.float32) + b_ref[...]
    if relu:
        y = jnp.maximum(y, 0.0)
    o_ref[...] = y.astype(o_ref.dtype)


def cf_linear(x, w, b, *, out_dtype=jnp.bfloat16, relu=False):
    """y = w @ x + b.  x:(Cin,N)  w:(Cout,Cin)  b:(Cout,1)  ->  (Cout,N)."""
    cin, n = x.shape
    cout = w.shape[0]
    bpc = cin * x.dtype.itemsize + cout * np.dtype(out_dtype).itemsize
    t = _col_tile(n, bpc)
    return pl.pallas_call(
        functools.partial(_linear_kernel, relu=relu),
        out_shape=jax.ShapeDtypeStruct((cout, n), out_dtype),
        grid=(pl.cdiv(n, t),),
        in_specs=[pl.BlockSpec((cin, t), lambda i: (0, i)),
                  pl.BlockSpec((cout, cin), lambda i: (0, 0)),
                  pl.BlockSpec((cout, 1), lambda i: (0, 0))],
        out_specs=pl.BlockSpec((cout, t), lambda i: (0, i)),
        compiler_params=_mosaic_params("parallel"),
    )(x, w, b)


def _linear_res_kernel(x_ref, r_ref, w_ref, b_ref, o_ref):
    x = x_ref[...].astype(jnp.float32)
    r = r_ref[...].astype(jnp.float32)
    y = jnp.dot(w_ref[...], x, preferred_element_type=jnp.float32) + b_ref[...] + r
    o_ref[...] = y.astype(o_ref.dtype)


def cf_linear_residual(x, res, w, b, *, out_dtype=jnp.bfloat16):
    """ModifyDimensions (pointwise) + residual fused: w @ x + b + res."""
    cin, n = x.shape
    cout = w.shape[0]
    bpc = (cin * x.dtype.itemsize + cout * res.dtype.itemsize
           + cout * np.dtype(out_dtype).itemsize)
    t = _col_tile(n, bpc)
    return pl.pallas_call(
        _linear_res_kernel,
        out_shape=jax.ShapeDtypeStruct((cout, n), out_dtype),
        grid=(pl.cdiv(n, t),),
        in_specs=[pl.BlockSpec((cin, t), lambda i: (0, i)),
                  pl.BlockSpec((cout, t), lambda i: (0, i)),
                  pl.BlockSpec((cout, cin), lambda i: (0, 0)),
                  pl.BlockSpec((cout, 1), lambda i: (0, 0))],
        out_specs=pl.BlockSpec((cout, t), lambda i: (0, i)),
        compiler_params=_mosaic_params("parallel"),
    )(x, res, w, b)


def _sum_ff_kernel(x1_ref, x2_ref, x3_ref, w1_ref, b1_ref, w2_ref, b2_ref, o_ref):
    x = (x1_ref[...].astype(jnp.float32) + x2_ref[...].astype(jnp.float32)
         + x3_ref[...].astype(jnp.float32))
    h = jnp.dot(w1_ref[...], x, preferred_element_type=jnp.float32) + b1_ref[...]
    h = jnp.maximum(h, 0.0)
    y = jnp.dot(w2_ref[...], h, preferred_element_type=jnp.float32) + b2_ref[...]
    o_ref[...] = y.astype(o_ref.dtype)


def cf_sum_ff(x1, x2, x3, w1, b1, w2, b2, *, out_dtype=jnp.bfloat16):
    """(x1+x2+x3) -> Linear -> ReLU -> Linear; hidden never leaves VMEM."""
    cin, n = x1.shape
    hid, cout = w1.shape[0], w2.shape[0]
    bpc = (3 * cin * x1.dtype.itemsize + cout * np.dtype(out_dtype).itemsize
           + hid * 4)               # include the f32 hidden temp in the budget
    t = _col_tile(n, bpc)
    return pl.pallas_call(
        _sum_ff_kernel,
        out_shape=jax.ShapeDtypeStruct((cout, n), out_dtype),
        grid=(pl.cdiv(n, t),),
        in_specs=[pl.BlockSpec((cin, t), lambda i: (0, i)),
                  pl.BlockSpec((cin, t), lambda i: (0, i)),
                  pl.BlockSpec((cin, t), lambda i: (0, i)),
                  pl.BlockSpec((hid, cin), lambda i: (0, 0)),
                  pl.BlockSpec((hid, 1), lambda i: (0, 0)),
                  pl.BlockSpec((cout, hid), lambda i: (0, 0)),
                  pl.BlockSpec((cout, 1), lambda i: (0, 0))],
        out_specs=pl.BlockSpec((cout, t), lambda i: (0, i)),
        compiler_params=_mosaic_params("parallel"),
    )(x1, x2, x3, w1, b1, w2, b2)


def _mix_kernel(xr_ref, xi_ref, wa_ref, wb_ref, y_ref):
    # xr/xi: (Mc, Cin, T)   wa/wb: (Mc, 2Cout, Cin)   y: (Mc, 2Cout, T)
    xr = xr_ref[...].astype(jnp.float32)
    xi = xi_ref[...].astype(jnp.float32)
    y = jnp.einsum("moc,mcr->mor", wa_ref[...], xr,
                   preferred_element_type=jnp.float32)
    y = y + jnp.einsum("moc,mcr->mor", wb_ref[...], xi,
                       preferred_element_type=jnp.float32)
    y_ref[...] = y.astype(y_ref.dtype)


def cf_mix(xr, xi, wa, wb, *, out_dtype=jnp.bfloat16):
    """Per-mode complex channel mixing, mode axis chunked to bound VMEM."""
    m, ci, n = xr.shape
    co2 = wa.shape[1]
    mc = max(1, math.gcd(m, 8))                 # modes per grid step
    bpc = mc * (2 * ci * xr.dtype.itemsize + co2 * np.dtype(out_dtype).itemsize)
    t = _col_tile(n, bpc)
    return pl.pallas_call(
        _mix_kernel,
        out_shape=jax.ShapeDtypeStruct((m, co2, n), out_dtype),
        grid=(m // mc, pl.cdiv(n, t)),
        in_specs=[pl.BlockSpec((mc, ci, t), lambda g, i: (g, 0, i)),
                  pl.BlockSpec((mc, ci, t), lambda g, i: (g, 0, i)),
                  pl.BlockSpec((mc, co2, ci), lambda g, i: (g, 0, 0)),
                  pl.BlockSpec((mc, co2, ci), lambda g, i: (g, 0, 0))],
        out_specs=pl.BlockSpec((mc, co2, t), lambda g, i: (g, 0, i)),
        compiler_params=_mosaic_params("parallel", "parallel"),
    )(xr, xi, wa, wb)


def _heads_kernel(x_ref, w1_ref, b1_ref, w2_ref, b2_ref, o_ref):
    x = x_ref[...].astype(jnp.float32)
    h = jnp.dot(w1_ref[...], x, preferred_element_type=jnp.float32) + b1_ref[...]
    y = jnp.dot(w2_ref[...], h, preferred_element_type=jnp.float32) + b2_ref[...]
    o_ref[...] = y.astype(o_ref.dtype)


def cf_heads(x, w1c, b1c, w2blk, b2cat):
    """Fused QE/QN/QZ heads: one read of xf, 384-wide hidden in VMEM, ONE output."""
    cin, n = x.shape
    hid = w1c.shape[0]                    # 3 * 128
    out3 = w2blk.shape[0]                 # 3 * output_dim
    bpc = cin * x.dtype.itemsize + out3 * 4 + hid * 4
    t = _col_tile(n, bpc)
    return pl.pallas_call(
        _heads_kernel,
        out_shape=jax.ShapeDtypeStruct((out3, n), jnp.float32),
        grid=(pl.cdiv(n, t),),
        in_specs=[pl.BlockSpec((cin, t), lambda i: (0, i)),
                  pl.BlockSpec((hid, cin), lambda i: (0, 0)),
                  pl.BlockSpec((hid, 1), lambda i: (0, 0)),
                  pl.BlockSpec((out3, hid), lambda i: (0, 0)),
                  pl.BlockSpec((out3, 1), lambda i: (0, 0))],
        out_specs=pl.BlockSpec((out3, t), lambda i: (0, i)),
        compiler_params=_mosaic_params("parallel"),
    )(x, w1c, b1c, w2blk, b2cat)


# ---------------------------------------------------------------------------
# Spectral conv pieces: real DFT matrices + Pallas mode mixing (no jnp.fft)
# ---------------------------------------------------------------------------
def _dft_matrices(D, M):
    """Real matrices implementing rfft(norm='ortho') truncated to M modes (Fr, Fi)
    and the matching zero-padded irfft(norm='ortho') (Gr, Gi)."""
    n = np.arange(D)
    m = np.arange(M)
    ang = 2.0 * np.pi * np.outer(m, n) / D              # (M, D)
    s = 1.0 / np.sqrt(D)
    fr = np.cos(ang) * s
    fi = -np.sin(ang) * s
    c = np.full(M, 2.0)
    c[0] = 1.0
    if D % 2 == 0 and M > D // 2:
        c[D // 2] = 1.0                                  # Nyquist bin (if retained)
    gr = np.cos(ang).T * s * c[None, :]                  # (D, M)
    gi = -np.sin(ang).T * s * c[None, :]
    to = lambda a: jnp.asarray(a, jnp.float32)
    return to(fr), to(fi), to(gr), to(gi)


_FWD_EQ = {2: "mx,cbxyz->mcbyz", 3: "my,cbxyz->mcbxz", 4: "mz,cbxyz->mcbxy"}
_INV_EQ = {2: "xm,mobyz->obxyz", 3: "ym,mobxz->obxyz", 4: "zm,mobxy->obxyz"}


def _axis_spectral(x5, axis, pa):
    """rfft -> truncate -> per-mode complex channel mix -> zero-pad -> irfft along
    one spatial axis; DFT/IDFT are real matmuls, mixing is the Pallas kernel."""
    C = x5.shape[0]
    M = pa["Fr"].shape[0]
    xr = jnp.einsum(_FWD_EQ[axis], pa["Fr"], x5).astype(jnp.bfloat16)
    xi = jnp.einsum(_FWD_EQ[axis], pa["Fi"], x5).astype(jnp.bfloat16)
    rest = xr.shape[2:]
    ra = math.prod(rest)
    yp = cf_mix(xr.reshape(M, C, ra), xi.reshape(M, C, ra), pa["wa"], pa["wb"])
    co = yp.shape[1] // 2
    yp = yp.reshape((M, 2 * co) + rest)
    out = (jnp.einsum(_INV_EQ[axis], pa["Gr"], yp[:, :co])
           + jnp.einsum(_INV_EQ[axis], pa["Gi"], yp[:, co:]))
    return out.astype(jnp.bfloat16)                      # (Cout, B, D1, D2, D3)


def get_grid_cf(B, D1, D2, D3):
    g1 = jnp.broadcast_to(jnp.linspace(0.0, 1.0, D1, dtype=jnp.float32)
                          .reshape(1, 1, D1, 1, 1), (1, B, D1, D2, D3))
    g2 = jnp.broadcast_to(jnp.linspace(0.0, 1.0, D2, dtype=jnp.float32)
                          .reshape(1, 1, 1, D2, 1), (1, B, D1, D2, D3))
    g3 = jnp.broadcast_to(jnp.linspace(0.0, 1.0, D3, dtype=jnp.float32)
                          .reshape(1, 1, 1, 1, D3), (1, B, D1, D2, D3))
    return jnp.concatenate([g1, g2, g3], axis=0)


def ffno3d_forward(params, x, s, *, n_layers):
    """x: (B, D1, D2, D3, 1) geology; s: (B, 1, Ds) source."""
    B, D1, D2, D3, _ = x.shape
    Ds = s.shape[-1]
    n = B * D1 * D2 * D3

    # input features channel-first: [geology, grid1, grid2, grid3, source...]
    x_cf = jnp.moveaxis(x, -1, 0).astype(jnp.float32)
    grid = get_grid_cf(B, D1, D2, D3)
    s_cf = jnp.broadcast_to(jnp.transpose(s, (2, 0, 1)).reshape(Ds, B, 1, 1, 1),
                            (Ds, B, D1, D2, D3)).astype(jnp.float32)
    feat = jnp.concatenate([x_cf, grid, s_cf], axis=0)   # (C0, B, D1, D2, D3)

    # uplift P (lane-dense channel-first linear); activations stored bf16
    h = cf_linear(feat.reshape(feat.shape[0], n), params["P_w"], params["P_b"])

    b2 = None
    for i in range(n_layers):
        sp = params["spectral"][i]
        ci = h.shape[0]
        x5 = h.reshape(ci, B, D1, D2, D3)
        bx = _axis_spectral(x5, 2, sp["x"])
        by = _axis_spectral(x5, 3, sp["y"])
        bz = _axis_spectral(x5, 4, sp["z"])
        co = bx.shape[0]
        # (xx + xy + xz) -> FeedForward(dim -> 4*dim -> ReLU -> dim), fused
        b2 = cf_sum_ff(bx.reshape(co, n), by.reshape(co, n), bz.reshape(co, n),
                       sp["ff_w1"], sp["ff_b1"], sp["ff_w2"], sp["ff_b2"])
        # ModifyDimensions3d (pointwise) + residual add, fused
        mw, mb = params["modif"][i]
        h = cf_linear_residual(h, b2, mw, mb)

    # decoder heads consume the LAST backcast (reference: xf = b)
    q = params["Q"]
    y3 = cf_heads(b2, q["w1c"], q["b1c"], q["w2blk"], q["b2cat"])  # (3*od, n)
    od = q["w2blk"].shape[0] // 3
    y3 = y3.reshape(3, od, B, D1, D2, D3)
    uE = jnp.moveaxis(y3[0], 0, -1)
    uN = jnp.moveaxis(y3[1], 0, -1)
    uZ = jnp.moveaxis(y3[2], 0, -1)
    return uE, uN, uZ


# ---------------------------------------------------------------------------
# Deterministic synthetic parameters (shapes follow the module __init__).
# Spectral weights pre-packed so the mixing kernel needs no in-kernel transposes:
#   y = wa @ xr + wb @ xi,  wa = [[wr^T],[wi^T]],  wb = [[-wi^T],[wr^T]]  per mode.
# ---------------------------------------------------------------------------
def _pack_mix_weights(key, cin, cout, M, scale):
    kr, ki = jax.random.split(key)
    wr = scale * jax.random.normal(kr, (cin, cout, M), jnp.float32)
    wi = scale * jax.random.normal(ki, (cin, cout, M), jnp.float32)
    wrt = jnp.transpose(wr, (2, 1, 0))                   # (M, Cout, Cin)
    wit = jnp.transpose(wi, (2, 1, 0))
    wa = jnp.concatenate([wrt, wit], axis=1)             # (M, 2Cout, Cin)
    wb = jnp.concatenate([-wit, wrt], axis=1)
    return wa, wb


def init_params(key, input_dim, list_width, n_layers, modes_list, output_dim, dims):
    D1, D2, D3 = dims
    keys = iter(jax.random.split(key, 16 + 8 * n_layers))

    def linear(k, cin, cout):
        kw, kb = jax.random.split(k)
        lim = 1.0 / math.sqrt(cin)
        w = jax.random.uniform(kw, (cout, cin), jnp.float32, -lim, lim)
        b = jax.random.uniform(kb, (cout, 1), jnp.float32, -lim, lim)
        return w, b

    params = {}
    params["P_w"], params["P_b"] = linear(next(keys), input_dim, list_width[0])

    params["spectral"], params["modif"] = [], []
    for i in range(n_layers):
        cin, cout = list_width[i], list_width[i + 1]
        Mx, My, Mz = modes_list[i]
        scale = math.sqrt(2.0 / (cin + cout))            # xavier-ish
        sp = {}
        for tag, M, D in (("x", Mx, D1), ("y", My, D2), ("z", Mz, D3)):
            wa, wb = _pack_mix_weights(next(keys), cin, cout, M, scale)
            fr, fi, gr, gi = _dft_matrices(D, M)
            sp[tag] = {"wa": wa, "wb": wb, "Fr": fr, "Fi": fi, "Gr": gr, "Gi": gi}
        hidden = cout * 4                                 # FeedForward factor = 4
        sp["ff_w1"], sp["ff_b1"] = linear(next(keys), cout, hidden)
        sp["ff_w2"], sp["ff_b2"] = linear(next(keys), hidden, cout)
        params["spectral"].append(sp)
        params["modif"].append(linear(next(keys), cin, cout))

    head_hidden = 128
    clast = list_width[-1]
    w1s, b1s, w2s, b2s = [], [], [], []
    for _ in range(3):                                    # QE, QN, QZ
        w1, b1 = linear(next(keys), clast, head_hidden)
        w2, b2 = linear(next(keys), head_hidden, output_dim)
        w1s.append(w1), b1s.append(b1), w2s.append(w2), b2s.append(b2)
    q = {"w1c": jnp.concatenate(w1s, axis=0),             # (3*128, clast)
         "b1c": jnp.concatenate(b1s, axis=0),             # (3*128, 1)
         "b2cat": jnp.concatenate(b2s, axis=0)}           # (3*od, 1)
    blk = jnp.zeros((3 * output_dim, 3 * head_hidden), jnp.float32)
    for e in range(3):
        blk = blk.at[e * output_dim:(e + 1) * output_dim,
                     e * head_hidden:(e + 1) * head_hidden].set(w2s[e])
    q["w2blk"] = blk
    params["Q"] = q
    return params


# ---------------------------------------------------------------------------
if __name__ == "__main__":
    B, D1, D2, D3 = 2, 8, 8, 8
    Ds = 6                                   # 3 coordinates + 3 angles
    width = 8
    n_layers = 2
    modes_list = [(4, 4, 4)] * n_layers
    output_dim = 1
    input_dim = 1 + 3 + Ds                   # geology + grid + source
    list_width = [width] * (n_layers + 1)

    # sanity: real DFT matrices == rfft -> truncate -> zero-pad -> irfft (ortho)
    rng = np.random.RandomState(0)
    for (D, M) in ((8, 4), (8, 5), (7, 3)):
        fr, fi, gr, gi = (np.asarray(a, np.float64) for a in _dft_matrices(D, M))
        v = rng.randn(D)
        xk = np.fft.rfft(v, norm="ortho")[:M]
        full = np.zeros(D // 2 + 1, np.complex128)
        full[:M] = xk
        ref = np.fft.irfft(full, n=D, norm="ortho")
        got = gr @ (fr @ v) + gi @ (fi @ v)
        assert np.allclose(got, ref, atol=1e-5), "DFT matrix mismatch"

    key = jax.random.PRNGKey(0)
    kx, ks, kp = jax.random.split(key, 3)
    x = jax.random.normal(kx, (B, D1, D2, D3, 1), jnp.float32)
    s = jax.random.normal(ks, (B, 1, Ds), jnp.float32)
    params = init_params(kp, input_dim, list_width, n_layers, modes_list,
                         output_dim, (D1, D2, D3))

    fwd = jax.jit(functools.partial(ffno3d_forward, n_layers=n_layers))
    uE, uN, uZ = fwd(params, x, s)
    jax.block_until_ready((uE, uN, uZ))
    assert uE.shape == (B, D1, D2, D3, output_dim)
    assert uN.shape == uE.shape and uZ.shape == uE.shape
    assert bool(jnp.all(jnp.isfinite(uE))) and bool(jnp.all(jnp.isfinite(uZ)))
    print("KERNEL_OK")
</pallas_src>

<mosaic_0001>
module attributes {stable_mosaic.version = 11 : i64} {
  func.func @_linear_kernel(%arg0: i32, %arg1: memref<10x512xf32, #tpu.memory_space<vmem>>, %arg2: memref<8x10xf32, #tpu.memory_space<vmem>>, %arg3: memref<8x1xf32, #tpu.memory_space<vmem>>, %arg4: memref<8x512xbf16, #tpu.memory_space<vmem>>) attributes {dimension_semantics = [#tpu.dimension_semantics<parallel>], iteration_bounds = array<i64: 2>, scalar_prefetch = 0 : i64, scratch_operands = 0 : i64, tpu.core_type = #tpu.core_type<tc>, window_params = [{transform_indices = @transform_0, window_bounds = array<i64: 10, 512>}, {pipeline_mode = #tpu.pipeline_mode<synchronous>, transform_indices = @transform_1, window_bounds = array<i64: 8, 10>}, {pipeline_mode = #tpu.pipeline_mode<synchronous>, transform_indices = @transform_2, window_bounds = array<i64: 8, 1>}, {transform_indices = @transform_3, window_bounds = array<i64: 8, 512>}]} {
    %c0 = arith.constant 0 : index
    %c0_0 = arith.constant 0 : index
    %0 = vector.load %arg1[%c0, %c0_0] : memref<10x512xf32, #tpu.memory_space<vmem>>, vector<10x512xf32>
    %c0_1 = arith.constant 0 : index
    %c0_2 = arith.constant 0 : index
    %1 = vector.load %arg2[%c0_1, %c0_2] : memref<8x10xf32, #tpu.memory_space<vmem>>, vector<8x10xf32>
    %cst = arith.constant dense<0.000000e+00> : vector<8x512xf32>
    %2 = tpu.matmul %1, %0, %cst {dimension_numbers = #tpu.dot_dimension_numbers<[1], [0], [0], [1], [0, 0, 1, 1], [], []>} : vector<8x10xf32>, vector<10x512xf32>, vector<8x512xf32> -> vector<8x512xf32>
    %c0_3 = arith.constant 0 : index
    %c0_4 = arith.constant 0 : index
    %3 = vector.load %arg3[%c0_3, %c0_4] : memref<8x1xf32, #tpu.memory_space<vmem>>, vector<8x1xf32>
    %4 = vector.broadcast %3 : vector<8x1xf32> to vector<8x512xf32>
    %5 = arith.addf %2, %4 : vector<8x512xf32>
    %6 = arith.truncf %5 : vector<8x512xf32> to vector<8x512xbf16>
    %c0_5 = arith.constant 0 : index
    %c0_6 = arith.constant 0 : index
    %7 = vector.load %arg4[%c0_5, %c0_6] : memref<8x512xbf16, #tpu.memory_space<vmem>>, vector<8x512xbf16>
    tpu.vector_store %arg4[%c0_5, %c0_6], %6 {strides = array<i32>} : memref<8x512xbf16, #tpu.memory_space<vmem>>, vector<8x512xbf16>,
    return
  }
  func.func @transform_0(%arg0: i32) -> (i32, i32) {
    %c0_i32 = arith.constant 0 : i32
    %c0_i32_0 = arith.constant 0 : i32
    return %c0_i32, %arg0 : i32, i32
  }
  func.func @transform_1(%arg0: i32) -> (i32, i32) {
    %c0_i32 = arith.constant 0 : i32
    %c0_i32_0 = arith.constant 0 : i32
    %c0_i32_1 = arith.constant 0 : i32
    return %c0_i32, %c0_i32_0 : i32, i32
  }
  func.func @transform_2(%arg0: i32) -> (i32, i32) {
    %c0_i32 = arith.constant 0 : i32
    %c0_i32_0 = arith.constant 0 : i32
    %c0_i32_1 = arith.constant 0 : i32
    return %c0_i32, %c0_i32_0 : i32, i32
  }
  func.func @transform_3(%arg0: i32) -> (i32, i32) {
    %c0_i32 = arith.constant 0 : i32
    %c0_i32_0 = arith.constant 0 : i32
    return %c0_i32, %arg0 : i32, i32
  }
}

module attributes {stable_mosaic.version = 11 : i64} {
  func.func @_mix_kernel(%arg0: i32, %arg1: i32, %arg2: memref<4x8x128xbf16, #tpu.memory_space<vmem>>, %arg3: memref<4x8x128xbf16, #tpu.memory_space<vmem>>, %arg4: memref<4x16x8xf32, #tpu.memory_space<vmem>>, %arg5: memref<4x16x8xf32, #tpu.memory_space<vmem>>, %arg6: memref<4x16x128xbf16, #tpu.memory_space<vmem>>) attributes {dimension_semantics = [#tpu.dimension_semantics<parallel>, #tpu.dimension_semantics<parallel>], iteration_bounds = array<i64: 1, 1>, scalar_prefetch = 0 : i64, scratch_operands = 0 : i64, tpu.core_type = #tpu.core_type<tc>, window_params = [{transform_indices = @transform_0, window_bounds = array<i64: 4, 8, 128>}, {transform_indices = @transform_1, window_bounds = array<i64: 4, 8, 128>}, {transform_indices = @transform_2, window_bounds = array<i64: 4, 16, 8>}, {transform_indices = @transform_3, window_bounds = array<i64: 4, 16, 8>}, {transform_indices = @transform_4, window_bounds = array<i64: 4, 16, 128>}]} {
    %c0 = arith.constant 0 : index
    %c0_0 = arith.constant 0 : index
    %c0_1 = arith.constant 0 : index
    %0 = vector.load %arg2[%c0, %c0_0, %c0_1] : memref<4x8x128xbf16, #tpu.memory_space<vmem>>, vector<4x8x128xbf16>
    %1 = arith.extf %0 : vector<4x8x128xbf16> to vector<4x8x128xf32>
    %c0_2 = arith.constant 0 : index
    %c0_3 = arith.constant 0 : index
    %c0_4 = arith.constant 0 : index
    %2 = vector.load %arg3[%c0_2, %c0_3, %c0_4] : memref<4x8x128xbf16, #tpu.memory_space<vmem>>, vector<4x8x128xbf16>
    %3 = arith.extf %2 : vector<4x8x128xbf16> to vector<4x8x128xf32>
    %c0_5 = arith.constant 0 : index
    %c0_6 = arith.constant 0 : index
    %c0_7 = arith.constant 0 : index
    %4 = vector.load %arg4[%c0_5, %c0_6, %c0_7] : memref<4x16x8xf32, #tpu.memory_space<vmem>>, vector<4x16x8xf32>
    "tpu.trace_start"() <{level = 10 : i32, message = "moc,mcr->mor"}> : () -> ()
    %cst = arith.constant dense<0.000000e+00> : vector<4x16x128xf32>
    %5 = tpu.matmul %4, %1, %cst {dimension_numbers = #tpu.dot_dimension_numbers<[2], [1], [1], [2], [0, 0, 0, 1, 1, 2], [0], [0]>} : vector<4x16x8xf32>, vector<4x8x128xf32>, vector<4x16x128xf32> -> vector<4x16x128xf32>
    "tpu.trace_stop"() : () -> ()
    %c0_8 = arith.constant 0 : index
    %c0_9 = arith.constant 0 : index
    %c0_10 = arith.constant 0 : index
    %6 = vector.load %arg5[%c0_8, %c0_9, %c0_10] : memref<4x16x8xf32, #tpu.memory_space<vmem>>, vector<4x16x8xf32>
    "tpu.trace_start"() <{level = 10 : i32, message = "moc,mcr->mor"}> : () -> ()
    %cst_11 = arith.constant dense<0.000000e+00> : vector<4x16x128xf32>
    %7 = tpu.matmul %6, %3, %cst_11 {dimension_numbers = #tpu.dot_dimension_numbers<[2], [1], [1], [2], [0, 0, 0, 1, 1, 2], [0], [0]>} : vector<4x16x8xf32>, vector<4x8x128xf32>, vector<4x16x128xf32> -> vector<4x16x128xf32>
    "tpu.trace_stop"() : () -> ()
    %8 = arith.addf %5, %7 : vector<4x16x128xf32>
    %9 = arith.truncf %8 : vector<4x16x128xf32> to vector<4x16x128xbf16>
    %c0_12 = arith.constant 0 : index
    %c0_13 = arith.constant 0 : index
    %c0_14 = arith.constant 0 : index
    %10 = vector.load %arg6[%c0_12, %c0_13, %c0_14] : memref<4x16x128xbf16, #tpu.memory_space<vmem>>, vector<4x16x128xbf16>
    tpu.vector_store %arg6[%c0_12, %c0_13, %c0_14], %9 {strides = array<i32>} : memref<4x16x128xbf16, #tpu.memory_space<vmem>>, vector<4x16x128xbf16>,
    return
  }
  func.func @transform_0(%arg0: i32, %arg1: i32) -> (i32, i32, i32) {
    %c0_i32 = arith.constant 0 : i32
    %c0_i32_0 = arith.constant 0 : i32
    return %arg0, %c0_i32, %arg1 : i32, i32, i32
  }
  func.func @transform_1(%arg0: i32, %arg1: i32) -> (i32, i32, i32) {
    %c0_i32 = arith.constant 0 : i32
    %c0_i32_0 = arith.constant 0 : i32
    return %arg0, %c0_i32, %arg1 : i32, i32, i32
  }
  func.func @transform_2(%arg0: i32, %arg1: i32) -> (i32, i32, i32) {
    %c0_i32 = arith.constant 0 : i32
    %c0_i32_0 = arith.constant 0 : i32
    %c0_i32_1 = arith.constant 0 : i32
    return %arg0, %c0_i32, %c0_i32_0 : i32, i32, i32
  }
  func.func @transform_3(%arg0: i32, %arg1: i32) -> (i32, i32, i32) {
    %c0_i32 = arith.constant 0 : i32
    %c0_i32_0 = arith.constant 0 : i32
    %c0_i32_1 = arith.constant 0 : i32
    return %arg0, %c0_i32, %c0_i32_0 : i32, i32, i32
  }
  func.func @transform_4(%arg0: i32, %arg1: i32) -> (i32, i32, i32) {
    %c0_i32 = arith.constant 0 : i32
    %c0_i32_0 = arith.constant 0 : i32
    return %arg0, %c0_i32, %arg1 : i32, i32, i32
  }
}

module attributes {stable_mosaic.version = 11 : i64} {
  func.func @_sum_ff_kernel(%arg0: i32, %arg1: memref<8x512xbf16, #tpu.memory_space<vmem>>, %arg2: memref<8x512xbf16, #tpu.memory_space<vmem>>, %arg3: memref<8x512xbf16, #tpu.memory_space<vmem>>, %arg4: memref<32x8xf32, #tpu.memory_space<vmem>>, %arg5: memref<32x1xf32, #tpu.memory_space<vmem>>, %arg6: memref<8x32xf32, #tpu.memory_space<vmem>>, %arg7: memref<8x1xf32, #tpu.memory_space<vmem>>, %arg8: memref<8x512xbf16, #tpu.memory_space<vmem>>) attributes {dimension_semantics = [#tpu.dimension_semantics<parallel>], iteration_bounds = array<i64: 2>, scalar_prefetch = 0 : i64, scratch_operands = 0 : i64, tpu.core_type = #tpu.core_type<tc>, window_params = [{transform_indices = @transform_0, window_bounds = array<i64: 8, 512>}, {transform_indices = @transform_1, window_bounds = array<i64: 8, 512>}, {transform_indices = @transform_2, window_bounds = array<i64: 8, 512>}, {pipeline_mode = #tpu.pipeline_mode<synchronous>, transform_indices = @transform_3, window_bounds = array<i64: 32, 8>}, {pipeline_mode = #tpu.pipeline_mode<synchronous>, transform_indices = @transform_4, window_bounds = array<i64: 32, 1>}, {pipeline_mode = #tpu.pipeline_mode<synchronous>, transform_indices = @transform_5, window_bounds = array<i64: 8, 32>}, {pipeline_mode = #tpu.pipeline_mode<synchronous>, transform_indices = @transform_6, window_bounds = array<i64: 8, 1>}, {transform_indices = @transform_7, window_bounds = array<i64: 8, 512>}]} {
    %c0 = arith.constant 0 : index
    %c0_0 = arith.constant 0 : index
    %0 = vector.load %arg1[%c0, %c0_0] : memref<8x512xbf16, #tpu.memory_space<vmem>>, vector<8x512xbf16>
    %1 = arith.extf %0 : vector<8x512xbf16> to vector<8x512xf32>
    %c0_1 = arith.constant 0 : index
    %c0_2 = arith.constant 0 : index
    %2 = vector.load %arg2[%c0_1, %c0_2] : memref<8x512xbf16, #tpu.memory_space<vmem>>, vector<8x512xbf16>
    %3 = arith.extf %2 : vector<8x512xbf16> to vector<8x512xf32>
    %4 = arith.addf %1, %3 : vector<8x512xf32>
    %c0_3 = arith.constant 0 : index
    %c0_4 = arith.constant 0 : index
    %5 = vector.load %arg3[%c0_3, %c0_4] : memref<8x512xbf16, #tpu.memory_space<vmem>>, vector<8x512xbf16>
    %6 = arith.extf %5 : vector<8x512xbf16> to vector<8x512xf32>
    %7 = arith.addf %4, %6 : vector<8x512xf32>
    %c0_5 = arith.constant 0 : index
    %c0_6 = arith.constant 0 : index
    %8 = vector.load %arg4[%c0_5, %c0_6] : memref<32x8xf32, #tpu.memory_space<vmem>>, vector<32x8xf32>
    %cst = arith.constant dense<0.000000e+00> : vector<32x512xf32>
    %9 = tpu.matmul %8, %7, %cst {dimension_numbers = #tpu.dot_dimension_numbers<[1], [0], [0], [1], [0, 0, 1, 1], [], []>} : vector<32x8xf32>, vector<8x512xf32>, vector<32x512xf32> -> vector<32x512xf32>
    %c0_7 = arith.constant 0 : index
    %c0_8 = arith.constant 0 : index
    %10 = vector.load %arg5[%c0_7, %c0_8] : memref<32x1xf32, #tpu.memory_space<vmem>>, vector<32x1xf32>
    %11 = vector.broadcast %10 : vector<32x1xf32> to vector<32x512xf32>
    %12 = arith.addf %9, %11 : vector<32x512xf32>
    %cst_9 = arith.constant 0.000000e+00 : f32
    %13 = vector.broadcast %cst_9 : f32 to vector<32x512xf32>
    %14 = arith.maximumf %12, %13 : vector<32x512xf32>
    %c0_10 = arith.constant 0 : index
    %c0_11 = arith.constant 0 : index
    %15 = vector.load %arg6[%c0_10, %c0_11] : memref<8x32xf32, #tpu.memory_space<vmem>>, vector<8x32xf32>
    %cst_12 = arith.constant dense<0.000000e+00> : vector<8x512xf32>
    %16 = tpu.matmul %15, %14, %cst_12 {dimension_numbers = #tpu.dot_dimension_numbers<[1], [0], [0], [1], [0, 0, 1, 1], [], []>} : vector<8x32xf32>, vector<32x512xf32>, vector<8x512xf32> -> vector<8x512xf32>
    %c0_13 = arith.constant 0 : index
    %c0_14 = arith.constant 0 : index
    %17 = vector.load %arg7[%c0_13, %c0_14] : memref<8x1xf32, #tpu.memory_space<vmem>>, vector<8x1xf32>
    %18 = vector.broadcast %17 : vector<8x1xf32> to vector<8x512xf32>
    %19 = arith.addf %16, %18 : vector<8x512xf32>
    %20 = arith.truncf %19 : vector<8x512xf32> to vector<8x512xbf16>
    %c0_15 = arith.constant 0 : index
    %c0_16 = arith.constant 0 : index
    %21 = vector.load %arg8[%c0_15, %c0_16] : memref<8x512xbf16, #tpu.memory_space<vmem>>, vector<8x512xbf16>
    tpu.vector_store %arg8[%c0_15, %c0_16], %20 {strides = array<i32>} : memref<8x512xbf16, #tpu.memory_space<vmem>>, vector<8x512xbf16>,
    return
  }
  func.func @transform_0(%arg0: i32) -> (i32, i32) {
    %c0_i32 = arith.constant 0 : i32
    %c0_i32_0 = arith.constant 0 : i32
    return %c0_i32, %arg0 : i32, i32
  }
  func.func @transform_1(%arg0: i32) -> (i32, i32) {
    %c0_i32 = arith.constant 0 : i32
    %c0_i32_0 = arith.constant 0 : i32
    return %c0_i32, %arg0 : i32, i32
  }
  func.func @transform_2(%arg0: i32) -> (i32, i32) {
    %c0_i32 = arith.constant 0 : i32
    %c0_i32_0 = arith.constant 0 : i32
    return %c0_i32, %arg0 : i32, i32
  }
  func.func @transform_3(%arg0: i32) -> (i32, i32) {
    %c0_i32 = arith.constant 0 : i32
    %c0_i32_0 = arith.constant 0 : i32
    %c0_i32_1 = arith.constant 0 : i32
    return %c0_i32, %c0_i32_0 : i32, i32
  }
  func.func @transform_4(%arg0: i32) -> (i32, i32) {
    %c0_i32 = arith.constant 0 : i32
    %c0_i32_0 = arith.constant 0 : i32
    %c0_i32_1 = arith.constant 0 : i32
    return %c0_i32, %c0_i32_0 : i32, i32
  }
  func.func @transform_5(%arg0: i32) -> (i32, i32) {
    %c0_i32 = arith.constant 0 : i32
    %c0_i32_0 = arith.constant 0 : i32
    %c0_i32_1 = arith.constant 0 : i32
    return %c0_i32, %c0_i32_0 : i32, i32
  }
  func.func @transform_6(%arg0: i32) -> (i32, i32) {
    %c0_i32 = arith.constant 0 : i32
    %c0_i32_0 = arith.constant 0 : i32
    %c0_i32_1 = arith.constant 0 : i32
    return %c0_i32, %c0_i32_0 : i32, i32
  }
  func.func @transform_7(%arg0: i32) -> (i32, i32) {
    %c0_i32 = arith.constant 0 : i32
    %c0_i32_0 = arith.constant 0 : i32
    return %c0_i32, %arg0 : i32, i32
  }
}

module attributes {stable_mosaic.version = 11 : i64} {
  func.func @_linear_res_kernel(%arg0: i32, %arg1: memref<8x512xbf16, #tpu.memory_space<vmem>>, %arg2: memref<8x512xbf16, #tpu.memory_space<vmem>>, %arg3: memref<8x8xf32, #tpu.memory_space<vmem>>, %arg4: memref<8x1xf32, #tpu.memory_space<vmem>>, %arg5: memref<8x512xbf16, #tpu.memory_space<vmem>>) attributes {dimension_semantics = [#tpu.dimension_semantics<parallel>], iteration_bounds = array<i64: 2>, scalar_prefetch = 0 : i64, scratch_operands = 0 : i64, tpu.core_type = #tpu.core_type<tc>, window_params = [{transform_indices = @transform_0, window_bounds = array<i64: 8, 512>}, {transform_indices = @transform_1, window_bounds = array<i64: 8, 512>}, {pipeline_mode = #tpu.pipeline_mode<synchronous>, transform_indices = @transform_2, window_bounds = array<i64: 8, 8>}, {pipeline_mode = #tpu.pipeline_mode<synchronous>, transform_indices = @transform_3, window_bounds = array<i64: 8, 1>}, {transform_indices = @transform_4, window_bounds = array<i64: 8, 512>}]} {
    %c0 = arith.constant 0 : index
    %c0_0 = arith.constant 0 : index
    %0 = vector.load %arg1[%c0, %c0_0] : memref<8x512xbf16, #tpu.memory_space<vmem>>, vector<8x512xbf16>
    %1 = arith.extf %0 : vector<8x512xbf16> to vector<8x512xf32>
    %c0_1 = arith.constant 0 : index
    %c0_2 = arith.constant 0 : index
    %2 = vector.load %arg2[%c0_1, %c0_2] : memref<8x512xbf16, #tpu.memory_space<vmem>>, vector<8x512xbf16>
    %3 = arith.extf %2 : vector<8x512xbf16> to vector<8x512xf32>
    %c0_3 = arith.constant 0 : index
    %c0_4 = arith.constant 0 : index
    %4 = vector.load %arg3[%c0_3, %c0_4] : memref<8x8xf32, #tpu.memory_space<vmem>>, vector<8x8xf32>
    %cst = arith.constant dense<0.000000e+00> : vector<8x512xf32>
    %5 = tpu.matmul %4, %1, %cst {dimension_numbers = #tpu.dot_dimension_numbers<[1], [0], [0], [1], [0, 0, 1, 1], [], []>} : vector<8x8xf32>, vector<8x512xf32>, vector<8x512xf32> -> vector<8x512xf32>
    %c0_5 = arith.constant 0 : index
    %c0_6 = arith.constant 0 : index
    %6 = vector.load %arg4[%c0_5, %c0_6] : memref<8x1xf32, #tpu.memory_space<vmem>>, vector<8x1xf32>
    %7 = vector.broadcast %6 : vector<8x1xf32> to vector<8x512xf32>
    %8 = arith.addf %5, %7 : vector<8x512xf32>
    %9 = arith.addf %8, %3 : vector<8x512xf32>
    %10 = arith.truncf %9 : vector<8x512xf32> to vector<8x512xbf16>
    %c0_7 = arith.constant 0 : index
    %c0_8 = arith.constant 0 : index
    %11 = vector.load %arg5[%c0_7, %c0_8] : memref<8x512xbf16, #tpu.memory_space<vmem>>, vector<8x512xbf16>
    tpu.vector_store %arg5[%c0_7, %c0_8], %10 {strides = array<i32>} : memref<8x512xbf16, #tpu.memory_space<vmem>>, vector<8x512xbf16>,
    return
  }
  func.func @transform_0(%arg0: i32) -> (i32, i32) {
    %c0_i32 = arith.constant 0 : i32
    %c0_i32_0 = arith.constant 0 : i32
    return %c0_i32, %arg0 : i32, i32
  }
  func.func @transform_1(%arg0: i32) -> (i32, i32) {
    %c0_i32 = arith.constant 0 : i32
    %c0_i32_0 = arith.constant 0 : i32
    return %c0_i32, %arg0 : i32, i32
  }
  func.func @transform_2(%arg0: i32) -> (i32, i32) {
    %c0_i32 = arith.constant 0 : i32
    %c0_i32_0 = arith.constant 0 : i32
    %c0_i32_1 = arith.constant 0 : i32
    return %c0_i32, %c0_i32_0 : i32, i32
  }
  func.func @transform_3(%arg0: i32) -> (i32, i32) {
    %c0_i32 = arith.constant 0 : i32
    %c0_i32_0 = arith.constant 0 : i32
    %c0_i32_1 = arith.constant 0 : i32
    return %c0_i32, %c0_i32_0 : i32, i32
  }
  func.func @transform_4(%arg0: i32) -> (i32, i32) {
    %c0_i32 = arith.constant 0 : i32
    %c0_i32_0 = arith.constant 0 : i32
    return %c0_i32, %arg0 : i32, i32
  }
}

module attributes {stable_mosaic.version = 11 : i64} {
  func.func @_heads_kernel(%arg0: i32, %arg1: memref<8x512xbf16, #tpu.memory_space<vmem>>, %arg2: memref<384x8xf32, #tpu.memory_space<vmem>>, %arg3: memref<384x1xf32, #tpu.memory_space<vmem>>, %arg4: memref<3x384xf32, #tpu.memory_space<vmem>>, %arg5: memref<3x1xf32, #tpu.memory_space<vmem>>, %arg6: memref<3x512xf32, #tpu.memory_space<vmem>>) attributes {dimension_semantics = [#tpu.dimension_semantics<parallel>], iteration_bounds = array<i64: 2>, scalar_prefetch = 0 : i64, scratch_operands = 0 : i64, tpu.core_type = #tpu.core_type<tc>, window_params = [{transform_indices = @transform_0, window_bounds = array<i64: 8, 512>}, {pipeline_mode = #tpu.pipeline_mode<synchronous>, transform_indices = @transform_1, window_bounds = array<i64: 384, 8>}, {pipeline_mode = #tpu.pipeline_mode<synchronous>, transform_indices = @transform_2, window_bounds = array<i64: 384, 1>}, {pipeline_mode = #tpu.pipeline_mode<synchronous>, transform_indices = @transform_3, window_bounds = array<i64: 3, 384>}, {pipeline_mode = #tpu.pipeline_mode<synchronous>, transform_indices = @transform_4, window_bounds = array<i64: 3, 1>}, {transform_indices = @transform_5, window_bounds = array<i64: 3, 512>}]} {
    %c0 = arith.constant 0 : index
    %c0_0 = arith.constant 0 : index
    %0 = vector.load %arg1[%c0, %c0_0] : memref<8x512xbf16, #tpu.memory_space<vmem>>, vector<8x512xbf16>
    %1 = arith.extf %0 : vector<8x512xbf16> to vector<8x512xf32>
    %c0_1 = arith.constant 0 : index
    %c0_2 = arith.constant 0 : index
    %2 = vector.load %arg2[%c0_1, %c0_2] : memref<384x8xf32, #tpu.memory_space<vmem>>, vector<384x8xf32>
    %cst = arith.constant dense<0.000000e+00> : vector<384x512xf32>
    %3 = tpu.matmul %2, %1, %cst {dimension_numbers = #tpu.dot_dimension_numbers<[1], [0], [0], [1], [0, 0, 1, 1], [], []>} : vector<384x8xf32>, vector<8x512xf32>, vector<384x512xf32> -> vector<384x512xf32>
    %c0_3 = arith.constant 0 : index
    %c0_4 = arith.constant 0 : index
    %4 = vector.load %arg3[%c0_3, %c0_4] : memref<384x1xf32, #tpu.memory_space<vmem>>, vector<384x1xf32>
    %5 = vector.broadcast %4 : vector<384x1xf32> to vector<384x512xf32>
    %6 = arith.addf %3, %5 : vector<384x512xf32>
    %c0_5 = arith.constant 0 : index
    %c0_6 = arith.constant 0 : index
    %7 = vector.load %arg4[%c0_5, %c0_6] : memref<3x384xf32, #tpu.memory_space<vmem>>, vector<3x384xf32>
    %cst_7 = arith.constant dense<0.000000e+00> : vector<3x512xf32>
    %8 = tpu.matmul %7, %6, %cst_7 {dimension_numbers = #tpu.dot_dimension_numbers<[1], [0], [0], [1], [0, 0, 1, 1], [], []>} : vector<3x384xf32>, vector<384x512xf32>, vector<3x512xf32> -> vector<3x512xf32>
    %c0_8 = arith.constant 0 : index
    %c0_9 = arith.constant 0 : index
    %9 = vector.load %arg5[%c0_8, %c0_9] : memref<3x1xf32, #tpu.memory_space<vmem>>, vector<3x1xf32>
    %10 = vector.broadcast %9 : vector<3x1xf32> to vector<3x512xf32>
    %11 = arith.addf %8, %10 : vector<3x512xf32>
    %c0_10 = arith.constant 0 : index
    %c0_11 = arith.constant 0 : index
    %12 = vector.load %arg6[%c0_10, %c0_11] : memref<3x512xf32, #tpu.memory_space<vmem>>, vector<3x512xf32>
    tpu.vector_store %arg6[%c0_10, %c0_11], %11 {strides = array<i32>} : memref<3x512xf32, #tpu.memory_space<vmem>>, vector<3x512xf32>,
    return
  }
  func.func @transform_0(%arg0: i32) -> (i32, i32) {
    %c0_i32 = arith.constant 0 : i32
    %c0_i32_0 = arith.constant 0 : i32
    return %c0_i32, %arg0 : i32, i32
  }
  func.func @transform_1(%arg0: i32) -> (i32, i32) {
    %c0_i32 = arith.constant 0 : i32
    %c0_i32_0 = arith.constant 0 : i32
    %c0_i32_1 = arith.constant 0 : i32
    return %c0_i32, %c0_i32_0 : i32, i32
  }
  func.func @transform_2(%arg0: i32) -> (i32, i32) {
    %c0_i32 = arith.constant 0 : i32
    %c0_i32_0 = arith.constant 0 : i32
    %c0_i32_1 = arith.constant 0 : i32
    return %c0_i32, %c0_i32_0 : i32, i32
  }
  func.func @transform_3(%arg0: i32) -> (i32, i32) {
    %c0_i32 = arith.constant 0 : i32
    %c0_i32_0 = arith.constant 0 : i32
    %c0_i32_1 = arith.constant 0 : i32
    return %c0_i32, %c0_i32_0 : i32, i32
  }
  func.func @transform_4(%arg0: i32) -> (i32, i32) {
    %c0_i32 = arith.constant 0 : i32
    %c0_i32_0 = arith.constant 0 : i32
    %c0_i32_1 = arith.constant 0 : i32
    return %c0_i32, %c0_i32_0 : i32, i32
  }
  func.func @transform_5(%arg0: i32) -> (i32, i32) {
    %c0_i32 = arith.constant 0 : i32
    %c0_i32_0 = arith.constant 0 : i32
    return %c0_i32, %arg0 : i32, i32
  }
}

</mosaic_0001>

<llo_original>
// kernel: ffno3d_forward.11
$region0: #{ffno3d_forward.11}
  #allocation0 [shape = 'u32[]', space=smem, size = 0x4, offset = 0x4, fixed_abs, tag = 'smem constant byte address 0x4 - core index']
  #allocation1 [shape = 'u32[72,128]{1,0:T(1,128)}', space=vmem, size = 0x9000, scoped, tag = 'internal scratch']
  %s0 = inlined_call_operand.vmem [shape: f32[10,1024], index: 0, kind: input, shape index: {}]
  %s1 = inlined_call_operand.vmem [shape: f32[8,10], index: 1, kind: input, shape index: {}]
  %s2 = inlined_call_operand.vmem [shape: f32[8,1], index: 2, kind: input, shape index: {}]
  %s3 = inlined_call_operand.vmem [shape: bf16[8,1024], index: 3, kind: output, shape index: {}]
  %s4 = sld [smem:[#allocation0]]
  $region68: #{ffno3d_forward.11} parent=0
    _
  %s6 = ssub.s32 1, %s4
  %s7 = scalar_select 0, %s6, %s4
  $region1: #{ffno3d_forward.11} parent=0
    #allocation2 [shape = 'u8[65536]{0}', space=vmem, size = 0x10000, scoped, tag = 'input window, operand 0']
    loop: start=0, step=1, limit=4
    $region2: #{ffno3d_forward.11} parent=1 // loop_pre_header
      _
    $region3: #{ffno3d_forward.11} parent=1 // loop_header
      %s9 = sphi 0, %s13
      %p10 = scmp.ge.s32.totalorder %s9, 4
      %s19 = sphi 0, %s21
      %s22 = sphi 0, %s19
      %s23 = sphi 0, %s22
      %s39 = sphi 0, %s23
      %s43 = sphi 0, %s43
      %s45 = sphi 0, %s43
      %s46 = sphi 0, %s45
      %s60 = sphi 0, %s46
      %s64 = sphi 0, %s64
      %s66 = sphi 0, %s64
      %s67 = sphi 0, %s66
      %s81 = sphi 0, %s67
      %s87 = sphi 0, %s89
      %s90 = sphi 0, %s87
      %s91 = sphi 0, %s90
      %s107 = sphi 0, %s91
    $region4: #{ffno3d_forward.11} parent=1 // loop_header_branch
      %12 = sbr.rel (%p10) target = $region8
    $region5: #{ffno3d_forward.11} parent=1 // loop_body
      %s14 = ssub.s32 %s9, 1
      %s15 = ssub.s32 %s9, 2
      %s16 = sadd.s32 %s9, 1
      %s17 = ssub.s32 %s9, %s16
      %p18 = scmp.eq.s32.totalorder %s17, 0
      %s20 = sadd.s32 %s19, 1
      %s21 = scalar_select %p18, %s19, %s20
      %p24 = pneg %p18
      %p25 = scmp.eq.s32.totalorder %s9, 1
      %p26 = por %p24, %p25
      %p27 = scmp.ne.s32.totalorder %s19, %s22
      %p28 = scmp.eq.s32.totalorder %s9, 0
      %p29 = por %p27, %p28
      %p30 = scmp.ne.s32.totalorder %s19, %s22
      %p31 = scmp.eq.s32.totalorder %s14, 1
      %p32 = por %p30, %p31
      %p33 = scmp.ne.s32.totalorder %s22, %s23
      %p34 = scmp.eq.s32.totalorder %s14, 0
      %p35 = por %p33, %p34
      %p36 = scmp.ne.s32.totalorder %s22, %s23
      %p37 = scmp.eq.s32.totalorder %s15, 1
      %p38 = por %p36, %p37
      %p40 = scmp.ne.s32.totalorder %s23, %s39
      %p41 = scmp.eq.s32.totalorder %s15, 0
      %p42 = por %p40, %p41
      %s44 = sadd.s32 %s43, 1
      %p47 = scmp.eq.s32.totalorder %s9, 1
      %p48 = scmp.ne.s32.totalorder %s43, %s45
      %p49 = scmp.eq.s32.totalorder %s9, 0
      %p50 = por %p48, %p49
      %p51 = scmp.ne.s32.totalorder %s43, %s45
      %p52 = scmp.eq.s32.totalorder %s14, 1
      %p53 = por %p51, %p52
      %p54 = scmp.ne.s32.totalorder %s45, %s46
      %p55 = scmp.eq.s32.totalorder %s14, 0
      %p56 = por %p54, %p55
      %p57 = scmp.ne.s32.totalorder %s45, %s46
      %p58 = scmp.eq.s32.totalorder %s15, 1
      %p59 = por %p57, %p58
      %p61 = scmp.ne.s32.totalorder %s46, %s60
      %p62 = scmp.eq.s32.totalorder %s15, 0
      %p63 = por %p61, %p62
      %s65 = sadd.s32 %s64, 1
      %p68 = scmp.eq.s32.totalorder %s9, 1
      %p69 = scmp.ne.s32.totalorder %s64, %s66
      %p70 = scmp.eq.s32.totalorder %s9, 0
      %p71 = por %p69, %p70
      %p72 = scmp.ne.s32.totalorder %s64, %s66
      %p73 = scmp.eq.s32.totalorder %s14, 1
      %p74 = por %p72, %p73
      %p75 = scmp.ne.s32.totalorder %s66, %s67
      %p76 = scmp.eq.s32.totalorder %s14, 0
      %p77 = por %p75, %p76
      %p78 = scmp.ne.s32.totalorder %s66, %s67
      %p79 = scmp.eq.s32.totalorder %s15, 1
      %p80 = por %p78, %p79
      %p82 = scmp.ne.s32.totalorder %s67, %s81
      %p83 = scmp.eq.s32.totalorder %s15, 0
      %p84 = por %p82, %p83
      %s85 = ssub.s32 %s9, %s16
      %p86 = scmp.eq.s32.totalorder %s85, 0
      %s88 = sadd.s32 %s87, 1
      %s89 = scalar_select %p86, %s87, %s88
      %p92 = pneg %p86
      %p93 = scmp.eq.s32.totalorder %s9, 1
      %p94 = por %p92, %p93
      %p95 = scmp.ne.s32.totalorder %s87, %s90
      %p96 = scmp.eq.s32.totalorder %s9, 0
      %p97 = por %p95, %p96
      %p98 = scmp.ne.s32.totalorder %s87, %s90
      %p99 = scmp.eq.s32.totalorder %s14, 1
      %p100 = por %p98, %p99
      %p101 = scmp.ne.s32.totalorder %s90, %s91
      %p102 = scmp.eq.s32.totalorder %s14, 0
      %p103 = por %p101, %p102
      %p104 = scmp.ne.s32.totalorder %s90, %s91
      %p105 = scmp.eq.s32.totalorder %s15, 1
      %p106 = por %p104, %p105
      %p108 = scmp.ne.s32.totalorder %s91, %s107
      %p109 = scmp.eq.s32.totalorder %s15, 0
      %p110 = por %p108, %p109
      %p111 = scmp.le.s32.totalorder 1, %s9
      %p112 = scmp.lt.s32.totalorder %s9, 3
      %p113 = pnand %p111, %p112
      %p114 = pneg %p113
      // Predicated region
      $region9: #{ffno3d_forward.11} parent=5 // pred_check
        _
      $region10: #{ffno3d_forward.11} parent=5 // pred_check_branch
        %116 = sbr.rel (%p113) target = $region12
      $region11: #{ffno3d_forward.11} parent=5 // pred_region
        %s117 = ssub.s32 %s9, 1
        // Predicated region
        $region13: #{ffno3d_forward.11} parent=11 // pred_check
          %p118 = pneg %p56
        $region14: #{ffno3d_forward.11} parent=11 // pred_check_branch
          %120 = sbr.rel (%p118) target = $region16
        $region15: #{ffno3d_forward.11} parent=11 // pred_region
          _
        $region16: #{ffno3d_forward.11} parent=11 // pred_fallthru
          _
        // Predicated region
        $region17: #{ffno3d_forward.11} parent=11 // pred_check
          %p121 = pneg %p77
        $region18: #{ffno3d_forward.11} parent=11 // pred_check_branch
          %123 = sbr.rel (%p121) target = $region20
        $region19: #{ffno3d_forward.11} parent=11 // pred_region
          _
        $region20: #{ffno3d_forward.11} parent=11 // pred_fallthru
          _
      $region12: #{ffno3d_forward.11} parent=5 // pred_fallthru
        _
      %p124 = scmp.lt.s32.totalorder %s9, 2
      // Predicated region
      $region21: #{ffno3d_forward.11} parent=5 // pred_check
        %p125 = pneg %p124
      $region22: #{ffno3d_forward.11} parent=5 // pred_check_branch
        %127 = sbr.rel (%p125) target = $region24
      $region23: #{ffno3d_forward.11} parent=5 // pred_region
        // Predicated region
        $region25: #{ffno3d_forward.11} parent=23 // pred_check
          %p128 = pneg %p29
        $region26: #{ffno3d_forward.11} parent=23 // pred_check_branch
          %130 = sbr.rel (%p128) target = $region28
        $region27: #{ffno3d_forward.11} parent=23 // pred_region
          %s131 = sand.u32 %s19, 1
          %s132 = sand.u32 %s19, 1
          %s133 = smul.addr %s132, 64
          %s134 = scalar_lea.vmem [#allocation2], %s133
          %s135 = smul.u32 4, %s9
          %s136 = smul.addr %s135, 8
          %s137 = scalar_lea.vmem %s0, %s136
          // Predicated region
          $region29: #{ffno3d_forward.11} parent=27 // pred_check
            _
          $region30: #{ffno3d_forward.11} parent=27 // pred_check_branch
            %139 = sbr.rel (0) target = $region32
          $region31: #{ffno3d_forward.11} parent=27 // pred_region
            // Predicated region
            $region33: #{ffno3d_forward.11} parent=31 // pred_check
              _
            $region34: #{ffno3d_forward.11} parent=31 // pred_check_branch
              %141 = sbr.rel (0) target = $region36
            $region35: #{ffno3d_forward.11} parent=31 // pred_region
              loop: start=0, step=1, limit=1
              $region37: #{ffno3d_forward.11} parent=35 // loop_pre_header
                _
              $region38: #{ffno3d_forward.11} parent=35 // loop_header
                %s143 = sphi 0, %s147
                %p144 = scmp.ge.s32.totalorder %s143, 1
                %s148 = sphi %s137, %s137
                %s149 = sphi %s134, %s134
              $region39: #{ffno3d_forward.11} parent=35 // loop_header_branch
                %146 = sbr.rel (%p144) target = $region43
              $region40: #{ffno3d_forward.11} parent=35 // loop_body
                %v150 = vld [vmem:[%s148] sm:$0xff]
                %151 = vst [vmem:[%s149] sm:$0xff] %v150
                %v152 = vld [vmem:[%s148 + $0x8] sm:$0xff]
                %153 = vst [vmem:[%s149 + $0x8] sm:$0xff] %v152
                %v154 = vld [vmem:[%s148 + $0x10] sm:$0xff]
                %155 = vst [vmem:[%s149 + $0x10] sm:$0xff] %v154
                %v156 = vld [vmem:[%s148 + $0x18] sm:$0xff]
                %157 = vst [vmem:[%s149 + $0x18] sm:$0xff] %v156
                %v158 = vld [vmem:[%s148 + $0x40] sm:$0xff]
                %159 = vst [vmem:[%s149 + $0x20] sm:$0xff] %v158
                %v160 = vld [vmem:[%s148 + $0x48] sm:$0xff]
                %161 = vst [vmem:[%s149 + $0x28] sm:$0xff] %v160
                %v162 = vld [vmem:[%s148 + $0x50] sm:$0xff]
                %163 = vst [vmem:[%s149 + $0x30] sm:$0xff] %v162
                %v164 = vld [vmem:[%s148 + $0x58] sm:$0xff]
                %165 = vst [vmem:[%s149 + $0x38] sm:$0xff] %v164
              $region41: #{ffno3d_forward.11} parent=35 // loop_footer
                %s147 = sadd.s32 1, %s143
              $region42: #{ffno3d_forward.11} parent=35 // loop_footer_branch
                %142 = sbr.rel target = $region38
              $region43: #{ffno3d_forward.11} parent=35 // loop_exit
                _
            $region36: #{ffno3d_forward.11} parent=31 // pred_fallthru
              _
            // Predicated region
            $region44: #{ffno3d_forward.11} parent=31 // pred_check
              _
            $region45: #{ffno3d_forward.11} parent=31 // pred_check_branch
              %167 = sbr.rel target = $region47
            $region46: #{ffno3d_forward.11} parent=31 // pred_region
              _
            $region47: #{ffno3d_forward.11} parent=31 // pred_fallthru
              _
          $region32: #{ffno3d_forward.11} parent=27 // pred_fallthru
            _
          %168 = vnop
        $region28: #{ffno3d_forward.11} parent=23 // pred_fallthru
          _
      $region24: #{ffno3d_forward.11} parent=5 // pred_fallthru
        _
      %p169 = scmp.le.s32.totalorder 1, %s9
      %p170 = scmp.lt.s32.totalorder %s9, 3
      %p171 = pnand %p169, %p170
      %p172 = pneg %p171
      // Predicated region
      $region48: #{ffno3d_forward.11} parent=5 // pred_check
        _
      $region49: #{ffno3d_forward.11} parent=5 // pred_check_branch
        %174 = sbr.rel (%p171) target = $region51
      $region50: #{ffno3d_forward.11} parent=5 // pred_region
        %s175 = ssub.s32 %s9, 1
        %s176 = sand.u32 %s22, 1
        %s177 = sand.u32 %s22, 1
        %s178 = smul.addr %s177, 64
        %s179 = scalar_lea.vmem [#allocation2], %s178
        // Predicated region
        $region52: #{ffno3d_forward.11} parent=50 // pred_check
          %p180 = pneg %p35
        $region53: #{ffno3d_forward.11} parent=50 // pred_check_branch
          %182 = sbr.rel (%p180) target = $region55
        $region54: #{ffno3d_forward.11} parent=50 // pred_region
          _
        $region55: #{ffno3d_forward.11} parent=50 // pred_fallthru
          _
        %s183 = sand.u32 %s22, 1
        %s184 = sand.u32 %s22, 1
        %s185 = smul.addr %s184, 64
        %s186 = scalar_lea.vmem [#allocation2], %s185
        %p187 = pneg %p35
        %p188 = pneg %p32
        %p189 = pneg %p56
        %p190 = pneg %p53
        %p191 = pneg %p77
        %p192 = pneg %p74
        %p193 = pneg %p103
        %p194 = pneg %p100
        %s195 = smul.u32 4, %s14
        %p196 = scmp.lt.s32.totalorder %s195, 7
        %s197 = scalar_select %p196, %s195, 7
        %s198 = smul.addr %s197, 4
        %s199 = scalar_lea.vmem %s3, %s198
        %s200 = smul.u32 4, %s14
        %s201 = smul.u32 4, %s14
        %p202 = scmp.lt.s32.totalorder %s201, 7
        %s203 = scalar_select %p202, %s201, 7
        %s204 = smul.addr %s203, 4
        %s205 = scalar_lea.vmem %s3, %s204
        %s206 = smul.u32 4, %s14
        %v207 = vld [vmem:[%s179] sm:$0xff]
        %v208 = vld [vmem:[%s179 + $0x8] sm:$0xff]
        %v209 = vld [vmem:[%s179 + $0x10] sm:$0xff]
        %v210 = vld [vmem:[%s179 + $0x18] sm:$0xff]
        %v211 = vld [vmem:[%s179 + $0x20] sm:$0x3]
        %v212 = vld [vmem:[%s179 + $0x28] sm:$0x3]
        %v213 = vld [vmem:[%s179 + $0x30] sm:$0x3]
        %v214 = vld [vmem:[%s179 + $0x38] sm:$0x3]
        %v215 = vld [vmem:[%s1] sm:$0xff]
        %v216 = vld [vmem:[%s2] sm:$0xff]
        %218 = vset.pattern.permute.xlu0 0
        %219 = vperm.xlu0 %218, %v216
        %v220 = vpop.permute.xlu0 %219
        %vm222 = vcmask 80896
        %v224 = vsel %vm222, %v215, 0
        %vm226 = vcmask 1041408
        %v228 = vsel %vm226, %v211, 0
        %v231 = vsel %vm226, %v212, 0
        %v234 = vsel %vm226, %v213, 0
        %v237 = vsel %vm226, %v214, 0
        %239 = vmatpush.msra.mxu0 0.0
        %240 = vmatpush.msra.mxu0 0.0
        %241 = vmatpush.msra.mxu0 0.0
        %242 = vmatpush.msra.mxu0 0.0
        %243 = vmatpush.msra.mxu0 0.0
        %244 = vmatpush.msra.mxu0 0.0
        %245 = vmatpush.msra.mxu0 0.0
        %246 = vmatpush.msra.mxu0 0.0
        %247 = vmatpush.msra.mxu0 0.0
        %248 = vmatpush.msra.mxu0 0.0
        %249 = vmatpush.msra.mxu0 0.0
        %250 = vmatpush.msra.mxu0 0.0
        %251 = vmatpush.msra.mxu0 0.0
        %252 = vmatpush.msra.mxu0 0.0
        %253 = vmatpush.msra.mxu0 %v228
        %254 = vmatpush.msra.mxu0 %v207
        %255 = vmatmul.f32.gmra.mxu0 %v224
        %v256 = vpop.f32.mrf.mxu0
        %v257 = vadd.f32 %v220, %v256
        %258 = vdwg.mxu0
        %259 = vmatpush.msra.mxu0 0.0
        %260 = vmatpush.msra.mxu0 0.0
        %261 = vmatpush.msra.mxu0 0.0
        %262 = vmatpush.msra.mxu0 0.0
        %263 = vmatpush.msra.mxu0 0.0
        %264 = vmatpush.msra.mxu0 0.0
        %265 = vmatpush.msra.mxu0 0.0
        %266 = vmatpush.msra.mxu0 0.0
        %267 = vmatpush.msra.mxu0 0.0
        %268 = vmatpush.msra.mxu0 0.0
        %269 = vmatpush.msra.mxu0 0.0
        %270 = vmatpush.msra.mxu0 0.0
        %271 = vmatpush.msra.mxu0 0.0
        %272 = vmatpush.msra.mxu0 0.0
        %273 = vmatpush.msra.mxu0 %v231
        %274 = vmatpush.msra.mxu0 %v208
        %275 = vmatmul.f32.gmra.mxu0 %v224
        %v276 = vpop.f32.mrf.mxu0
        %v277 = vadd.f32 %v220, %v276
        %278 = vdwg.mxu0
        %279 = vmatpush.msra.mxu0 0.0
        %280 = vmatpush.msra.mxu0 0.0
        %281 = vmatpush.msra.mxu0 0.0
        %282 = vmatpush.msra.mxu0 0.0
        %283 = vmatpush.msra.mxu0 0.0
        %284 = vmatpush.msra.mxu0 0.0
        %285 = vmatpush.msra.mxu0 0.0
        %286 = vmatpush.msra.mxu0 0.0
        %287 = vmatpush.msra.mxu0 0.0
        %288 = vmatpush.msra.mxu0 0.0
        %289 = vmatpush.msra.mxu0 0.0
        %290 = vmatpush.msra.mxu0 0.0
        %291 = vmatpush.msra.mxu0 0.0
        %292 = vmatpush.msra.mxu0 0.0
        %293 = vmatpush.msra.mxu0 %v234
        %294 = vmatpush.msra.mxu0 %v209
        %295 = vmatmul.f32.gmra.mxu0 %v224
        %v296 = vpop.f32.mrf.mxu0
        %v297 = vadd.f32 %v220, %v296
        %298 = vdwg.mxu0
        %299 = vmatpush.msra.mxu0 0.0
        %300 = vmatpush.msra.mxu0 0.0
        %301 = vmatpush.msra.mxu0 0.0
        %302 = vmatpush.msra.mxu0 0.0
        %303 = vmatpush.msra.mxu0 0.0
        %304 = vmatpush.msra.mxu0 0.0
        %305 = vmatpush.msra.mxu0 0.0
        %306 = vmatpush.msra.mxu0 0.0
        %307 = vmatpush.msra.mxu0 0.0
        %308 = vmatpush.msra.mxu0 0.0
        %309 = vmatpush.msra.mxu0 0.0
        %310 = vmatpush.msra.mxu0 0.0
        %311 = vmatpush.msra.mxu0 0.0
        %312 = vmatpush.msra.mxu0 0.0
        %313 = vmatpush.msra.mxu0 %v237
        %314 = vmatpush.msra.mxu0 %v210
        %315 = vmatmul.f32.gmra.mxu0 %v224
        %v316 = vpop.f32.mrf.mxu0
        %v317 = vadd.f32 %v220, %v316
        %318 = vdwg.mxu0
        %v319 = vpack.c.bf16 %v277, %v257
        %v320 = vpack.c.bf16 %v317, %v297
        %321 = vst [vmem:[%s205] sm:$0xff] %v319
        %322 = vst [vmem:[%s205 + $0x8] sm:$0xff] %v320
        %s323 = smul.u32 4, %s14
        %p324 = scmp.lt.s32.totalorder %s323, 7
        %s325 = scalar_select %p324, %s323, 7
        %s326 = smul.addr %s325, 4
        %s327 = scalar_lea.vmem %s3, %s326
        // Predicated region
        $region56: #{ffno3d_forward.11} parent=50 // pred_check
          %p328 = pneg %p100
        $region57: #{ffno3d_forward.11} parent=50 // pred_check_branch
          %330 = sbr.rel (%p328) target = $region59
        $region58: #{ffno3d_forward.11} parent=50 // pred_region
          %s331 = smul.u32 4, %s14
        $region59: #{ffno3d_forward.11} parent=50 // pred_fallthru
          _
      $region51: #{ffno3d_forward.11} parent=5 // pred_fallthru
        _
      %p332 = scmp.le.s32.totalorder 2, %s9
      // Predicated region
      $region60: #{ffno3d_forward.11} parent=5 // pred_check
        %p333 = pneg %p332
      $region61: #{ffno3d_forward.11} parent=5 // pred_check_branch
        %335 = sbr.rel (%p333) target = $region63
      $region62: #{ffno3d_forward.11} parent=5 // pred_region
        %s336 = ssub.s32 %s9, 2
        // Predicated region
        $region64: #{ffno3d_forward.11} parent=62 // pred_check
          %p337 = pneg %p106
        $region65: #{ffno3d_forward.11} parent=62 // pred_check_branch
          %339 = sbr.rel (%p337) target = $region67
        $region66: #{ffno3d_forward.11} parent=62 // pred_region
          %s340 = smul.u32 4, %s15
          %p341 = scmp.lt.s32.totalorder %s340, 7
          %s342 = scalar_select %p341, %s340, 7
          %s343 = smul.addr %s342, 4
          %s344 = scalar_lea.vmem %s3, %s343
        $region67: #{ffno3d_forward.11} parent=62 // pred_fallthru
          _
      $region63: #{ffno3d_forward.11} parent=5 // pred_fallthru
        _
    $region6: #{ffno3d_forward.11} parent=1 // loop_footer
      %s13 = sadd.s32 1, %s9
    $region7: #{ffno3d_forward.11} parent=1 // loop_footer_branch
      %8 = sbr.rel target = $region3
    $region8: #{ffno3d_forward.11} parent=1 // loop_exit
      _

// kernel: ffno3d_forward.14
$region0: #{ffno3d_forward.14}
  #allocation0 [shape = 'u32[]', space=smem, size = 0x4, offset = 0x4, fixed_abs, tag = 'smem constant byte address 0x4 - core index']
  #allocation1 [shape = 'u32[72,128]{1,0:T(1,128)}', space=vmem, size = 0x9000, scoped, tag = 'internal scratch']
  %s0 = inlined_call_operand.vmem [shape: bf16[4,8,128], index: 0, kind: input, shape index: {}]
  %s1 = inlined_call_operand.vmem [shape: bf16[4,8,128], index: 1, kind: input, shape index: {}]
  %s2 = inlined_call_operand.vmem [shape: f32[4,16,8], index: 2, kind: input, shape index: {}]
  %s3 = inlined_call_operand.vmem [shape: f32[4,16,8], index: 3, kind: input, shape index: {}]
  %s4 = inlined_call_operand.vmem [shape: bf16[4,16,128], index: 4, kind: output, shape index: {}]
  %s5 = sld [smem:[#allocation0]]
  $region26: #{ffno3d_forward.14} parent=0
    _
  %s7 = ssub.s32 1, %s5
  %s8 = scalar_select 0, %s7, %s5
  // Predicated region
  $region2: #{ffno3d_forward.14} parent=0 // pred_check
    _
  $region3: #{ffno3d_forward.14} parent=0 // pred_check_branch
    %10 = sbr.rel (0) target = $region5
  $region4: #{ffno3d_forward.14} parent=0 // pred_region
    _
  $region5: #{ffno3d_forward.14} parent=0 // pred_fallthru
    _
  // Predicated region
  $region6: #{ffno3d_forward.14} parent=0 // pred_check
    _
  $region7: #{ffno3d_forward.14} parent=0 // pred_check_branch
    %12 = sbr.rel (0) target = $region9
  $region8: #{ffno3d_forward.14} parent=0 // pred_region
    _
  $region9: #{ffno3d_forward.14} parent=0 // pred_fallthru
    _
  // Predicated region
  $region10: #{ffno3d_forward.14} parent=0 // pred_check
    _
  $region11: #{ffno3d_forward.14} parent=0 // pred_check_branch
    %14 = sbr.rel (0) target = $region13
  $region12: #{ffno3d_forward.14} parent=0 // pred_region
    _
  $region13: #{ffno3d_forward.14} parent=0 // pred_fallthru
    _
  // Predicated region
  $region14: #{ffno3d_forward.14} parent=0 // pred_check
    _
  $region15: #{ffno3d_forward.14} parent=0 // pred_check_branch
    %16 = sbr.rel (0) target = $region17
  $region16: #{ffno3d_forward.14} parent=0 // pred_region
    _
  $region17: #{ffno3d_forward.14} parent=0 // pred_fallthru
    _
  %v17 = vld [vmem:[%s0] sm:$0xf]
  %v18 = vld [vmem:[%s0 + $0x4] sm:$0xf]
  %v19 = vld [vmem:[%s0 + $0x8] sm:$0xf]
  %v20 = vld [vmem:[%s0 + $0xc] sm:$0xf]
  %v21 = vunpack.c.l.bf16 %v17
  %v22 = vunpack.c.l.bf16 %v18
  %v23 = vunpack.c.l.bf16 %v19
  %v24 = vunpack.c.l.bf16 %v20
  %v25 = vld [vmem:[%s1] sm:$0xf]
  %v26 = vld [vmem:[%s1 + $0x4] sm:$0xf]
  %v27 = vld [vmem:[%s1 + $0x8] sm:$0xf]
  %v28 = vld [vmem:[%s1 + $0xc] sm:$0xf]
  %v29 = vunpack.c.l.bf16 %v25
  %v30 = vunpack.c.l.bf16 %v26
  %v31 = vunpack.c.l.bf16 %v27
  %v32 = vunpack.c.l.bf16 %v28
  %v33 = vld [vmem:[%s2] sm:$0xff]
  %v34 = vld [vmem:[%s2 + $0x8] sm:$0xff]
  %v35 = vld [vmem:[%s2 + $0x10] sm:$0xff]
  %v36 = vld [vmem:[%s2 + $0x18] sm:$0xff]
  %v37 = vld [vmem:[%s2 + $0x20] sm:$0xff]
  %v38 = vld [vmem:[%s2 + $0x28] sm:$0xff]
  %v39 = vld [vmem:[%s2 + $0x30] sm:$0xff]
  %v40 = vld [vmem:[%s2 + $0x38] sm:$0xff]
  %v41 = vld [vmem:[%s3] sm:$0xff]
  %v42 = vld [vmem:[%s3 + $0x8] sm:$0xff]
  %v43 = vld [vmem:[%s3 + $0x10] sm:$0xff]
  %v44 = vld [vmem:[%s3 + $0x18] sm:$0xff]
  %v45 = vld [vmem:[%s3 + $0x20] sm:$0xff]
  %v46 = vld [vmem:[%s3 + $0x28] sm:$0xff]
  %v47 = vld [vmem:[%s3 + $0x30] sm:$0xff]
  %v48 = vld [vmem:[%s3 + $0x38] sm:$0xff]
  %vm49 = vcmask 64512
  %v51 = vsel %vm49, %v41, 0
  %v54 = vsel %vm49, %v42, 0
  %56 = vmatpush.msra.mxu0 0.0
  %57 = vmatpush.msra.mxu0 0.0
  %58 = vmatpush.msra.mxu0 0.0
  %59 = vmatpush.msra.mxu0 0.0
  %60 = vmatpush.msra.mxu0 0.0
  %61 = vmatpush.msra.mxu0 0.0
  %62 = vmatpush.msra.mxu0 0.0
  %63 = vmatpush.msra.mxu0 0.0
  %64 = vmatpush.msra.mxu0 0.0
  %65 = vmatpush.msra.mxu0 0.0
  %66 = vmatpush.msra.mxu0 0.0
  %67 = vmatpush.msra.mxu0 0.0
  %68 = vmatpush.msra.mxu0 0.0
  %69 = vmatpush.msra.mxu0 0.0
  %70 = vmatpush.msra.mxu0 0.0
  %71 = vmatpush.msra.mxu0 %v29
  %72 = vmatmul.f32.gmra.mxu0 %v51
  %v73 = vpop.f32.mrf.mxu0
  %v74 = vadd.f32 0.0, %v73
  %75 = vmatmul.f32.gmra.mxu0 %v54
  %v76 = vpop.f32.mrf.mxu0
  %v77 = vadd.f32 0.0, %v76
  %78 = vdwg.mxu0
  %v80 = vsel %vm49, %v43, 0
  %v83 = vsel %vm49, %v44, 0
  %85 = vmatpush.msra.mxu0 0.0
  %86 = vmatpush.msra.mxu0 0.0
  %87 = vmatpush.msra.mxu0 0.0
  %88 = vmatpush.msra.mxu0 0.0
  %89 = vmatpush.msra.mxu0 0.0
  %90 = vmatpush.msra.mxu0 0.0
  %91 = vmatpush.msra.mxu0 0.0
  %92 = vmatpush.msra.mxu0 0.0
  %93 = vmatpush.msra.mxu0 0.0
  %94 = vmatpush.msra.mxu0 0.0
  %95 = vmatpush.msra.mxu0 0.0
  %96 = vmatpush.msra.mxu0 0.0
  %97 = vmatpush.msra.mxu0 0.0
  %98 = vmatpush.msra.mxu0 0.0
  %99 = vmatpush.msra.mxu0 0.0
  %100 = vmatpush.msra.mxu0 %v30
  %101 = vmatmul.f32.gmra.mxu0 %v80
  %v102 = vpop.f32.mrf.mxu0
  %v103 = vadd.f32 0.0, %v102
  %104 = vmatmul.f32.gmra.mxu0 %v83
  %v105 = vpop.f32.mrf.mxu0
  %v106 = vadd.f32 0.0, %v105
  %107 = vdwg.mxu0
  %v109 = vsel %vm49, %v45, 0
  %v112 = vsel %vm49, %v46, 0
  %114 = vmatpush.msra.mxu0 0.0
  %115 = vmatpush.msra.mxu0 0.0
  %116 = vmatpush.msra.mxu0 0.0
  %117 = vmatpush.msra.mxu0 0.0
  %118 = vmatpush.msra.mxu0 0.0
  %119 = vmatpush.msra.mxu0 0.0
  %120 = vmatpush.msra.mxu0 0.0
  %121 = vmatpush.msra.mxu0 0.0
  %122 = vmatpush.msra.mxu0 0.0
  %123 = vmatpush.msra.mxu0 0.0
  %124 = vmatpush.msra.mxu0 0.0
  %125 = vmatpush.msra.mxu0 0.0
  %126 = vmatpush.msra.mxu0 0.0
  %127 = vmatpush.msra.mxu0 0.0
  %128 = vmatpush.msra.mxu0 0.0
  %129 = vmatpush.msra.mxu0 %v31
  %130 = vmatmul.f32.gmra.mxu0 %v109
  %v131 = vpop.f32.mrf.mxu0
  %v132 = vadd.f32 0.0, %v131
  %133 = vmatmul.f32.gmra.mxu0 %v112
  %v134 = vpop.f32.mrf.mxu0
  %v135 = vadd.f32 0.0, %v134
  %136 = vdwg.mxu0
  %v138 = vsel %vm49, %v47, 0
  %v141 = vsel %vm49, %v48, 0
  %143 = vmatpush.msra.mxu0 0.0
  %144 = vmatpush.msra.mxu0 0.0
  %145 = vmatpush.msra.mxu0 0.0
  %146 = vmatpush.msra.mxu0 0.0
  %147 = vmatpush.msra.mxu0 0.0
  %148 = vmatpush.msra.mxu0 0.0
  %149 = vmatpush.msra.mxu0 0.0
  %150 = vmatpush.msra.mxu0 0.0
  %151 = vmatpush.msra.mxu0 0.0
  %152 = vmatpush.msra.mxu0 0.0
  %153 = vmatpush.msra.mxu0 0.0
  %154 = vmatpush.msra.mxu0 0.0
  %155 = vmatpush.msra.mxu0 0.0
  %156 = vmatpush.msra.mxu0 0.0
  %157 = vmatpush.msra.mxu0 0.0
  %158 = vmatpush.msra.mxu0 %v32
  %159 = vmatmul.f32.gmra.mxu0 %v138
  %v160 = vpop.f32.mrf.mxu0
  %v161 = vadd.f32 0.0, %v160
  %162 = vmatmul.f32.gmra.mxu0 %v141
  %v163 = vpop.f32.mrf.mxu0
  %v164 = vadd.f32 0.0, %v163
  %165 = vdwg.mxu0
  %v167 = vsel %vm49, %v33, 0
  %v170 = vsel %vm49, %v34, 0
  %172 = vmatpush.msra.mxu0 0.0
  %173 = vmatpush.msra.mxu0 0.0
  %174 = vmatpush.msra.mxu0 0.0
  %175 = vmatpush.msra.mxu0 0.0
  %176 = vmatpush.msra.mxu0 0.0
  %177 = vmatpush.msra.mxu0 0.0
  %178 = vmatpush.msra.mxu0 0.0
  %179 = vmatpush.msra.mxu0 0.0
  %180 = vmatpush.msra.mxu0 0.0
  %181 = vmatpush.msra.mxu0 0.0
  %182 = vmatpush.msra.mxu0 0.0
  %183 = vmatpush.msra.mxu0 0.0
  %184 = vmatpush.msra.mxu0 0.0
  %185 = vmatpush.msra.mxu0 0.0
  %186 = vmatpush.msra.mxu0 0.0
  %187 = vmatpush.msra.mxu0 %v21
  %188 = vmatmul.f32.gmra.mxu0 %v167
  %v189 = vpop.f32.mrf.mxu0
  %v190 = vadd.f32 %v74, %v189
  %191 = vmatmul.f32.gmra.mxu0 %v170
  %v192 = vpop.f32.mrf.mxu0
  %v193 = vadd.f32 %v77, %v192
  %194 = vdwg.mxu0
  %v196 = vsel %vm49, %v35, 0
  %v199 = vsel %vm49, %v36, 0
  %201 = vmatpush.msra.mxu0 0.0
  %202 = vmatpush.msra.mxu0 0.0
  %203 = vmatpush.msra.mxu0 0.0
  %204 = vmatpush.msra.mxu0 0.0
  %205 = vmatpush.msra.mxu0 0.0
  %206 = vmatpush.msra.mxu0 0.0
  %207 = vmatpush.msra.mxu0 0.0
  %208 = vmatpush.msra.mxu0 0.0
  %209 = vmatpush.msra.mxu0 0.0
  %210 = vmatpush.msra.mxu0 0.0
  %211 = vmatpush.msra.mxu0 0.0
  %212 = vmatpush.msra.mxu0 0.0
  %213 = vmatpush.msra.mxu0 0.0
  %214 = vmatpush.msra.mxu0 0.0
  %215 = vmatpush.msra.mxu0 0.0
  %216 = vmatpush.msra.mxu0 %v22
  %217 = vmatmul.f32.gmra.mxu0 %v196
  %v218 = vpop.f32.mrf.mxu0
  %v219 = vadd.f32 %v103, %v218
  %220 = vmatmul.f32.gmra.mxu0 %v199
  %v221 = vpop.f32.mrf.mxu0
  %v222 = vadd.f32 %v106, %v221
  %223 = vdwg.mxu0
  %v225 = vsel %vm49, %v37, 0
  %v228 = vsel %vm49, %v38, 0
  %230 = vmatpush.msra.mxu0 0.0
  %231 = vmatpush.msra.mxu0 0.0
  %232 = vmatpush.msra.mxu0 0.0
  %233 = vmatpush.msra.mxu0 0.0
  %234 = vmatpush.msra.mxu0 0.0
  %235 = vmatpush.msra.mxu0 0.0
  %236 = vmatpush.msra.mxu0 0.0
  %237 = vmatpush.msra.mxu0 0.0
  %238 = vmatpush.msra.mxu0 0.0
  %239 = vmatpush.msra.mxu0 0.0
  %240 = vmatpush.msra.mxu0 0.0
  %241 = vmatpush.msra.mxu0 0.0
  %242 = vmatpush.msra.mxu0 0.0
  %243 = vmatpush.msra.mxu0 0.0
  %244 = vmatpush.msra.mxu0 0.0
  %245 = vmatpush.msra.mxu0 %v23
  %246 = vmatmul.f32.gmra.mxu0 %v225
  %v247 = vpop.f32.mrf.mxu0
  %v248 = vadd.f32 %v132, %v247
  %249 = vmatmul.f32.gmra.mxu0 %v228
  %v250 = vpop.f32.mrf.mxu0
  %v251 = vadd.f32 %v135, %v250
  %252 = vdwg.mxu0
  %v254 = vsel %vm49, %v39, 0
  %v257 = vsel %vm49, %v40, 0
  %259 = vmatpush.msra.mxu0 0.0
  %260 = vmatpush.msra.mxu0 0.0
  %261 = vmatpush.msra.mxu0 0.0
  %262 = vmatpush.msra.mxu0 0.0
  %263 = vmatpush.msra.mxu0 0.0
  %264 = vmatpush.msra.mxu0 0.0
  %265 = vmatpush.msra.mxu0 0.0
  %266 = vmatpush.msra.mxu0 0.0
  %267 = vmatpush.msra.mxu0 0.0
  %268 = vmatpush.msra.mxu0 0.0
  %269 = vmatpush.msra.mxu0 0.0
  %270 = vmatpush.msra.mxu0 0.0
  %271 = vmatpush.msra.mxu0 0.0
  %272 = vmatpush.msra.mxu0 0.0
  %273 = vmatpush.msra.mxu0 0.0
  %274 = vmatpush.msra.mxu0 %v24
  %275 = vmatmul.f32.gmra.mxu0 %v254
  %v276 = vpop.f32.mrf.mxu0
  %v277 = vadd.f32 %v161, %v276
  %278 = vmatmul.f32.gmra.mxu0 %v257
  %v279 = vpop.f32.mrf.mxu0
  %v280 = vadd.f32 %v164, %v279
  %281 = vdwg.mxu0
  %v282 = vpack.c.bf16 %v190, %v190
  %v283 = vpack.c.bf16 %v193, %v193
  %v284 = vpack.c.bf16 %v219, %v219
  %v285 = vpack.c.bf16 %v222, %v222
  %v286 = vpack.c.bf16 %v248, %v248
  %v287 = vpack.c.bf16 %v251, %v251
  %v288 = vpack.c.bf16 %v277, %v277
  %v289 = vpack.c.bf16 %v280, %v280
  %290 = vst [vmem:[%s4] sm:$0xf] %v282
  %291 = vst [vmem:[%s4 + $0x4] sm:$0xf] %v283
  %292 = vst [vmem:[%s4 + $0x8] sm:$0xf] %v284
  %293 = vst [vmem:[%s4 + $0xc] sm:$0xf] %v285
  %294 = vst [vmem:[%s4 + $0x10] sm:$0xf] %v286
  %295 = vst [vmem:[%s4 + $0x14] sm:$0xf] %v287
  %296 = vst [vmem:[%s4 + $0x18] sm:$0xf] %v288
  %297 = vst [vmem:[%s4 + $0x1c] sm:$0xf] %v289
  // Predicated region
  $region18: #{ffno3d_forward.14} parent=0 // pred_check
    _
  $region19: #{ffno3d_forward.14} parent=0 // pred_check_branch
    %299 = sbr.rel (0) target = $region21
  $region20: #{ffno3d_forward.14} parent=0 // pred_region
    _
  $region21: #{ffno3d_forward.14} parent=0 // pred_fallthru
    _
  // Predicated region
  $region22: #{ffno3d_forward.14} parent=0 // pred_check
    _
  $region23: #{ffno3d_forward.14} parent=0 // pred_check_branch
    %301 = sbr.rel (0) target = $region25
  $region24: #{ffno3d_forward.14} parent=0 // pred_region
    _
  $region25: #{ffno3d_forward.14} parent=0 // pred_fallthru
    _

// kernel: ffno3d_forward.15
$region0: #{ffno3d_forward.15}
  #allocation0 [shape = 'u32[]', space=smem, size = 0x4, offset = 0x4, fixed_abs, tag = 'smem constant byte address 0x4 - core index']
  #allocation1 [shape = 'u32[72,128]{1,0:T(1,128)}', space=vmem, size = 0x9000, scoped, tag = 'internal scratch']
  %s0 = inlined_call_operand.vmem [shape: bf16[8,1024], index: 0, kind: input, shape index: {}]
  %s1 = inlined_call_operand.vmem [shape: bf16[8,1024], index: 1, kind: input, shape index: {}]
  %s2 = inlined_call_operand.vmem [shape: bf16[8,1024], index: 2, kind: input, shape index: {}]
  %s3 = inlined_call_operand.vmem [shape: f32[32,8], index: 3, kind: input, shape index: {}]
  %s4 = inlined_call_operand.vmem [shape: f32[32,1], index: 4, kind: input, shape index: {}]
  %s5 = inlined_call_operand.vmem [shape: f32[8,32], index: 5, kind: input, shape index: {}]
  %s6 = inlined_call_operand.vmem [shape: f32[8,1], index: 6, kind: input, shape index: {}]
  %s7 = inlined_call_operand.vmem [shape: bf16[8,1024], index: 7, kind: output, shape index: {}]
  %s8 = sld [smem:[#allocation0]]
  $region61: #{ffno3d_forward.15} parent=0
    _
  %s10 = ssub.s32 1, %s8
  %s11 = scalar_select 0, %s10, %s8
  loop: start=0, step=1, limit=4
  $region2: #{ffno3d_forward.15} parent=0 // loop_pre_header
    _
  $region3: #{ffno3d_forward.15} parent=0 // loop_header
    %s13 = sphi 0, %s17
    %p14 = scmp.ge.s32.totalorder %s13, 4
    %s23 = sphi 0, %s25
    %s26 = sphi 0, %s23
    %s27 = sphi 0, %s26
    %s43 = sphi 0, %s27
    %s49 = sphi 0, %s51
    %s52 = sphi 0, %s49
    %s53 = sphi 0, %s52
    %s69 = sphi 0, %s53
    %s75 = sphi 0, %s77
    %s78 = sphi 0, %s75
    %s79 = sphi 0, %s78
    %s95 = sphi 0, %s79
    %s99 = sphi 0, %s99
    %s101 = sphi 0, %s99
    %s102 = sphi 0, %s101
    %s116 = sphi 0, %s102
    %s120 = sphi 0, %s120
    %s122 = sphi 0, %s120
    %s123 = sphi 0, %s122
    %s137 = sphi 0, %s123
    %s141 = sphi 0, %s141
    %s143 = sphi 0, %s141
    %s144 = sphi 0, %s143
    %s158 = sphi 0, %s144
    %s162 = sphi 0, %s162
    %s164 = sphi 0, %s162
    %s165 = sphi 0, %s164
    %s179 = sphi 0, %s165
    %s185 = sphi 0, %s187
    %s188 = sphi 0, %s185
    %s189 = sphi 0, %s188
    %s205 = sphi 0, %s189
  $region4: #{ffno3d_forward.15} parent=0 // loop_header_branch
    %16 = sbr.rel (%p14) target = $region8
  $region5: #{ffno3d_forward.15} parent=0 // loop_body
    %s18 = ssub.s32 %s13, 1
    %s19 = ssub.s32 %s13, 2
    %s20 = sadd.s32 %s13, 1
    %s21 = ssub.s32 %s13, %s20
    %p22 = scmp.eq.s32.totalorder %s21, 0
    %s24 = sadd.s32 %s23, 1
    %s25 = scalar_select %p22, %s23, %s24
    %p28 = pneg %p22
    %p29 = scmp.eq.s32.totalorder %s13, 1
    %p30 = por %p28, %p29
    %p31 = scmp.ne.s32.totalorder %s23, %s26
    %p32 = scmp.eq.s32.totalorder %s13, 0
    %p33 = por %p31, %p32
    %p34 = scmp.ne.s32.totalorder %s23, %s26
    %p35 = scmp.eq.s32.totalorder %s18, 1
    %p36 = por %p34, %p35
    %p37 = scmp.ne.s32.totalorder %s26, %s27
    %p38 = scmp.eq.s32.totalorder %s18, 0
    %p39 = por %p37, %p38
    %p40 = scmp.ne.s32.totalorder %s26, %s27
    %p41 = scmp.eq.s32.totalorder %s19, 1
    %p42 = por %p40, %p41
    %p44 = scmp.ne.s32.totalorder %s27, %s43
    %p45 = scmp.eq.s32.totalorder %s19, 0
    %p46 = por %p44, %p45
    %s47 = ssub.s32 %s13, %s20
    %p48 = scmp.eq.s32.totalorder %s47, 0
    %s50 = sadd.s32 %s49, 1
    %s51 = scalar_select %p48, %s49, %s50
    %p54 = pneg %p48
    %p55 = scmp.eq.s32.totalorder %s13, 1
    %p56 = por %p54, %p55
    %p57 = scmp.ne.s32.totalorder %s49, %s52
    %p58 = scmp.eq.s32.totalorder %s13, 0
    %p59 = por %p57, %p58
    %p60 = scmp.ne.s32.totalorder %s49, %s52
    %p61 = scmp.eq.s32.totalorder %s18, 1
    %p62 = por %p60, %p61
    %p63 = scmp.ne.s32.totalorder %s52, %s53
    %p64 = scmp.eq.s32.totalorder %s18, 0
    %p65 = por %p63, %p64
    %p66 = scmp.ne.s32.totalorder %s52, %s53
    %p67 = scmp.eq.s32.totalorder %s19, 1
    %p68 = por %p66, %p67
    %p70 = scmp.ne.s32.totalorder %s53, %s69
    %p71 = scmp.eq.s32.totalorder %s19, 0
    %p72 = por %p70, %p71
    %s73 = ssub.s32 %s13, %s20
    %p74 = scmp.eq.s32.totalorder %s73, 0
    %s76 = sadd.s32 %s75, 1
    %s77 = scalar_select %p74, %s75, %s76
    %p80 = pneg %p74
    %p81 = scmp.eq.s32.totalorder %s13, 1
    %p82 = por %p80, %p81
    %p83 = scmp.ne.s32.totalorder %s75, %s78
    %p84 = scmp.eq.s32.totalorder %s13, 0
    %p85 = por %p83, %p84
    %p86 = scmp.ne.s32.totalorder %s75, %s78
    %p87 = scmp.eq.s32.totalorder %s18, 1
    %p88 = por %p86, %p87
    %p89 = scmp.ne.s32.totalorder %s78, %s79
    %p90 = scmp.eq.s32.totalorder %s18, 0
    %p91 = por %p89, %p90
    %p92 = scmp.ne.s32.totalorder %s78, %s79
    %p93 = scmp.eq.s32.totalorder %s19, 1
    %p94 = por %p92, %p93
    %p96 = scmp.ne.s32.totalorder %s79, %s95
    %p97 = scmp.eq.s32.totalorder %s19, 0
    %p98 = por %p96, %p97
    %s100 = sadd.s32 %s99, 1
    %p103 = scmp.eq.s32.totalorder %s13, 1
    %p104 = scmp.ne.s32.totalorder %s99, %s101
    %p105 = scmp.eq.s32.totalorder %s13, 0
    %p106 = por %p104, %p105
    %p107 = scmp.ne.s32.totalorder %s99, %s101
    %p108 = scmp.eq.s32.totalorder %s18, 1
    %p109 = por %p107, %p108
    %p110 = scmp.ne.s32.totalorder %s101, %s102
    %p111 = scmp.eq.s32.totalorder %s18, 0
    %p112 = por %p110, %p111
    %p113 = scmp.ne.s32.totalorder %s101, %s102
    %p114 = scmp.eq.s32.totalorder %s19, 1
    %p115 = por %p113, %p114
    %p117 = scmp.ne.s32.totalorder %s102, %s116
    %p118 = scmp.eq.s32.totalorder %s19, 0
    %p119 = por %p117, %p118
    %s121 = sadd.s32 %s120, 1
    %p124 = scmp.eq.s32.totalorder %s13, 1
    %p125 = scmp.ne.s32.totalorder %s120, %s122
    %p126 = scmp.eq.s32.totalorder %s13, 0
    %p127 = por %p125, %p126
    %p128 = scmp.ne.s32.totalorder %s120, %s122
    %p129 = scmp.eq.s32.totalorder %s18, 1
    %p130 = por %p128, %p129
    %p131 = scmp.ne.s32.totalorder %s122, %s123
    %p132 = scmp.eq.s32.totalorder %s18, 0
    %p133 = por %p131, %p132
    %p134 = scmp.ne.s32.totalorder %s122, %s123
    %p135 = scmp.eq.s32.totalorder %s19, 1
    %p136 = por %p134, %p135
    %p138 = scmp.ne.s32.totalorder %s123, %s137
    %p139 = scmp.eq.s32.totalorder %s19, 0
    %p140 = por %p138, %p139
    %s142 = sadd.s32 %s141, 1
    %p145 = scmp.eq.s32.totalorder %s13, 1
    %p146 = scmp.ne.s32.totalorder %s141, %s143
    %p147 = scmp.eq.s32.totalorder %s13, 0
    %p148 = por %p146, %p147
    %p149 = scmp.ne.s32.totalorder %s141, %s143
    %p150 = scmp.eq.s32.totalorder %s18, 1
    %p151 = por %p149, %p150
    %p152 = scmp.ne.s32.totalorder %s143, %s144
    %p153 = scmp.eq.s32.totalorder %s18, 0
    %p154 = por %p152, %p153
    %p155 = scmp.ne.s32.totalorder %s143, %s144
    %p156 = scmp.eq.s32.totalorder %s19, 1
    %p157 = por %p155, %p156
    %p159 = scmp.ne.s32.totalorder %s144, %s158
    %p160 = scmp.eq.s32.totalorder %s19, 0
    %p161 = por %p159, %p160
    %s163 = sadd.s32 %s162, 1
    %p166 = scmp.eq.s32.totalorder %s13, 1
    %p167 = scmp.ne.s32.totalorder %s162, %s164
    %p168 = scmp.eq.s32.totalorder %s13, 0
    %p169 = por %p167, %p168
    %p170 = scmp.ne.s32.totalorder %s162, %s164
    %p171 = scmp.eq.s32.totalorder %s18, 1
    %p172 = por %p170, %p171
    %p173 = scmp.ne.s32.totalorder %s164, %s165
    %p174 = scmp.eq.s32.totalorder %s18, 0
    %p175 = por %p173, %p174
    %p176 = scmp.ne.s32.totalorder %s164, %s165
    %p177 = scmp.eq.s32.totalorder %s19, 1
    %p178 = por %p176, %p177
    %p180 = scmp.ne.s32.totalorder %s165, %s179
    %p181 = scmp.eq.s32.totalorder %s19, 0
    %p182 = por %p180, %p181
    %s183 = ssub.s32 %s13, %s20
    %p184 = scmp.eq.s32.totalorder %s183, 0
    %s186 = sadd.s32 %s185, 1
    %s187 = scalar_select %p184, %s185, %s186
    %p190 = pneg %p184
    %p191 = scmp.eq.s32.totalorder %s13, 1
    %p192 = por %p190, %p191
    %p193 = scmp.ne.s32.totalorder %s185, %s188
    %p194 = scmp.eq.s32.totalorder %s13, 0
    %p195 = por %p193, %p194
    %p196 = scmp.ne.s32.totalorder %s185, %s188
    %p197 = scmp.eq.s32.totalorder %s18, 1
    %p198 = por %p196, %p197
    %p199 = scmp.ne.s32.totalorder %s188, %s189
    %p200 = scmp.eq.s32.totalorder %s18, 0
    %p201 = por %p199, %p200
    %p202 = scmp.ne.s32.totalorder %s188, %s189
    %p203 = scmp.eq.s32.totalorder %s19, 1
    %p204 = por %p202, %p203
    %p206 = scmp.ne.s32.totalorder %s189, %s205
    %p207 = scmp.eq.s32.totalorder %s19, 0
    %p208 = por %p206, %p207
    %p209 = scmp.le.s32.totalorder 1, %s13
    %p210 = scmp.lt.s32.totalorder %s13, 3
    %p211 = pnand %p209, %p210
    %p212 = pneg %p211
    // Predicated region
    $region9: #{ffno3d_forward.15} parent=5 // pred_check
      _
    $region10: #{ffno3d_forward.15} parent=5 // pred_check_branch
      %214 = sbr.rel (%p211) target = $region12
    $region11: #{ffno3d_forward.15} parent=5 // pred_region
      %s215 = ssub.s32 %s13, 1
      // Predicated region
      $region13: #{ffno3d_forward.15} parent=11 // pred_check
        %p216 = pneg %p112
      $region14: #{ffno3d_forward.15} parent=11 // pred_check_branch
        %218 = sbr.rel (%p216) target = $region16
      $region15: #{ffno3d_forward.15} parent=11 // pred_region
        _
      $region16: #{ffno3d_forward.15} parent=11 // pred_fallthru
        _
      // Predicated region
      $region17: #{ffno3d_forward.15} parent=11 // pred_check
        %p219 = pneg %p133
      $region18: #{ffno3d_forward.15} parent=11 // pred_check_branch
        %221 = sbr.rel (%p219) target = $region20
      $region19: #{ffno3d_forward.15} parent=11 // pred_region
        _
      $region20: #{ffno3d_forward.15} parent=11 // pred_fallthru
        _
      // Predicated region
      $region21: #{ffno3d_forward.15} parent=11 // pred_check
        %p222 = pneg %p154
      $region22: #{ffno3d_forward.15} parent=11 // pred_check_branch
        %224 = sbr.rel (%p222) target = $region24
      $region23: #{ffno3d_forward.15} parent=11 // pred_region
        _
      $region24: #{ffno3d_forward.15} parent=11 // pred_fallthru
        _
      // Predicated region
      $region25: #{ffno3d_forward.15} parent=11 // pred_check
        %p225 = pneg %p175
      $region26: #{ffno3d_forward.15} parent=11 // pred_check_branch
        %227 = sbr.rel (%p225) target = $region28
      $region27: #{ffno3d_forward.15} parent=11 // pred_region
        _
      $region28: #{ffno3d_forward.15} parent=11 // pred_fallthru
        _
    $region12: #{ffno3d_forward.15} parent=5 // pred_fallthru
      _
    %p228 = scmp.lt.s32.totalorder %s13, 2
    // Predicated region
    $region29: #{ffno3d_forward.15} parent=5 // pred_check
      %p229 = pneg %p228
    $region30: #{ffno3d_forward.15} parent=5 // pred_check_branch
      %231 = sbr.rel (%p229) target = $region32
    $region31: #{ffno3d_forward.15} parent=5 // pred_region
      // Predicated region
      $region33: #{ffno3d_forward.15} parent=31 // pred_check
        %p232 = pneg %p33
      $region34: #{ffno3d_forward.15} parent=31 // pred_check_branch
        %234 = sbr.rel (%p232) target = $region36
      $region35: #{ffno3d_forward.15} parent=31 // pred_region
        %s235 = smul.u32 4, %s13
        %p236 = scmp.lt.s32.totalorder %s235, 7
        %s237 = scalar_select %p236, %s235, 7
        %s238 = smul.addr %s237, 4
        %s239 = scalar_lea.vmem %s0, %s238
        %s240 = smul.u32 4, %s13
      $region36: #{ffno3d_forward.15} parent=31 // pred_fallthru
        _
      // Predicated region
      $region37: #{ffno3d_forward.15} parent=31 // pred_check
        %p241 = pneg %p59
      $region38: #{ffno3d_forward.15} parent=31 // pred_check_branch
        %243 = sbr.rel (%p241) target = $region40
      $region39: #{ffno3d_forward.15} parent=31 // pred_region
        %s244 = smul.u32 4, %s13
        %p245 = scmp.lt.s32.totalorder %s244, 7
        %s246 = scalar_select %p245, %s244, 7
        %s247 = smul.addr %s246, 4
        %s248 = scalar_lea.vmem %s1, %s247
        %s249 = smul.u32 4, %s13
      $region40: #{ffno3d_forward.15} parent=31 // pred_fallthru
        _
      // Predicated region
      $region41: #{ffno3d_forward.15} parent=31 // pred_check
        %p250 = pneg %p85
      $region42: #{ffno3d_forward.15} parent=31 // pred_check_branch
        %252 = sbr.rel (%p250) target = $region44
      $region43: #{ffno3d_forward.15} parent=31 // pred_region
        %s253 = smul.u32 4, %s13
        %p254 = scmp.lt.s32.totalorder %s253, 7
        %s255 = scalar_select %p254, %s253, 7
        %s256 = smul.addr %s255, 4
        %s257 = scalar_lea.vmem %s2, %s256
        %s258 = smul.u32 4, %s13
      $region44: #{ffno3d_forward.15} parent=31 // pred_fallthru
        _
    $region32: #{ffno3d_forward.15} parent=5 // pred_fallthru
      _
    %p259 = scmp.le.s32.totalorder 1, %s13
    %p260 = scmp.lt.s32.totalorder %s13, 3
    %p261 = pnand %p259, %p260
    %p262 = pneg %p261
    // Predicated region
    $region45: #{ffno3d_forward.15} parent=5 // pred_check
      _
    $region46: #{ffno3d_forward.15} parent=5 // pred_check_branch
      %264 = sbr.rel (%p261) target = $region48
    $region47: #{ffno3d_forward.15} parent=5 // pred_region
      %s265 = ssub.s32 %s13, 1
      %s266 = smul.u32 4, %s18
      %p267 = scmp.lt.s32.totalorder %s266, 7
      %s268 = scalar_select %p267, %s266, 7
      %s269 = smul.addr %s268, 4
      %s270 = scalar_lea.vmem %s0, %s269
      %p271 = pneg %p39
      %p272 = pneg %p36
      %s273 = smul.u32 4, %s18
      %p274 = scmp.lt.s32.totalorder %s273, 7
      %s275 = scalar_select %p274, %s273, 7
      %s276 = smul.addr %s275, 4
      %s277 = scalar_lea.vmem %s1, %s276
      %p278 = pneg %p65
      %p279 = pneg %p62
      %s280 = smul.u32 4, %s18
      %p281 = scmp.lt.s32.totalorder %s280, 7
      %s282 = scalar_select %p281, %s280, 7
      %s283 = smul.addr %s282, 4
      %s284 = scalar_lea.vmem %s2, %s283
      %p285 = pneg %p91
      %p286 = pneg %p88
      %p287 = pneg %p112
      %p288 = pneg %p109
      %p289 = pneg %p133
      %p290 = pneg %p130
      %p291 = pneg %p154
      %p292 = pneg %p151
      %p293 = pneg %p175
      %p294 = pneg %p172
      %p295 = pneg %p201
      %p296 = pneg %p198
      %s297 = smul.u32 4, %s18
      %p298 = scmp.lt.s32.totalorder %s297, 7
      %s299 = scalar_select %p298, %s297, 7
      %s300 = smul.addr %s299, 4
      %s301 = scalar_lea.vmem %s7, %s300
      %s302 = smul.u32 4, %s18
      %p303 = scmp.lt.s32.totalorder %s302, 7
      %s304 = scalar_select %p303, %s302, 7
      %s305 = smul.addr %s304, 4
      %s306 = scalar_lea.vmem %s0, %s305
      %s307 = smul.u32 4, %s18
      %s308 = smul.u32 4, %s18
      %p309 = scmp.lt.s32.totalorder %s308, 7
      %s310 = scalar_select %p309, %s308, 7
      %s311 = smul.addr %s310, 4
      %s312 = scalar_lea.vmem %s1, %s311
      %s313 = smul.u32 4, %s18
      %s314 = smul.u32 4, %s18
      %p315 = scmp.lt.s32.totalorder %s314, 7
      %s316 = scalar_select %p315, %s314, 7
      %s317 = smul.addr %s316, 4
      %s318 = scalar_lea.vmem %s2, %s317
      %s319 = smul.u32 4, %s18
      %s320 = smul.u32 4, %s18
      %p321 = scmp.lt.s32.totalorder %s320, 7
      %s322 = scalar_select %p321, %s320, 7
      %s323 = smul.addr %s322, 4
      %s324 = scalar_lea.vmem %s7, %s323
      %s325 = smul.u32 4, %s18
      %v326 = vld [vmem:[%s306] sm:$0xff]
      %v327 = vld [vmem:[%s306 + $0x8] sm:$0xff]
      %v328 = vunpack.c.l.bf16 %v326
      %v329 = vunpack.c.h.bf16 %v326
      %v330 = vunpack.c.l.bf16 %v327
      %v331 = vunpack.c.h.bf16 %v327
      %v332 = vld [vmem:[%s312] sm:$0xff]
      %v333 = vld [vmem:[%s312 + $0x8] sm:$0xff]
      %v334 = vunpack.c.l.bf16 %v332
      %v335 = vunpack.c.h.bf16 %v332
      %v336 = vunpack.c.l.bf16 %v333
      %v337 = vunpack.c.h.bf16 %v333
      %v338 = vadd.f32 %v328, %v334
      %v339 = vadd.f32 %v329, %v335
      %v340 = vadd.f32 %v330, %v336
      %v341 = vadd.f32 %v331, %v337
      %v342 = vld [vmem:[%s318] sm:$0xff]
      %v343 = vld [vmem:[%s318 + $0x8] sm:$0xff]
      %v344 = vunpack.c.l.bf16 %v342
      %v345 = vunpack.c.h.bf16 %v342
      %v346 = vunpack.c.l.bf16 %v343
      %v347 = vunpack.c.h.bf16 %v343
      %v348 = vadd.f32 %v338, %v344
      %v349 = vadd.f32 %v339, %v345
      %v350 = vadd.f32 %v340, %v346
      %v351 = vadd.f32 %v341, %v347
      %v352 = vld [vmem:[%s3] sm:$0xff]
      %v353 = vld [vmem:[%s3 + $0x8] sm:$0xff]
      %v354 = vld [vmem:[%s3 + $0x10] sm:$0xff]
      %v355 = vld [vmem:[%s3 + $0x18] sm:$0xff]
      %v356 = vld [vmem:[%s4] sm:$0xff]
      %v357 = vld [vmem:[%s4 + $0x8] sm:$0xff]
      %v358 = vld [vmem:[%s4 + $0x10] sm:$0xff]
      %v359 = vld [vmem:[%s4 + $0x18] sm:$0xff]
      %361 = vset.pattern.permute.xlu0 0
      %362 = vperm.xlu0 %361, %v356
      %v363 = vpop.permute.xlu0 %362
      %366 = vset.pattern.permute.xlu0 0
      %367 = vperm.xlu0 %366, %v357
      %v368 = vpop.permute.xlu0 %367
      %371 = vset.pattern.permute.xlu0 0
      %372 = vperm.xlu0 %371, %v358
      %v373 = vpop.permute.xlu0 %372
      %376 = vset.pattern.permute.xlu0 0
      %377 = vperm.xlu0 %376, %v359
      %v378 = vpop.permute.xlu0 %377
      %vm380 = vcmask 64512
      %v382 = vsel %vm380, %v352, 0
      %v385 = vsel %vm380, %v353, 0
      %v388 = vsel %vm380, %v354, 0
      %v391 = vsel %vm380, %v355, 0
      %393 = vmatpush.msra.mxu0 0.0
      %394 = vmatpush.msra.mxu0 0.0
      %395 = vmatpush.msra.mxu0 0.0
      %396 = vmatpush.msra.mxu0 0.0
      %397 = vmatpush.msra.mxu0 0.0
      %398 = vmatpush.msra.mxu0 0.0
      %399 = vmatpush.msra.mxu0 0.0
      %400 = vmatpush.msra.mxu0 0.0
      %401 = vmatpush.msra.mxu0 0.0
      %402 = vmatpush.msra.mxu0 0.0
      %403 = vmatpush.msra.mxu0 0.0
      %404 = vmatpush.msra.mxu0 0.0
      %405 = vmatpush.msra.mxu0 0.0
      %406 = vmatpush.msra.mxu0 0.0
      %407 = vmatpush.msra.mxu0 0.0
      %408 = vmatpush.msra.mxu0 %v348
      %409 = vmatmul.f32.gmra.mxu0 %v382
      %v410 = vpop.f32.mrf.mxu0
      %v411 = vadd.f32 %v363, %v410
      %412 = vmatmul.f32.gmra.mxu0 %v385
      %v413 = vpop.f32.mrf.mxu0
      %v414 = vadd.f32 %v368, %v413
      %415 = vmatmul.f32.gmra.mxu0 %v388
      %v416 = vpop.f32.mrf.mxu0
      %v417 = vadd.f32 %v373, %v416
      %418 = vmatmul.f32.gmra.mxu0 %v391
      %v419 = vpop.f32.mrf.mxu0
      %v420 = vadd.f32 %v378, %v419
      %421 = vdwg.mxu0
      %422 = vmatpush.msra.mxu0 0.0
      %423 = vmatpush.msra.mxu0 0.0
      %424 = vmatpush.msra.mxu0 0.0
      %425 = vmatpush.msra.mxu0 0.0
      %426 = vmatpush.msra.mxu0 0.0
      %427 = vmatpush.msra.mxu0 0.0
      %428 = vmatpush.msra.mxu0 0.0
      %429 = vmatpush.msra.mxu0 0.0
      %430 = vmatpush.msra.mxu0 0.0
      %431 = vmatpush.msra.mxu0 0.0
      %432 = vmatpush.msra.mxu0 0.0
      %433 = vmatpush.msra.mxu0 0.0
      %434 = vmatpush.msra.mxu0 0.0
      %435 = vmatpush.msra.mxu0 0.0
      %436 = vmatpush.msra.mxu0 0.0
      %437 = vmatpush.msra.mxu0 %v349
      %438 = vmatmul.f32.gmra.mxu0 %v382
      %v439 = vpop.f32.mrf.mxu0
      %v440 = vadd.f32 %v363, %v439
      %441 = vmatmul.f32.gmra.mxu0 %v385
      %v442 = vpop.f32.mrf.mxu0
      %v443 = vadd.f32 %v368, %v442
      %444 = vmatmul.f32.gmra.mxu0 %v388
      %v445 = vpop.f32.mrf.mxu0
      %v446 = vadd.f32 %v373, %v445
      %447 = vmatmul.f32.gmra.mxu0 %v391
      %v448 = vpop.f32.mrf.mxu0
      %v449 = vadd.f32 %v378, %v448
      %450 = vdwg.mxu0
      %451 = vmatpush.msra.mxu0 0.0
      %452 = vmatpush.msra.mxu0 0.0
      %453 = vmatpush.msra.mxu0 0.0
      %454 = vmatpush.msra.mxu0 0.0
      %455 = vmatpush.msra.mxu0 0.0
      %456 = vmatpush.msra.mxu0 0.0
      %457 = vmatpush.msra.mxu0 0.0
      %458 = vmatpush.msra.mxu0 0.0
      %459 = vmatpush.msra.mxu0 0.0
      %460 = vmatpush.msra.mxu0 0.0
      %461 = vmatpush.msra.mxu0 0.0
      %462 = vmatpush.msra.mxu0 0.0
      %463 = vmatpush.msra.mxu0 0.0
      %464 = vmatpush.msra.mxu0 0.0
      %465 = vmatpush.msra.mxu0 0.0
      %466 = vmatpush.msra.mxu0 %v350
      %467 = vmatmul.f32.gmra.mxu0 %v382
      %v468 = vpop.f32.mrf.mxu0
      %v469 = vadd.f32 %v363, %v468
      %470 = vmatmul.f32.gmra.mxu0 %v385
      %v471 = vpop.f32.mrf.mxu0
      %v472 = vadd.f32 %v368, %v471
      %473 = vmatmul.f32.gmra.mxu0 %v388
      %v474 = vpop.f32.mrf.mxu0
      %v475 = vadd.f32 %v373, %v474
      %476 = vmatmul.f32.gmra.mxu0 %v391
      %v477 = vpop.f32.mrf.mxu0
      %v478 = vadd.f32 %v378, %v477
      %479 = vdwg.mxu0
      %480 = vmatpush.msra.mxu0 0.0
      %481 = vmatpush.msra.mxu0 0.0
      %482 = vmatpush.msra.mxu0 0.0
      %483 = vmatpush.msra.mxu0 0.0
      %484 = vmatpush.msra.mxu0 0.0
      %485 = vmatpush.msra.mxu0 0.0
      %486 = vmatpush.msra.mxu0 0.0
      %487 = vmatpush.msra.mxu0 0.0
      %488 = vmatpush.msra.mxu0 0.0
      %489 = vmatpush.msra.mxu0 0.0
      %490 = vmatpush.msra.mxu0 0.0
      %491 = vmatpush.msra.mxu0 0.0
      %492 = vmatpush.msra.mxu0 0.0
      %493 = vmatpush.msra.mxu0 0.0
      %494 = vmatpush.msra.mxu0 0.0
      %495 = vmatpush.msra.mxu0 %v351
      %496 = vmatmul.f32.gmra.mxu0 %v382
      %v497 = vpop.f32.mrf.mxu0
      %v498 = vadd.f32 %v363, %v497
      %499 = vmatmul.f32.gmra.mxu0 %v385
      %v500 = vpop.f32.mrf.mxu0
      %v501 = vadd.f32 %v368, %v500
      %502 = vmatmul.f32.gmra.mxu0 %v388
      %v503 = vpop.f32.mrf.mxu0
      %v504 = vadd.f32 %v373, %v503
      %505 = vmatmul.f32.gmra.mxu0 %v391
      %v506 = vpop.f32.mrf.mxu0
      %v507 = vadd.f32 %v378, %v506
      %508 = vdwg.mxu0
      %v509 = vmax.f32 %v411, 0.0
      %v510 = vmax.f32 %v440, 0.0
      %v511 = vmax.f32 %v469, 0.0
      %v512 = vmax.f32 %v498, 0.0
      %v513 = vmax.f32 %v414, 0.0
      %v514 = vmax.f32 %v443, 0.0
      %v515 = vmax.f32 %v472, 0.0
      %v516 = vmax.f32 %v501, 0.0
      %v517 = vmax.f32 %v417, 0.0
      %v518 = vmax.f32 %v446, 0.0
      %v519 = vmax.f32 %v475, 0.0
      %v520 = vmax.f32 %v504, 0.0
      %v521 = vmax.f32 %v420, 0.0
      %v522 = vmax.f32 %v449, 0.0
      %v523 = vmax.f32 %v478, 0.0
      %v524 = vmax.f32 %v507, 0.0
      %v525 = vld [vmem:[%s5] sm:$0xff]
      %v526 = vld [vmem:[%s6] sm:$0xff]
      %528 = vset.pattern.permute.xlu0 0
      %529 = vperm.xlu0 %528, %v526
      %v530 = vpop.permute.xlu0 %529
      %vm532 = vcmask 261120
      %v534 = vsel %vm532, %v525, 0
      %536 = vmatpush.msra.mxu0 0.0
      %537 = vmatpush.msra.mxu0 0.0
      %538 = vmatpush.msra.mxu0 0.0
      %539 = vmatpush.msra.mxu0 0.0
      %540 = vmatpush.msra.mxu0 0.0
      %541 = vmatpush.msra.mxu0 0.0
      %542 = vmatpush.msra.mxu0 0.0
      %543 = vmatpush.msra.mxu0 0.0
      %544 = vmatpush.msra.mxu0 0.0
      %545 = vmatpush.msra.mxu0 0.0
      %546 = vmatpush.msra.mxu0 0.0
      %547 = vmatpush.msra.mxu0 0.0
      %548 = vmatpush.msra.mxu0 %v521
      %549 = vmatpush.msra.mxu0 %v517
      %550 = vmatpush.msra.mxu0 %v513
      %551 = vmatpush.msra.mxu0 %v509
      %552 = vmatmul.f32.gmra.mxu0 %v534
      %v553 = vpop.f32.mrf.mxu0
      %v554 = vadd.f32 %v530, %v553
      %555 = vdwg.mxu0
      %556 = vmatpush.msra.mxu0 0.0
      %557 = vmatpush.msra.mxu0 0.0
      %558 = vmatpush.msra.mxu0 0.0
      %559 = vmatpush.msra.mxu0 0.0
      %560 = vmatpush.msra.mxu0 0.0
      %561 = vmatpush.msra.mxu0 0.0
      %562 = vmatpush.msra.mxu0 0.0
      %563 = vmatpush.msra.mxu0 0.0
      %564 = vmatpush.msra.mxu0 0.0
      %565 = vmatpush.msra.mxu0 0.0
      %566 = vmatpush.msra.mxu0 0.0
      %567 = vmatpush.msra.mxu0 0.0
      %568 = vmatpush.msra.mxu0 %v522
      %569 = vmatpush.msra.mxu0 %v518
      %570 = vmatpush.msra.mxu0 %v514
      %571 = vmatpush.msra.mxu0 %v510
      %572 = vmatmul.f32.gmra.mxu0 %v534
      %v573 = vpop.f32.mrf.mxu0
      %v574 = vadd.f32 %v530, %v573
      %575 = vdwg.mxu0
      %576 = vmatpush.msra.mxu0 0.0
      %577 = vmatpush.msra.mxu0 0.0
      %578 = vmatpush.msra.mxu0 0.0
      %579 = vmatpush.msra.mxu0 0.0
      %580 = vmatpush.msra.mxu0 0.0
      %581 = vmatpush.msra.mxu0 0.0
      %582 = vmatpush.msra.mxu0 0.0
      %583 = vmatpush.msra.mxu0 0.0
      %584 = vmatpush.msra.mxu0 0.0
      %585 = vmatpush.msra.mxu0 0.0
      %586 = vmatpush.msra.mxu0 0.0
      %587 = vmatpush.msra.mxu0 0.0
      %588 = vmatpush.msra.mxu0 %v523
      %589 = vmatpush.msra.mxu0 %v519
      %590 = vmatpush.msra.mxu0 %v515
      %591 = vmatpush.msra.mxu0 %v511
      %592 = vmatmul.f32.gmra.mxu0 %v534
      %v593 = vpop.f32.mrf.mxu0
      %v594 = vadd.f32 %v530, %v593
      %595 = vdwg.mxu0
      %596 = vmatpush.msra.mxu0 0.0
      %597 = vmatpush.msra.mxu0 0.0
      %598 = vmatpush.msra.mxu0 0.0
      %599 = vmatpush.msra.mxu0 0.0
      %600 = vmatpush.msra.mxu0 0.0
      %601 = vmatpush.msra.mxu0 0.0
      %602 = vmatpush.msra.mxu0 0.0
      %603 = vmatpush.msra.mxu0 0.0
      %604 = vmatpush.msra.mxu0 0.0
      %605 = vmatpush.msra.mxu0 0.0
      %606 = vmatpush.msra.mxu0 0.0
      %607 = vmatpush.msra.mxu0 0.0
      %608 = vmatpush.msra.mxu0 %v524
      %609 = vmatpush.msra.mxu0 %v520
      %610 = vmatpush.msra.mxu0 %v516
      %611 = vmatpush.msra.mxu0 %v512
      %612 = vmatmul.f32.gmra.mxu0 %v534
      %v613 = vpop.f32.mrf.mxu0
      %v614 = vadd.f32 %v530, %v613
      %615 = vdwg.mxu0
      %v616 = vpack.c.bf16 %v574, %v554
      %v617 = vpack.c.bf16 %v614, %v594
      %618 = vst [vmem:[%s324] sm:$0xff] %v616
      %619 = vst [vmem:[%s324 + $0x8] sm:$0xff] %v617
      %s620 = smul.u32 4, %s18
      %p621 = scmp.lt.s32.totalorder %s620, 7
      %s622 = scalar_select %p621, %s620, 7
      %s623 = smul.addr %s622, 4
      %s624 = scalar_lea.vmem %s7, %s623
      // Predicated region
      $region49: #{ffno3d_forward.15} parent=47 // pred_check
        %p625 = pneg %p198
      $region50: #{ffno3d_forward.15} parent=47 // pred_check_branch
        %627 = sbr.rel (%p625) target = $region52
      $region51: #{ffno3d_forward.15} parent=47 // pred_region
        %s628 = smul.u32 4, %s18
      $region52: #{ffno3d_forward.15} parent=47 // pred_fallthru
        _
    $region48: #{ffno3d_forward.15} parent=5 // pred_fallthru
      _
    %p629 = scmp.le.s32.totalorder 2, %s13
    // Predicated region
    $region53: #{ffno3d_forward.15} parent=5 // pred_check
      %p630 = pneg %p629
    $region54: #{ffno3d_forward.15} parent=5 // pred_check_branch
      %632 = sbr.rel (%p630) target = $region56
    $region55: #{ffno3d_forward.15} parent=5 // pred_region
      %s633 = ssub.s32 %s13, 2
      // Predicated region
      $region57: #{ffno3d_forward.15} parent=55 // pred_check
        %p634 = pneg %p204
      $region58: #{ffno3d_forward.15} parent=55 // pred_check_branch
        %636 = sbr.rel (%p634) target = $region60
      $region59: #{ffno3d_forward.15} parent=55 // pred_region
        %s637 = smul.u32 4, %s19
        %p638 = scmp.lt.s32.totalorder %s637, 7
        %s639 = scalar_select %p638, %s637, 7
        %s640 = smul.addr %s639, 4
        %s641 = scalar_lea.vmem %s7, %s640
      $region60: #{ffno3d_forward.15} parent=55 // pred_fallthru
        _
    $region56: #{ffno3d_forward.15} parent=5 // pred_fallthru
      _
  $region6: #{ffno3d_forward.15} parent=0 // loop_footer
    %s17 = sadd.s32 1, %s13
  $region7: #{ffno3d_forward.15} parent=0 // loop_footer_branch
    %12 = sbr.rel target = $region3
  $region8: #{ffno3d_forward.15} parent=0 // loop_exit
    _

// kernel: ffno3d_forward.16
$region0: #{ffno3d_forward.16}
  #allocation0 [shape = 'u32[]', space=smem, size = 0x4, offset = 0x4, fixed_abs, tag = 'smem constant byte address 0x4 - core index']
  #allocation1 [shape = 'u32[72,128]{1,0:T(1,128)}', space=vmem, size = 0x9000, scoped, tag = 'internal scratch']
  %s0 = inlined_call_operand.vmem [shape: bf16[8,1024], index: 0, kind: input, shape index: {}]
  %s1 = inlined_call_operand.vmem [shape: bf16[8,1024], index: 1, kind: input, shape index: {}]
  %s2 = inlined_call_operand.vmem [shape: f32[8,8], index: 2, kind: input, shape index: {}]
  %s3 = inlined_call_operand.vmem [shape: f32[8,1], index: 3, kind: input, shape index: {}]
  %s4 = inlined_call_operand.vmem [shape: bf16[8,1024], index: 4, kind: output, shape index: {}]
  %s5 = sld [smem:[#allocation0]]
  $region49: #{ffno3d_forward.16} parent=0
    _
  %s7 = ssub.s32 1, %s5
  %s8 = scalar_select 0, %s7, %s5
  loop: start=0, step=1, limit=4
  $region2: #{ffno3d_forward.16} parent=0 // loop_pre_header
    _
  $region3: #{ffno3d_forward.16} parent=0 // loop_header
    %s10 = sphi 0, %s14
    %p11 = scmp.ge.s32.totalorder %s10, 4
    %s20 = sphi 0, %s22
    %s23 = sphi 0, %s20
    %s24 = sphi 0, %s23
    %s40 = sphi 0, %s24
    %s46 = sphi 0, %s48
    %s49 = sphi 0, %s46
    %s50 = sphi 0, %s49
    %s66 = sphi 0, %s50
    %s70 = sphi 0, %s70
    %s72 = sphi 0, %s70
    %s73 = sphi 0, %s72
    %s87 = sphi 0, %s73
    %s91 = sphi 0, %s91
    %s93 = sphi 0, %s91
    %s94 = sphi 0, %s93
    %s108 = sphi 0, %s94
    %s114 = sphi 0, %s116
    %s117 = sphi 0, %s114
    %s118 = sphi 0, %s117
    %s134 = sphi 0, %s118
  $region4: #{ffno3d_forward.16} parent=0 // loop_header_branch
    %13 = sbr.rel (%p11) target = $region8
  $region5: #{ffno3d_forward.16} parent=0 // loop_body
    %s15 = ssub.s32 %s10, 1
    %s16 = ssub.s32 %s10, 2
    %s17 = sadd.s32 %s10, 1
    %s18 = ssub.s32 %s10, %s17
    %p19 = scmp.eq.s32.totalorder %s18, 0
    %s21 = sadd.s32 %s20, 1
    %s22 = scalar_select %p19, %s20, %s21
    %p25 = pneg %p19
    %p26 = scmp.eq.s32.totalorder %s10, 1
    %p27 = por %p25, %p26
    %p28 = scmp.ne.s32.totalorder %s20, %s23
    %p29 = scmp.eq.s32.totalorder %s10, 0
    %p30 = por %p28, %p29
    %p31 = scmp.ne.s32.totalorder %s20, %s23
    %p32 = scmp.eq.s32.totalorder %s15, 1
    %p33 = por %p31, %p32
    %p34 = scmp.ne.s32.totalorder %s23, %s24
    %p35 = scmp.eq.s32.totalorder %s15, 0
    %p36 = por %p34, %p35
    %p37 = scmp.ne.s32.totalorder %s23, %s24
    %p38 = scmp.eq.s32.totalorder %s16, 1
    %p39 = por %p37, %p38
    %p41 = scmp.ne.s32.totalorder %s24, %s40
    %p42 = scmp.eq.s32.totalorder %s16, 0
    %p43 = por %p41, %p42
    %s44 = ssub.s32 %s10, %s17
    %p45 = scmp.eq.s32.totalorder %s44, 0
    %s47 = sadd.s32 %s46, 1
    %s48 = scalar_select %p45, %s46, %s47
    %p51 = pneg %p45
    %p52 = scmp.eq.s32.totalorder %s10, 1
    %p53 = por %p51, %p52
    %p54 = scmp.ne.s32.totalorder %s46, %s49
    %p55 = scmp.eq.s32.totalorder %s10, 0
    %p56 = por %p54, %p55
    %p57 = scmp.ne.s32.totalorder %s46, %s49
    %p58 = scmp.eq.s32.totalorder %s15, 1
    %p59 = por %p57, %p58
    %p60 = scmp.ne.s32.totalorder %s49, %s50
    %p61 = scmp.eq.s32.totalorder %s15, 0
    %p62 = por %p60, %p61
    %p63 = scmp.ne.s32.totalorder %s49, %s50
    %p64 = scmp.eq.s32.totalorder %s16, 1
    %p65 = por %p63, %p64
    %p67 = scmp.ne.s32.totalorder %s50, %s66
    %p68 = scmp.eq.s32.totalorder %s16, 0
    %p69 = por %p67, %p68
    %s71 = sadd.s32 %s70, 1
    %p74 = scmp.eq.s32.totalorder %s10, 1
    %p75 = scmp.ne.s32.totalorder %s70, %s72
    %p76 = scmp.eq.s32.totalorder %s10, 0
    %p77 = por %p75, %p76
    %p78 = scmp.ne.s32.totalorder %s70, %s72
    %p79 = scmp.eq.s32.totalorder %s15, 1
    %p80 = por %p78, %p79
    %p81 = scmp.ne.s32.totalorder %s72, %s73
    %p82 = scmp.eq.s32.totalorder %s15, 0
    %p83 = por %p81, %p82
    %p84 = scmp.ne.s32.totalorder %s72, %s73
    %p85 = scmp.eq.s32.totalorder %s16, 1
    %p86 = por %p84, %p85
    %p88 = scmp.ne.s32.totalorder %s73, %s87
    %p89 = scmp.eq.s32.totalorder %s16, 0
    %p90 = por %p88, %p89
    %s92 = sadd.s32 %s91, 1
    %p95 = scmp.eq.s32.totalorder %s10, 1
    %p96 = scmp.ne.s32.totalorder %s91, %s93
    %p97 = scmp.eq.s32.totalorder %s10, 0
    %p98 = por %p96, %p97
    %p99 = scmp.ne.s32.totalorder %s91, %s93
    %p100 = scmp.eq.s32.totalorder %s15, 1
    %p101 = por %p99, %p100
    %p102 = scmp.ne.s32.totalorder %s93, %s94
    %p103 = scmp.eq.s32.totalorder %s15, 0
    %p104 = por %p102, %p103
    %p105 = scmp.ne.s32.totalorder %s93, %s94
    %p106 = scmp.eq.s32.totalorder %s16, 1
    %p107 = por %p105, %p106
    %p109 = scmp.ne.s32.totalorder %s94, %s108
    %p110 = scmp.eq.s32.totalorder %s16, 0
    %p111 = por %p109, %p110
    %s112 = ssub.s32 %s10, %s17
    %p113 = scmp.eq.s32.totalorder %s112, 0
    %s115 = sadd.s32 %s114, 1
    %s116 = scalar_select %p113, %s114, %s115
    %p119 = pneg %p113
    %p120 = scmp.eq.s32.totalorder %s10, 1
    %p121 = por %p119, %p120
    %p122 = scmp.ne.s32.totalorder %s114, %s117
    %p123 = scmp.eq.s32.totalorder %s10, 0
    %p124 = por %p122, %p123
    %p125 = scmp.ne.s32.totalorder %s114, %s117
    %p126 = scmp.eq.s32.totalorder %s15, 1
    %p127 = por %p125, %p126
    %p128 = scmp.ne.s32.totalorder %s117, %s118
    %p129 = scmp.eq.s32.totalorder %s15, 0
    %p130 = por %p128, %p129
    %p131 = scmp.ne.s32.totalorder %s117, %s118
    %p132 = scmp.eq.s32.totalorder %s16, 1
    %p133 = por %p131, %p132
    %p135 = scmp.ne.s32.totalorder %s118, %s134
    %p136 = scmp.eq.s32.totalorder %s16, 0
    %p137 = por %p135, %p136
    %p138 = scmp.le.s32.totalorder 1, %s10
    %p139 = scmp.lt.s32.totalorder %s10, 3
    %p140 = pnand %p138, %p139
    %p141 = pneg %p140
    // Predicated region
    $region9: #{ffno3d_forward.16} parent=5 // pred_check
      _
    $region10: #{ffno3d_forward.16} parent=5 // pred_check_branch
      %143 = sbr.rel (%p140) target = $region12
    $region11: #{ffno3d_forward.16} parent=5 // pred_region
      %s144 = ssub.s32 %s10, 1
      // Predicated region
      $region13: #{ffno3d_forward.16} parent=11 // pred_check
        %p145 = pneg %p83
      $region14: #{ffno3d_forward.16} parent=11 // pred_check_branch
        %147 = sbr.rel (%p145) target = $region16
      $region15: #{ffno3d_forward.16} parent=11 // pred_region
        _
      $region16: #{ffno3d_forward.16} parent=11 // pred_fallthru
        _
      // Predicated region
      $region17: #{ffno3d_forward.16} parent=11 // pred_check
        %p148 = pneg %p104
      $region18: #{ffno3d_forward.16} parent=11 // pred_check_branch
        %150 = sbr.rel (%p148) target = $region20
      $region19: #{ffno3d_forward.16} parent=11 // pred_region
        _
      $region20: #{ffno3d_forward.16} parent=11 // pred_fallthru
        _
    $region12: #{ffno3d_forward.16} parent=5 // pred_fallthru
      _
    %p151 = scmp.lt.s32.totalorder %s10, 2
    // Predicated region
    $region21: #{ffno3d_forward.16} parent=5 // pred_check
      %p152 = pneg %p151
    $region22: #{ffno3d_forward.16} parent=5 // pred_check_branch
      %154 = sbr.rel (%p152) target = $region24
    $region23: #{ffno3d_forward.16} parent=5 // pred_region
      // Predicated region
      $region25: #{ffno3d_forward.16} parent=23 // pred_check
        %p155 = pneg %p30
      $region26: #{ffno3d_forward.16} parent=23 // pred_check_branch
        %157 = sbr.rel (%p155) target = $region28
      $region27: #{ffno3d_forward.16} parent=23 // pred_region
        %s158 = smul.u32 4, %s10
        %p159 = scmp.lt.s32.totalorder %s158, 7
        %s160 = scalar_select %p159, %s158, 7
        %s161 = smul.addr %s160, 4
        %s162 = scalar_lea.vmem %s0, %s161
        %s163 = smul.u32 4, %s10
      $region28: #{ffno3d_forward.16} parent=23 // pred_fallthru
        _
      // Predicated region
      $region29: #{ffno3d_forward.16} parent=23 // pred_check
        %p164 = pneg %p56
      $region30: #{ffno3d_forward.16} parent=23 // pred_check_branch
        %166 = sbr.rel (%p164) target = $region32
      $region31: #{ffno3d_forward.16} parent=23 // pred_region
        %s167 = smul.u32 4, %s10
        %p168 = scmp.lt.s32.totalorder %s167, 7
        %s169 = scalar_select %p168, %s167, 7
        %s170 = smul.addr %s169, 4
        %s171 = scalar_lea.vmem %s1, %s170
        %s172 = smul.u32 4, %s10
      $region32: #{ffno3d_forward.16} parent=23 // pred_fallthru
        _
    $region24: #{ffno3d_forward.16} parent=5 // pred_fallthru
      _
    %p173 = scmp.le.s32.totalorder 1, %s10
    %p174 = scmp.lt.s32.totalorder %s10, 3
    %p175 = pnand %p173, %p174
    %p176 = pneg %p175
    // Predicated region
    $region33: #{ffno3d_forward.16} parent=5 // pred_check
      _
    $region34: #{ffno3d_forward.16} parent=5 // pred_check_branch
      %178 = sbr.rel (%p175) target = $region36
    $region35: #{ffno3d_forward.16} parent=5 // pred_region
      %s179 = ssub.s32 %s10, 1
      %s180 = smul.u32 4, %s15
      %p181 = scmp.lt.s32.totalorder %s180, 7
      %s182 = scalar_select %p181, %s180, 7
      %s183 = smul.addr %s182, 4
      %s184 = scalar_lea.vmem %s0, %s183
      %p185 = pneg %p36
      %p186 = pneg %p33
      %s187 = smul.u32 4, %s15
      %p188 = scmp.lt.s32.totalorder %s187, 7
      %s189 = scalar_select %p188, %s187, 7
      %s190 = smul.addr %s189, 4
      %s191 = scalar_lea.vmem %s1, %s190
      %p192 = pneg %p62
      %p193 = pneg %p59
      %p194 = pneg %p83
      %p195 = pneg %p80
      %p196 = pneg %p104
      %p197 = pneg %p101
      %p198 = pneg %p130
      %p199 = pneg %p127
      %s200 = smul.u32 4, %s15
      %p201 = scmp.lt.s32.totalorder %s200, 7
      %s202 = scalar_select %p201, %s200, 7
      %s203 = smul.addr %s202, 4
      %s204 = scalar_lea.vmem %s4, %s203
      %s205 = smul.u32 4, %s15
      %p206 = scmp.lt.s32.totalorder %s205, 7
      %s207 = scalar_select %p206, %s205, 7
      %s208 = smul.addr %s207, 4
      %s209 = scalar_lea.vmem %s0, %s208
      %s210 = smul.u32 4, %s15
      %s211 = smul.u32 4, %s15
      %p212 = scmp.lt.s32.totalorder %s211, 7
      %s213 = scalar_select %p212, %s211, 7
      %s214 = smul.addr %s213, 4
      %s215 = scalar_lea.vmem %s1, %s214
      %s216 = smul.u32 4, %s15
      %s217 = smul.u32 4, %s15
      %p218 = scmp.lt.s32.totalorder %s217, 7
      %s219 = scalar_select %p218, %s217, 7
      %s220 = smul.addr %s219, 4
      %s221 = scalar_lea.vmem %s4, %s220
      %s222 = smul.u32 4, %s15
      %v223 = vld [vmem:[%s209] sm:$0xff]
      %v224 = vld [vmem:[%s209 + $0x8] sm:$0xff]
      %v225 = vunpack.c.l.bf16 %v223
      %v226 = vunpack.c.h.bf16 %v223
      %v227 = vunpack.c.l.bf16 %v224
      %v228 = vunpack.c.h.bf16 %v224
      %v229 = vld [vmem:[%s215] sm:$0xff]
      %v230 = vld [vmem:[%s215 + $0x8] sm:$0xff]
      %v231 = vunpack.c.l.bf16 %v229
      %v232 = vunpack.c.h.bf16 %v229
      %v233 = vunpack.c.l.bf16 %v230
      %v234 = vunpack.c.h.bf16 %v230
      %v235 = vld [vmem:[%s2] sm:$0xff]
      %v236 = vld [vmem:[%s3] sm:$0xff]
      %238 = vset.pattern.permute.xlu0 0
      %239 = vperm.xlu0 %238, %v236
      %v240 = vpop.permute.xlu0 %239
      %vm242 = vcmask 64512
      %v244 = vsel %vm242, %v235, 0
      %246 = vmatpush.msra.mxu0 0.0
      %247 = vmatpush.msra.mxu0 0.0
      %248 = vmatpush.msra.mxu0 0.0
      %249 = vmatpush.msra.mxu0 0.0
      %250 = vmatpush.msra.mxu0 0.0
      %251 = vmatpush.msra.mxu0 0.0
      %252 = vmatpush.msra.mxu0 0.0
      %253 = vmatpush.msra.mxu0 0.0
      %254 = vmatpush.msra.mxu0 0.0
      %255 = vmatpush.msra.mxu0 0.0
      %256 = vmatpush.msra.mxu0 0.0
      %257 = vmatpush.msra.mxu0 0.0
      %258 = vmatpush.msra.mxu0 0.0
      %259 = vmatpush.msra.mxu0 0.0
      %260 = vmatpush.msra.mxu0 0.0
      %261 = vmatpush.msra.mxu0 %v225
      %262 = vmatmul.f32.gmra.mxu0 %v244
      %v263 = vpop.f32.mrf.mxu0
      %v264 = vadd.f32 %v240, %v263
      %265 = vdwg.mxu0
      %266 = vmatpush.msra.mxu0 0.0
      %267 = vmatpush.msra.mxu0 0.0
      %268 = vmatpush.msra.mxu0 0.0
      %269 = vmatpush.msra.mxu0 0.0
      %270 = vmatpush.msra.mxu0 0.0
      %271 = vmatpush.msra.mxu0 0.0
      %272 = vmatpush.msra.mxu0 0.0
      %273 = vmatpush.msra.mxu0 0.0
      %274 = vmatpush.msra.mxu0 0.0
      %275 = vmatpush.msra.mxu0 0.0
      %276 = vmatpush.msra.mxu0 0.0
      %277 = vmatpush.msra.mxu0 0.0
      %278 = vmatpush.msra.mxu0 0.0
      %279 = vmatpush.msra.mxu0 0.0
      %280 = vmatpush.msra.mxu0 0.0
      %281 = vmatpush.msra.mxu0 %v226
      %282 = vmatmul.f32.gmra.mxu0 %v244
      %v283 = vpop.f32.mrf.mxu0
      %v284 = vadd.f32 %v240, %v283
      %285 = vdwg.mxu0
      %286 = vmatpush.msra.mxu0 0.0
      %287 = vmatpush.msra.mxu0 0.0
      %288 = vmatpush.msra.mxu0 0.0
      %289 = vmatpush.msra.mxu0 0.0
      %290 = vmatpush.msra.mxu0 0.0
      %291 = vmatpush.msra.mxu0 0.0
      %292 = vmatpush.msra.mxu0 0.0
      %293 = vmatpush.msra.mxu0 0.0
      %294 = vmatpush.msra.mxu0 0.0
      %295 = vmatpush.msra.mxu0 0.0
      %296 = vmatpush.msra.mxu0 0.0
      %297 = vmatpush.msra.mxu0 0.0
      %298 = vmatpush.msra.mxu0 0.0
      %299 = vmatpush.msra.mxu0 0.0
      %300 = vmatpush.msra.mxu0 0.0
      %301 = vmatpush.msra.mxu0 %v227
      %302 = vmatmul.f32.gmra.mxu0 %v244
      %v303 = vpop.f32.mrf.mxu0
      %v304 = vadd.f32 %v240, %v303
      %305 = vdwg.mxu0
      %306 = vmatpush.msra.mxu0 0.0
      %307 = vmatpush.msra.mxu0 0.0
      %308 = vmatpush.msra.mxu0 0.0
      %309 = vmatpush.msra.mxu0 0.0
      %310 = vmatpush.msra.mxu0 0.0
      %311 = vmatpush.msra.mxu0 0.0
      %312 = vmatpush.msra.mxu0 0.0
      %313 = vmatpush.msra.mxu0 0.0
      %314 = vmatpush.msra.mxu0 0.0
      %315 = vmatpush.msra.mxu0 0.0
      %316 = vmatpush.msra.mxu0 0.0
      %317 = vmatpush.msra.mxu0 0.0
      %318 = vmatpush.msra.mxu0 0.0
      %319 = vmatpush.msra.mxu0 0.0
      %320 = vmatpush.msra.mxu0 0.0
      %321 = vmatpush.msra.mxu0 %v228
      %322 = vmatmul.f32.gmra.mxu0 %v244
      %v323 = vpop.f32.mrf.mxu0
      %v324 = vadd.f32 %v240, %v323
      %325 = vdwg.mxu0
      %v326 = vadd.f32 %v264, %v231
      %v327 = vadd.f32 %v284, %v232
      %v328 = vadd.f32 %v304, %v233
      %v329 = vadd.f32 %v324, %v234
      %v330 = vpack.c.bf16 %v327, %v326
      %v331 = vpack.c.bf16 %v329, %v328
      %332 = vst [vmem:[%s221] sm:$0xff] %v330
      %333 = vst [vmem:[%s221 + $0x8] sm:$0xff] %v331
      %s334 = smul.u32 4, %s15
      %p335 = scmp.lt.s32.totalorder %s334, 7
      %s336 = scalar_select %p335, %s334, 7
      %s337 = smul.addr %s336, 4
      %s338 = scalar_lea.vmem %s4, %s337
      // Predicated region
      $region37: #{ffno3d_forward.16} parent=35 // pred_check
        %p339 = pneg %p127
      $region38: #{ffno3d_forward.16} parent=35 // pred_check_branch
        %341 = sbr.rel (%p339) target = $region40
      $region39: #{ffno3d_forward.16} parent=35 // pred_region
        %s342 = smul.u32 4, %s15
      $region40: #{ffno3d_forward.16} parent=35 // pred_fallthru
        _
    $region36: #{ffno3d_forward.16} parent=5 // pred_fallthru
      _
    %p343 = scmp.le.s32.totalorder 2, %s10
    // Predicated region
    $region41: #{ffno3d_forward.16} parent=5 // pred_check
      %p344 = pneg %p343
    $region42: #{ffno3d_forward.16} parent=5 // pred_check_branch
      %346 = sbr.rel (%p344) target = $region44
    $region43: #{ffno3d_forward.16} parent=5 // pred_region
      %s347 = ssub.s32 %s10, 2
      // Predicated region
      $region45: #{ffno3d_forward.16} parent=43 // pred_check
        %p348 = pneg %p133
      $region46: #{ffno3d_forward.16} parent=43 // pred_check_branch
        %350 = sbr.rel (%p348) target = $region48
      $region47: #{ffno3d_forward.16} parent=43 // pred_region
        %s351 = smul.u32 4, %s16
        %p352 = scmp.lt.s32.totalorder %s351, 7
        %s353 = scalar_select %p352, %s351, 7
        %s354 = smul.addr %s353, 4
        %s355 = scalar_lea.vmem %s4, %s354
      $region48: #{ffno3d_forward.16} parent=43 // pred_fallthru
        _
    $region44: #{ffno3d_forward.16} parent=5 // pred_fallthru
      _
  $region6: #{ffno3d_forward.16} parent=0 // loop_footer
    %s14 = sadd.s32 1, %s10
  $region7: #{ffno3d_forward.16} parent=0 // loop_footer_branch
    %9 = sbr.rel target = $region3
  $region8: #{ffno3d_forward.16} parent=0 // loop_exit
    _

// kernel: squeeze.3
$region0: #{squeeze.3}
  %s0 = inlined_call_operand.vmem [shape: f32[1024], index: 0, kind: input, shape index: {}]
  %s1 = inlined_call_operand.hbm [shape: f32[2,8,8,8,1], index: 1, kind: output, shape index: {}]
  $region1: #{squeeze.3} parent=0
    #allocation0 [shape = 'u8[65536]{0}', space=vmem, size = 0x10000, scoped, tag = 'operand span for operand 1']
    #allocation1 [shape = 's32[1]{0}', space=sflag, size = 0x4, scoped, tag = 'scoped memory for squeeze.3']
    %2 = vsyncpa [#allocation1], 0
    %v3 = vld [vmem:[%s0] sm:$0xff]
    %vm4 = vcmask 64512
    %5 = vst.msk [vmem:[#allocation0] ss:$16 sm:$0x3] %vm4, %v3
    %6 = vst.msk [vmem:[#allocation0] ss:$16 sm:$0xc] %vm4, %v3
    %7 = vst.msk [vmem:[#allocation0] ss:$16 sm:$0x30] %vm4, %v3
    %8 = vst.msk [vmem:[#allocation0] ss:$16 sm:$0xc0] %vm4, %v3
    %v9 = vld [vmem:[%s0] sm:$0xff]
    %10 = vrot.lane.b32.xlu0 %v9, 120
    %v11 = vpop.permute.xlu0 %10
    %vm12 = vcmask 64512
    %s13 = scalar_lea.vmem [#allocation0], 1
    %14 = vst.msk [vmem:[%s13] ss:$16 sm:$0x3] %vm12, %v11
    %s15 = scalar_lea.vmem [#allocation0], 1
    %16 = vst.msk [vmem:[%s15] ss:$16 sm:$0xc] %vm12, %v11
    %s17 = scalar_lea.vmem [#allocation0], 1
    %18 = vst.msk [vmem:[%s17] ss:$16 sm:$0x30] %vm12, %v11
    %s19 = scalar_lea.vmem [#allocation0], 1
    %20 = vst.msk [vmem:[%s19] ss:$16 sm:$0xc0] %vm12, %v11
    %v21 = vld [vmem:[%s0] sm:$0xff]
    %22 = vrot.lane.b32.xlu0 %v21, 112
    %v23 = vpop.permute.xlu0 %22
    %vm24 = vcmask 64512
    %s25 = scalar_lea.vmem [#allocation0], 2
    %26 = vst.msk [vmem:[%s25] ss:$16 sm:$0x3] %vm24, %v23
    %s27 = scalar_lea.vmem [#allocation0], 2
    %28 = vst.msk [vmem:[%s27] ss:$16 sm:$0xc] %vm24, %v23
    %s29 = scalar_lea.vmem [#allocation0], 2
    %30 = vst.msk [vmem:[%s29] ss:$16 sm:$0x30] %vm24, %v23
    %s31 = scalar_lea.vmem [#allocation0], 2
    %32 = vst.msk [vmem:[%s31] ss:$16 sm:$0xc0] %vm24, %v23
    %v33 = vld [vmem:[%s0] sm:$0xff]
    %34 = vrot.lane.b32.xlu0 %v33, 104
    %v35 = vpop.permute.xlu0 %34
    %vm36 = vcmask 64512
    %s37 = scalar_lea.vmem [#allocation0], 3
    %38 = vst.msk [vmem:[%s37] ss:$16 sm:$0x3] %vm36, %v35
    %s39 = scalar_lea.vmem [#allocation0], 3
    %40 = vst.msk [vmem:[%s39] ss:$16 sm:$0xc] %vm36, %v35
    %s41 = scalar_lea.vmem [#allocation0], 3
    %42 = vst.msk [vmem:[%s41] ss:$16 sm:$0x30] %vm36, %v35
    %s43 = scalar_lea.vmem [#allocation0], 3
    %44 = vst.msk [vmem:[%s43] ss:$16 sm:$0xc0] %vm36, %v35
    %v45 = vld [vmem:[%s0] sm:$0xff]
    %46 = vrot.lane.b32.xlu0 %v45, 96
    %v47 = vpop.permute.xlu0 %46
    %vm48 = vcmask 64512
    %s49 = scalar_lea.vmem [#allocation0], 4
    %50 = vst.msk [vmem:[%s49] ss:$16 sm:$0x3] %vm48, %v47
    %s51 = scalar_lea.vmem [#allocation0], 4
    %52 = vst.msk [vmem:[%s51] ss:$16 sm:$0xc] %vm48, %v47
    %s53 = scalar_lea.vmem [#allocation0], 4
    %54 = vst.msk [vmem:[%s53] ss:$16 sm:$0x30] %vm48, %v47
    %s55 = scalar_lea.vmem [#allocation0], 4
    %56 = vst.msk [vmem:[%s55] ss:$16 sm:$0xc0] %vm48, %v47
    %v57 = vld [vmem:[%s0] sm:$0xff]
    %58 = vrot.lane.b32.xlu0 %v57, 88
    %v59 = vpop.permute.xlu0 %58
    %vm60 = vcmask 64512
    %s61 = scalar_lea.vmem [#allocation0], 5
    %62 = vst.msk [vmem:[%s61] ss:$16 sm:$0x3] %vm60, %v59
    %s63 = scalar_lea.vmem [#allocation0], 5
    %64 = vst.msk [vmem:[%s63] ss:$16 sm:$0xc] %vm60, %v59
    %s65 = scalar_lea.vmem [#allocation0], 5
    %66 = vst.msk [vmem:[%s65] ss:$16 sm:$0x30] %vm60, %v59
    %s67 = scalar_lea.vmem [#allocation0], 5
    %68 = vst.msk [vmem:[%s67] ss:$16 sm:$0xc0] %vm60, %v59
    %v69 = vld [vmem:[%s0] sm:$0xff]
    %70 = vrot.lane.b32.xlu0 %v69, 80
    %v71 = vpop.permute.xlu0 %70
    %vm72 = vcmask 64512
    %s73 = scalar_lea.vmem [#allocation0], 6
    %74 = vst.msk [vmem:[%s73] ss:$16 sm:$0x3] %vm72, %v71
    %s75 = scalar_lea.vmem [#allocation0], 6
    %76 = vst.msk [vmem:[%s75] ss:$16 sm:$0xc] %vm72, %v71
    %s77 = scalar_lea.vmem [#allocation0], 6
    %78 = vst.msk [vmem:[%s77] ss:$16 sm:$0x30] %vm72, %v71
    %s79 = scalar_lea.vmem [#allocation0], 6
    %80 = vst.msk [vmem:[%s79] ss:$16 sm:$0xc0] %vm72, %v71
    %v81 = vld [vmem:[%s0] sm:$0xff]
    %82 = vrot.lane.b32.xlu0 %v81, 72
    %v83 = vpop.permute.xlu0 %82
    %vm84 = vcmask 64512
    %s85 = scalar_lea.vmem [#allocation0], 7
    %86 = vst.msk [vmem:[%s85] ss:$16 sm:$0x3] %vm84, %v83
    %s87 = scalar_lea.vmem [#allocation0], 7
    %88 = vst.msk [vmem:[%s87] ss:$16 sm:$0xc] %vm84, %v83
    %s89 = scalar_lea.vmem [#allocation0], 7
    %90 = vst.msk [vmem:[%s89] ss:$16 sm:$0x30] %vm84, %v83
    %s91 = scalar_lea.vmem [#allocation0], 7
    %92 = vst.msk [vmem:[%s91] ss:$16 sm:$0xc0] %vm84, %v83
    %v93 = vld [vmem:[%s0] sm:$0xff]
    %94 = vrot.lane.b32.xlu0 %v93, 64
    %v95 = vpop.permute.xlu0 %94
    %vm96 = vcmask 64512
    %s97 = scalar_lea.vmem [#allocation0], 8
    %98 = vst.msk [vmem:[%s97] ss:$16 sm:$0x3] %vm96, %v95
    %s99 = scalar_lea.vmem [#allocation0], 8
    %100 = vst.msk [vmem:[%s99] ss:$16 sm:$0xc] %vm96, %v95
    %s101 = scalar_lea.vmem [#allocation0], 8
    %102 = vst.msk [vmem:[%s101] ss:$16 sm:$0x30] %vm96, %v95
    %s103 = scalar_lea.vmem [#allocation0], 8
    %104 = vst.msk [vmem:[%s103] ss:$16 sm:$0xc0] %vm96, %v95
    %v105 = vld [vmem:[%s0] sm:$0xff]
    %106 = vrot.lane.b32.xlu0 %v105, 56
    %v107 = vpop.permute.xlu0 %106
    %vm108 = vcmask 64512
    %s109 = scalar_lea.vmem [#allocation0], 9
    %110 = vst.msk [vmem:[%s109] ss:$16 sm:$0x3] %vm108, %v107
    %s111 = scalar_lea.vmem [#allocation0], 9
    %112 = vst.msk [vmem:[%s111] ss:$16 sm:$0xc] %vm108, %v107
    %s113 = scalar_lea.vmem [#allocation0], 9
    %114 = vst.msk [vmem:[%s113] ss:$16 sm:$0x30] %vm108, %v107
    %s115 = scalar_lea.vmem [#allocation0], 9
    %116 = vst.msk [vmem:[%s115] ss:$16 sm:$0xc0] %vm108, %v107
    %v117 = vld [vmem:[%s0] sm:$0xff]
    %118 = vrot.lane.b32.xlu0 %v117, 48
    %v119 = vpop.permute.xlu0 %118
    %vm120 = vcmask 64512
    %s121 = scalar_lea.vmem [#allocation0], 10
    %122 = vst.msk [vmem:[%s121] ss:$16 sm:$0x3] %vm120, %v119
    %s123 = scalar_lea.vmem [#allocation0], 10
    %124 = vst.msk [vmem:[%s123] ss:$16 sm:$0xc] %vm120, %v119
    %s125 = scalar_lea.vmem [#allocation0], 10
    %126 = vst.msk [vmem:[%s125] ss:$16 sm:$0x30] %vm120, %v119
    %s127 = scalar_lea.vmem [#allocation0], 10
    %128 = vst.msk [vmem:[%s127] ss:$16 sm:$0xc0] %vm120, %v119
    %v129 = vld [vmem:[%s0] sm:$0xff]
    %130 = vrot.lane.b32.xlu0 %v129, 40
    %v131 = vpop.permute.xlu0 %130
    %vm132 = vcmask 64512
    %s133 = scalar_lea.vmem [#allocation0], 11
    %134 = vst.msk [vmem:[%s133] ss:$16 sm:$0x3] %vm132, %v131
    %s135 = scalar_lea.vmem [#allocation0], 11
    %136 = vst.msk [vmem:[%s135] ss:$16 sm:$0xc] %vm132, %v131
    %s137 = scalar_lea.vmem [#allocation0], 11
    %138 = vst.msk [vmem:[%s137] ss:$16 sm:$0x30] %vm132, %v131
    %s139 = scalar_lea.vmem [#allocation0], 11
    %140 = vst.msk [vmem:[%s139] ss:$16 sm:$0xc0] %vm132, %v131
    %v141 = vld [vmem:[%s0] sm:$0xff]
    %142 = vrot.lane.b32.xlu0 %v141, 32
    %v143 = vpop.permute.xlu0 %142
    %vm144 = vcmask 64512
    %s145 = scalar_lea.vmem [#allocation0], 12
    %146 = vst.msk [vmem:[%s145] ss:$16 sm:$0x3] %vm144, %v143
    %s147 = scalar_lea.vmem [#allocation0], 12
    %148 = vst.msk [vmem:[%s147] ss:$16 sm:$0xc] %vm144, %v143
    %s149 = scalar_lea.vmem [#allocation0], 12
    %150 = vst.msk [vmem:[%s149] ss:$16 sm:$0x30] %vm144, %v143
    %s151 = scalar_lea.vmem [#allocation0], 12
    %152 = vst.msk [vmem:[%s151] ss:$16 sm:$0xc0] %vm144, %v143
    %v153 = vld [vmem:[%s0] sm:$0xff]
    %154 = vrot.lane.b32.xlu0 %v153, 24
    %v155 = vpop.permute.xlu0 %154
    %vm156 = vcmask 64512
    %s157 = scalar_lea.vmem [#allocation0], 13
    %158 = vst.msk [vmem:[%s157] ss:$16 sm:$0x3] %vm156, %v155
    %s159 = scalar_lea.vmem [#allocation0], 13
    %160 = vst.msk [vmem:[%s159] ss:$16 sm:$0xc] %vm156, %v155
    %s161 = scalar_lea.vmem [#allocation0], 13
    %162 = vst.msk [vmem:[%s161] ss:$16 sm:$0x30] %vm156, %v155
    %s163 = scalar_lea.vmem [#allocation0], 13
    %164 = vst.msk [vmem:[%s163] ss:$16 sm:$0xc0] %vm156, %v155
    %v165 = vld [vmem:[%s0] sm:$0xff]
    %166 = vrot.lane.b32.xlu0 %v165, 16
    %v167 = vpop.permute.xlu0 %166
    %vm168 = vcmask 64512
    %s169 = scalar_lea.vmem [#allocation0], 14
    %170 = vst.msk [vmem:[%s169] ss:$16 sm:$0x3] %vm168, %v167
    %s171 = scalar_lea.vmem [#allocation0], 14
    %172 = vst.msk [vmem:[%s171] ss:$16 sm:$0xc] %vm168, %v167
    %s173 = scalar_lea.vmem [#allocation0], 14
    %174 = vst.msk [vmem:[%s173] ss:$16 sm:$0x30] %vm168, %v167
    %s175 = scalar_lea.vmem [#allocation0], 14
    %176 = vst.msk [vmem:[%s175] ss:$16 sm:$0xc0] %vm168, %v167
    %v177 = vld [vmem:[%s0] sm:$0xff]
    %178 = vrot.lane.b32.xlu0 %v177, 8
    %v179 = vpop.permute.xlu0 %178
    %vm180 = vcmask 64512
    %s181 = scalar_lea.vmem [#allocation0], 15
    %182 = vst.msk [vmem:[%s181] ss:$16 sm:$0x3] %vm180, %v179
    %s183 = scalar_lea.vmem [#allocation0], 15
    %184 = vst.msk [vmem:[%s183] ss:$16 sm:$0xc] %vm180, %v179
    %s185 = scalar_lea.vmem [#allocation0], 15
    %186 = vst.msk [vmem:[%s185] ss:$16 sm:$0x30] %vm180, %v179
    %s187 = scalar_lea.vmem [#allocation0], 15
    %188 = vst.msk [vmem:[%s187] ss:$16 sm:$0xc0] %vm180, %v179
    %190 = vsyncadd [#allocation1], 0
    %s192 = sshll.u32 [#allocation0], 4
    %s193 = int_to_ptr.vmem [resolvable:$true] %s192
    %s194 = sshll.u32 %s1, 4
    %s195 = int_to_ptr.hbm [resolvable:$true] %s194
    %197 = dma.vmem_to_hbm [thread:$0]  %s193, 2048, %s195, [#allocation1]
    %199 = dma.done [#allocation1], 2048
    %200 = vsyncpa [#allocation1], 1

// kernel: ffno3d_forward.21
$region0: #{ffno3d_forward.21}
  #allocation0 [shape = 'u32[]', space=smem, size = 0x4, offset = 0x4, fixed_abs, tag = 'smem constant byte address 0x4 - core index']
  #allocation1 [shape = 'u32[72,128]{1,0:T(1,128)}', space=vmem, size = 0x9000, scoped, tag = 'internal scratch']
  %s0 = inlined_call_operand.vmem [shape: bf16[8,1024], index: 0, kind: input, shape index: {}]
  %s1 = inlined_call_operand.vmem [shape: f32[384,8], index: 1, kind: input, shape index: {}]
  %s2 = inlined_call_operand.vmem [shape: f32[384,1], index: 2, kind: input, shape index: {}]
  %s3 = inlined_call_operand.vmem [shape: f32[3,384], index: 3, kind: input, shape index: {}]
  %s4 = inlined_call_operand.vmem [shape: f32[3,1], index: 4, kind: input, shape index: {}]
  %s5 = inlined_call_operand.vmem [shape: f32[3,1024], index: 5, kind: output, shape index: {}]
  %s6 = sld [smem:[#allocation0]]
  $region53: #{ffno3d_forward.21} parent=0
    _
  %s8 = ssub.s32 1, %s6
  %s9 = scalar_select 0, %s8, %s6
  loop: start=0, step=1, limit=4
  $region2: #{ffno3d_forward.21} parent=0 // loop_pre_header
    _
  $region3: #{ffno3d_forward.21} parent=0 // loop_header
    %s11 = sphi 0, %s15
    %p12 = scmp.ge.s32.totalorder %s11, 4
    %s21 = sphi 0, %s23
    %s24 = sphi 0, %s21
    %s25 = sphi 0, %s24
    %s41 = sphi 0, %s25
    %s45 = sphi 0, %s45
    %s47 = sphi 0, %s45
    %s48 = sphi 0, %s47
    %s62 = sphi 0, %s48
    %s66 = sphi 0, %s66
    %s68 = sphi 0, %s66
    %s69 = sphi 0, %s68
    %s83 = sphi 0, %s69
    %s87 = sphi 0, %s87
    %s89 = sphi 0, %s87
    %s90 = sphi 0, %s89
    %s104 = sphi 0, %s90
    %s108 = sphi 0, %s108
    %s110 = sphi 0, %s108
    %s111 = sphi 0, %s110
    %s125 = sphi 0, %s111
    %s131 = sphi 0, %s133
    %s134 = sphi 0, %s131
    %s135 = sphi 0, %s134
    %s151 = sphi 0, %s135
  $region4: #{ffno3d_forward.21} parent=0 // loop_header_branch
    %14 = sbr.rel (%p12) target = $region8
  $region5: #{ffno3d_forward.21} parent=0 // loop_body
    %s16 = ssub.s32 %s11, 1
    %s17 = ssub.s32 %s11, 2
    %s18 = sadd.s32 %s11, 1
    %s19 = ssub.s32 %s11, %s18
    %p20 = scmp.eq.s32.totalorder %s19, 0
    %s22 = sadd.s32 %s21, 1
    %s23 = scalar_select %p20, %s21, %s22
    %p26 = pneg %p20
    %p27 = scmp.eq.s32.totalorder %s11, 1
    %p28 = por %p26, %p27
    %p29 = scmp.ne.s32.totalorder %s21, %s24
    %p30 = scmp.eq.s32.totalorder %s11, 0
    %p31 = por %p29, %p30
    %p32 = scmp.ne.s32.totalorder %s21, %s24
    %p33 = scmp.eq.s32.totalorder %s16, 1
    %p34 = por %p32, %p33
    %p35 = scmp.ne.s32.totalorder %s24, %s25
    %p36 = scmp.eq.s32.totalorder %s16, 0
    %p37 = por %p35, %p36
    %p38 = scmp.ne.s32.totalorder %s24, %s25
    %p39 = scmp.eq.s32.totalorder %s17, 1
    %p40 = por %p38, %p39
    %p42 = scmp.ne.s32.totalorder %s25, %s41
    %p43 = scmp.eq.s32.totalorder %s17, 0
    %p44 = por %p42, %p43
    %s46 = sadd.s32 %s45, 1
    %p49 = scmp.eq.s32.totalorder %s11, 1
    %p50 = scmp.ne.s32.totalorder %s45, %s47
    %p51 = scmp.eq.s32.totalorder %s11, 0
    %p52 = por %p50, %p51
    %p53 = scmp.ne.s32.totalorder %s45, %s47
    %p54 = scmp.eq.s32.totalorder %s16, 1
    %p55 = por %p53, %p54
    %p56 = scmp.ne.s32.totalorder %s47, %s48
    %p57 = scmp.eq.s32.totalorder %s16, 0
    %p58 = por %p56, %p57
    %p59 = scmp.ne.s32.totalorder %s47, %s48
    %p60 = scmp.eq.s32.totalorder %s17, 1
    %p61 = por %p59, %p60
    %p63 = scmp.ne.s32.totalorder %s48, %s62
    %p64 = scmp.eq.s32.totalorder %s17, 0
    %p65 = por %p63, %p64
    %s67 = sadd.s32 %s66, 1
    %p70 = scmp.eq.s32.totalorder %s11, 1
    %p71 = scmp.ne.s32.totalorder %s66, %s68
    %p72 = scmp.eq.s32.totalorder %s11, 0
    %p73 = por %p71, %p72
    %p74 = scmp.ne.s32.totalorder %s66, %s68
    %p75 = scmp.eq.s32.totalorder %s16, 1
    %p76 = por %p74, %p75
    %p77 = scmp.ne.s32.totalorder %s68, %s69
    %p78 = scmp.eq.s32.totalorder %s16, 0
    %p79 = por %p77, %p78
    %p80 = scmp.ne.s32.totalorder %s68, %s69
    %p81 = scmp.eq.s32.totalorder %s17, 1
    %p82 = por %p80, %p81
    %p84 = scmp.ne.s32.totalorder %s69, %s83
    %p85 = scmp.eq.s32.totalorder %s17, 0
    %p86 = por %p84, %p85
    %s88 = sadd.s32 %s87, 1
    %p91 = scmp.eq.s32.totalorder %s11, 1
    %p92 = scmp.ne.s32.totalorder %s87, %s89
    %p93 = scmp.eq.s32.totalorder %s11, 0
    %p94 = por %p92, %p93
    %p95 = scmp.ne.s32.totalorder %s87, %s89
    %p96 = scmp.eq.s32.totalorder %s16, 1
    %p97 = por %p95, %p96
    %p98 = scmp.ne.s32.totalorder %s89, %s90
    %p99 = scmp.eq.s32.totalorder %s16, 0
    %p100 = por %p98, %p99
    %p101 = scmp.ne.s32.totalorder %s89, %s90
    %p102 = scmp.eq.s32.totalorder %s17, 1
    %p103 = por %p101, %p102
    %p105 = scmp.ne.s32.totalorder %s90, %s104
    %p106 = scmp.eq.s32.totalorder %s17, 0
    %p107 = por %p105, %p106
    %s109 = sadd.s32 %s108, 1
    %p112 = scmp.eq.s32.totalorder %s11, 1
    %p113 = scmp.ne.s32.totalorder %s108, %s110
    %p114 = scmp.eq.s32.totalorder %s11, 0
    %p115 = por %p113, %p114
    %p116 = scmp.ne.s32.totalorder %s108, %s110
    %p117 = scmp.eq.s32.totalorder %s16, 1
    %p118 = por %p116, %p117
    %p119 = scmp.ne.s32.totalorder %s110, %s111
    %p120 = scmp.eq.s32.totalorder %s16, 0
    %p121 = por %p119, %p120
    %p122 = scmp.ne.s32.totalorder %s110, %s111
    %p123 = scmp.eq.s32.totalorder %s17, 1
    %p124 = por %p122, %p123
    %p126 = scmp.ne.s32.totalorder %s111, %s125
    %p127 = scmp.eq.s32.totalorder %s17, 0
    %p128 = por %p126, %p127
    %s129 = ssub.s32 %s11, %s18
    %p130 = scmp.eq.s32.totalorder %s129, 0
    %s132 = sadd.s32 %s131, 1
    %s133 = scalar_select %p130, %s131, %s132
    %p136 = pneg %p130
    %p137 = scmp.eq.s32.totalorder %s11, 1
    %p138 = por %p136, %p137
    %p139 = scmp.ne.s32.totalorder %s131, %s134
    %p140 = scmp.eq.s32.totalorder %s11, 0
    %p141 = por %p139, %p140
    %p142 = scmp.ne.s32.totalorder %s131, %s134
    %p143 = scmp.eq.s32.totalorder %s16, 1
    %p144 = por %p142, %p143
    %p145 = scmp.ne.s32.totalorder %s134, %s135
    %p146 = scmp.eq.s32.totalorder %s16, 0
    %p147 = por %p145, %p146
    %p148 = scmp.ne.s32.totalorder %s134, %s135
    %p149 = scmp.eq.s32.totalorder %s17, 1
    %p150 = por %p148, %p149
    %p152 = scmp.ne.s32.totalorder %s135, %s151
    %p153 = scmp.eq.s32.totalorder %s17, 0
    %p154 = por %p152, %p153
    %p155 = scmp.le.s32.totalorder 1, %s11
    %p156 = scmp.lt.s32.totalorder %s11, 3
    %p157 = pnand %p155, %p156
    %p158 = pneg %p157
    // Predicated region
    $region9: #{ffno3d_forward.21} parent=5 // pred_check
      _
    $region10: #{ffno3d_forward.21} parent=5 // pred_check_branch
      %160 = sbr.rel (%p157) target = $region12
    $region11: #{ffno3d_forward.21} parent=5 // pred_region
      %s161 = ssub.s32 %s11, 1
      // Predicated region
      $region13: #{ffno3d_forward.21} parent=11 // pred_check
        %p162 = pneg %p58
      $region14: #{ffno3d_forward.21} parent=11 // pred_check_branch
        %164 = sbr.rel (%p162) target = $region16
      $region15: #{ffno3d_forward.21} parent=11 // pred_region
        _
      $region16: #{ffno3d_forward.21} parent=11 // pred_fallthru
        _
      // Predicated region
      $region17: #{ffno3d_forward.21} parent=11 // pred_check
        %p165 = pneg %p79
      $region18: #{ffno3d_forward.21} parent=11 // pred_check_branch
        %167 = sbr.rel (%p165) target = $region20
      $region19: #{ffno3d_forward.21} parent=11 // pred_region
        _
      $region20: #{ffno3d_forward.21} parent=11 // pred_fallthru
        _
      // Predicated region
      $region21: #{ffno3d_forward.21} parent=11 // pred_check
        %p168 = pneg %p100
      $region22: #{ffno3d_forward.21} parent=11 // pred_check_branch
        %170 = sbr.rel (%p168) target = $region24
      $region23: #{ffno3d_forward.21} parent=11 // pred_region
        _
      $region24: #{ffno3d_forward.21} parent=11 // pred_fallthru
        _
      // Predicated region
      $region25: #{ffno3d_forward.21} parent=11 // pred_check
        %p171 = pneg %p121
      $region26: #{ffno3d_forward.21} parent=11 // pred_check_branch
        %173 = sbr.rel (%p171) target = $region28
      $region27: #{ffno3d_forward.21} parent=11 // pred_region
        _
      $region28: #{ffno3d_forward.21} parent=11 // pred_fallthru
        _
    $region12: #{ffno3d_forward.21} parent=5 // pred_fallthru
      _
    %p174 = scmp.lt.s32.totalorder %s11, 2
    // Predicated region
    $region29: #{ffno3d_forward.21} parent=5 // pred_check
      %p175 = pneg %p174
    $region30: #{ffno3d_forward.21} parent=5 // pred_check_branch
      %177 = sbr.rel (%p175) target = $region32
    $region31: #{ffno3d_forward.21} parent=5 // pred_region
      // Predicated region
      $region33: #{ffno3d_forward.21} parent=31 // pred_check
        %p178 = pneg %p31
      $region34: #{ffno3d_forward.21} parent=31 // pred_check_branch
        %180 = sbr.rel (%p178) target = $region36
      $region35: #{ffno3d_forward.21} parent=31 // pred_region
        %s181 = smul.u32 4, %s11
        %p182 = scmp.lt.s32.totalorder %s181, 7
        %s183 = scalar_select %p182, %s181, 7
        %s184 = smul.addr %s183, 4
        %s185 = scalar_lea.vmem %s0, %s184
        %s186 = smul.u32 4, %s11
      $region36: #{ffno3d_forward.21} parent=31 // pred_fallthru
        _
    $region32: #{ffno3d_forward.21} parent=5 // pred_fallthru
      _
    %p187 = scmp.le.s32.totalorder 1, %s11
    %p188 = scmp.lt.s32.totalorder %s11, 3
    %p189 = pnand %p187, %p188
    %p190 = pneg %p189
    // Predicated region
    $region37: #{ffno3d_forward.21} parent=5 // pred_check
      _
    $region38: #{ffno3d_forward.21} parent=5 // pred_check_branch
      %192 = sbr.rel (%p189) target = $region40
    $region39: #{ffno3d_forward.21} parent=5 // pred_region
      %s193 = ssub.s32 %s11, 1
      %s194 = smul.u32 4, %s16
      %p195 = scmp.lt.s32.totalorder %s194, 7
      %s196 = scalar_select %p195, %s194, 7
      %s197 = smul.addr %s196, 4
      %s198 = scalar_lea.vmem %s0, %s197
      %p199 = pneg %p37
      %p200 = pneg %p34
      %p201 = pneg %p58
      %p202 = pneg %p55
      %p203 = pneg %p79
      %p204 = pneg %p76
      %p205 = pneg %p100
      %p206 = pneg %p97
      %p207 = pneg %p121
      %p208 = pneg %p118
      %p209 = pneg %p147
      %p210 = pneg %p144
      %s211 = smul.u32 4, %s16
      %p212 = scmp.lt.s32.totalorder %s211, 7
      %s213 = scalar_select %p212, %s211, 7
      %s214 = smul.addr %s213, 4
      %s215 = scalar_lea.vmem %s5, %s214
      %s216 = smul.u32 4, %s16
      %p217 = scmp.lt.s32.totalorder %s216, 7
      %s218 = scalar_select %p217, %s216, 7
      %s219 = smul.addr %s218, 4
      %s220 = scalar_lea.vmem %s0, %s219
      %s221 = smul.u32 4, %s16
      %s222 = smul.u32 4, %s16
      %p223 = scmp.lt.s32.totalorder %s222, 7
      %s224 = scalar_select %p223, %s222, 7
      %s225 = smul.addr %s224, 4
      %s226 = scalar_lea.vmem %s5, %s225
      %s227 = smul.u32 4, %s16
      %v228 = vld [vmem:[%s220] sm:$0xff]
      %v229 = vld [vmem:[%s220 + $0x8] sm:$0xff]
      %v230 = vunpack.c.l.bf16 %v228
      %v231 = vunpack.c.h.bf16 %v228
      %v232 = vunpack.c.l.bf16 %v229
      %v233 = vunpack.c.h.bf16 %v229
      %v234 = vld [vmem:[%s1] sm:$0xff]
      %v235 = vld [vmem:[%s1 + $0x8] sm:$0xff]
      %v236 = vld [vmem:[%s1 + $0x10] sm:$0xff]
      %v237 = vld [vmem:[%s1 + $0x18] sm:$0xff]
      %v238 = vld [vmem:[%s1 + $0x20] sm:$0xff]
      %v239 = vld [vmem:[%s1 + $0x28] sm:$0xff]
      %v240 = vld [vmem:[%s1 + $0x30] sm:$0xff]
      %v241 = vld [vmem:[%s1 + $0x38] sm:$0xff]
      %v242 = vld [vmem:[%s1 + $0x40] sm:$0xff]
      %v243 = vld [vmem:[%s1 + $0x48] sm:$0xff]
      %v244 = vld [vmem:[%s1 + $0x50] sm:$0xff]
      %v245 = vld [vmem:[%s1 + $0x58] sm:$0xff]
      %v246 = vld [vmem:[%s1 + $0x60] sm:$0xff]
      %v247 = vld [vmem:[%s1 + $0x68] sm:$0xff]
      %v248 = vld [vmem:[%s1 + $0x70] sm:$0xff]
      %v249 = vld [vmem:[%s1 + $0x78] sm:$0xff]
      %v250 = vld [vmem:[%s1 + $0x80] sm:$0xff]
      %v251 = vld [vmem:[%s1 + $0x88] sm:$0xff]
      %v252 = vld [vmem:[%s1 + $0x90] sm:$0xff]
      %v253 = vld [vmem:[%s1 + $0x98] sm:$0xff]
      %v254 = vld [vmem:[%s1 + $0xa0] sm:$0xff]
      %v255 = vld [vmem:[%s1 + $0xa8] sm:$0xff]
      %v256 = vld [vmem:[%s1 + $0xb0] sm:$0xff]
      %v257 = vld [vmem:[%s1 + $0xb8] sm:$0xff]
      %v258 = vld [vmem:[%s1 + $0xc0] sm:$0xff]
      %v259 = vld [vmem:[%s1 + $0xc8] sm:$0xff]
      %v260 = vld [vmem:[%s1 + $0xd0] sm:$0xff]
      %v261 = vld [vmem:[%s1 + $0xd8] sm:$0xff]
      %v262 = vld [vmem:[%s1 + $0xe0] sm:$0xff]
      %v263 = vld [vmem:[%s1 + $0xe8] sm:$0xff]
      %v264 = vld [vmem:[%s1 + $0xf0] sm:$0xff]
      %v265 = vld [vmem:[%s1 + $0xf8] sm:$0xff]
      %v266 = vld [vmem:[%s1 + $0x100] sm:$0xff]
      %v267 = vld [vmem:[%s1 + $0x108] sm:$0xff]
      %v268 = vld [vmem:[%s1 + $0x110] sm:$0xff]
      %v269 = vld [vmem:[%s1 + $0x118] sm:$0xff]
      %v270 = vld [vmem:[%s1 + $0x120] sm:$0xff]
      %v271 = vld [vmem:[%s1 + $0x128] sm:$0xff]
      %v272 = vld [vmem:[%s1 + $0x130] sm:$0xff]
      %v273 = vld [vmem:[%s1 + $0x138] sm:$0xff]
      %v274 = vld [vmem:[%s1 + $0x140] sm:$0xff]
      %v275 = vld [vmem:[%s1 + $0x148] sm:$0xff]
      %v276 = vld [vmem:[%s1 + $0x150] sm:$0xff]
      %v277 = vld [vmem:[%s1 + $0x158] sm:$0xff]
      %v278 = vld [vmem:[%s1 + $0x160] sm:$0xff]
      %v279 = vld [vmem:[%s1 + $0x168] sm:$0xff]
      %v280 = vld [vmem:[%s1 + $0x170] sm:$0xff]
      %v281 = vld [vmem:[%s1 + $0x178] sm:$0xff]
      %v282 = vld [vmem:[%s2] sm:$0xff]
      %v283 = vld [vmem:[%s2 + $0x8] sm:$0xff]
      %v284 = vld [vmem:[%s2 + $0x10] sm:$0xff]
      %v285 = vld [vmem:[%s2 + $0x18] sm:$0xff]
      %v286 = vld [vmem:[%s2 + $0x20] sm:$0xff]
      %v287 = vld [vmem:[%s2 + $0x28] sm:$0xff]
      %v288 = vld [vmem:[%s2 + $0x30] sm:$0xff]
      %v289 = vld [vmem:[%s2 + $0x38] sm:$0xff]
      %v290 = vld [vmem:[%s2 + $0x40] sm:$0xff]
      %v291 = vld [vmem:[%s2 + $0x48] sm:$0xff]
      %v292 = vld [vmem:[%s2 + $0x50] sm:$0xff]
      %v293 = vld [vmem:[%s2 + $0x58] sm:$0xff]
      %v294 = vld [vmem:[%s2 + $0x60] sm:$0xff]
      %v295 = vld [vmem:[%s2 + $0x68] sm:$0xff]
      %v296 = vld [vmem:[%s2 + $0x70] sm:$0xff]
      %v297 = vld [vmem:[%s2 + $0x78] sm:$0xff]
      %v298 = vld [vmem:[%s2 + $0x80] sm:$0xff]
      %v299 = vld [vmem:[%s2 + $0x88] sm:$0xff]
      %v300 = vld [vmem:[%s2 + $0x90] sm:$0xff]
      %v301 = vld [vmem:[%s2 + $0x98] sm:$0xff]
      %v302 = vld [vmem:[%s2 + $0xa0] sm:$0xff]
      %v303 = vld [vmem:[%s2 + $0xa8] sm:$0xff]
      %v304 = vld [vmem:[%s2 + $0xb0] sm:$0xff]
      %v305 = vld [vmem:[%s2 + $0xb8] sm:$0xff]
      %v306 = vld [vmem:[%s2 + $0xc0] sm:$0xff]
      %v307 = vld [vmem:[%s2 + $0xc8] sm:$0xff]
      %v308 = vld [vmem:[%s2 + $0xd0] sm:$0xff]
      %v309 = vld [vmem:[%s2 + $0xd8] sm:$0xff]
      %v310 = vld [vmem:[%s2 + $0xe0] sm:$0xff]
      %v311 = vld [vmem:[%s2 + $0xe8] sm:$0xff]
      %v312 = vld [vmem:[%s2 + $0xf0] sm:$0xff]
      %v313 = vld [vmem:[%s2 + $0xf8] sm:$0xff]
      %v314 = vld [vmem:[%s2 + $0x100] sm:$0xff]
      %v315 = vld [vmem:[%s2 + $0x108] sm:$0xff]
      %v316 = vld [vmem:[%s2 + $0x110] sm:$0xff]
      %v317 = vld [vmem:[%s2 + $0x118] sm:$0xff]
      %v318 = vld [vmem:[%s2 + $0x120] sm:$0xff]
      %v319 = vld [vmem:[%s2 + $0x128] sm:$0xff]
      %v320 = vld [vmem:[%s2 + $0x130] sm:$0xff]
      %v321 = vld [vmem:[%s2 + $0x138] sm:$0xff]
      %v322 = vld [vmem:[%s2 + $0x140] sm:$0xff]
      %v323 = vld [vmem:[%s2 + $0x148] sm:$0xff]
      %v324 = vld [vmem:[%s2 + $0x150] sm:$0xff]
      %v325 = vld [vmem:[%s2 + $0x158] sm:$0xff]
      %v326 = vld [vmem:[%s2 + $0x160] sm:$0xff]
      %v327 = vld [vmem:[%s2 + $0x168] sm:$0xff]
      %v328 = vld [vmem:[%s2 + $0x170] sm:$0xff]
      %v329 = vld [vmem:[%s2 + $0x178] sm:$0xff]
      %331 = vset.pattern.permute.xlu0 0
      %332 = vperm.xlu0 %331, %v282
      %v333 = vpop.permute.xlu0 %332
      %336 = vset.pattern.permute.xlu0 0
      %337 = vperm.xlu0 %336, %v283
      %v338 = vpop.permute.xlu0 %337
      %341 = vset.pattern.permute.xlu0 0
      %342 = vperm.xlu0 %341, %v284
      %v343 = vpop.permute.xlu0 %342
      %346 = vset.pattern.permute.xlu0 0
      %347 = vperm.xlu0 %346, %v285
      %v348 = vpop.permute.xlu0 %347
      %351 = vset.pattern.permute.xlu0 0
      %352 = vperm.xlu0 %351, %v286
      %v353 = vpop.permute.xlu0 %352
      %356 = vset.pattern.permute.xlu0 0
      %357 = vperm.xlu0 %356, %v287
      %v358 = vpop.permute.xlu0 %357
      %361 = vset.pattern.permute.xlu0 0
      %362 = vperm.xlu0 %361, %v288
      %v363 = vpop.permute.xlu0 %362
      %366 = vset.pattern.permute.xlu0 0
      %367 = vperm.xlu0 %366, %v289
      %v368 = vpop.permute.xlu0 %367
      %371 = vset.pattern.permute.xlu0 0
      %372 = vperm.xlu0 %371, %v290
      %v373 = vpop.permute.xlu0 %372
      %376 = vset.pattern.permute.xlu0 0
      %377 = vperm.xlu0 %376, %v291
      %v378 = vpop.permute.xlu0 %377
      %381 = vset.pattern.permute.xlu0 0
      %382 = vperm.xlu0 %381, %v292
      %v383 = vpop.permute.xlu0 %382
      %386 = vset.pattern.permute.xlu0 0
      %387 = vperm.xlu0 %386, %v293
      %v388 = vpop.permute.xlu0 %387
      %391 = vset.pattern.permute.xlu0 0
      %392 = vperm.xlu0 %391, %v294
      %v393 = vpop.permute.xlu0 %392
      %396 = vset.pattern.permute.xlu0 0
      %397 = vperm.xlu0 %396, %v295
      %v398 = vpop.permute.xlu0 %397
      %401 = vset.pattern.permute.xlu0 0
      %402 = vperm.xlu0 %401, %v296
      %v403 = vpop.permute.xlu0 %402
      %406 = vset.pattern.permute.xlu0 0
      %407 = vperm.xlu0 %406, %v297
      %v408 = vpop.permute.xlu0 %407
      %411 = vset.pattern.permute.xlu0 0
      %412 = vperm.xlu0 %411, %v298
      %v413 = vpop.permute.xlu0 %412
      %416 = vset.pattern.permute.xlu0 0
      %417 = vperm.xlu0 %416, %v299
      %v418 = vpop.permute.xlu0 %417
      %421 = vset.pattern.permute.xlu0 0
      %422 = vperm.xlu0 %421, %v300
      %v423 = vpop.permute.xlu0 %422
      %426 = vset.pattern.permute.xlu0 0
      %427 = vperm.xlu0 %426, %v301
      %v428 = vpop.permute.xlu0 %427
      %431 = vset.pattern.permute.xlu0 0
      %432 = vperm.xlu0 %431, %v302
      %v433 = vpop.permute.xlu0 %432
      %436 = vset.pattern.permute.xlu0 0
      %437 = vperm.xlu0 %436, %v303
      %v438 = vpop.permute.xlu0 %437
      %441 = vset.pattern.permute.xlu0 0
      %442 = vperm.xlu0 %441, %v304
      %v443 = vpop.permute.xlu0 %442
      %446 = vset.pattern.permute.xlu0 0
      %447 = vperm.xlu0 %446, %v305
      %v448 = vpop.permute.xlu0 %447
      %451 = vset.pattern.permute.xlu0 0
      %452 = vperm.xlu0 %451, %v306
      %v453 = vpop.permute.xlu0 %452
      %456 = vset.pattern.permute.xlu0 0
      %457 = vperm.xlu0 %456, %v307
      %v458 = vpop.permute.xlu0 %457
      %461 = vset.pattern.permute.xlu0 0
      %462 = vperm.xlu0 %461, %v308
      %v463 = vpop.permute.xlu0 %462
      %466 = vset.pattern.permute.xlu0 0
      %467 = vperm.xlu0 %466, %v309
      %v468 = vpop.permute.xlu0 %467
      %471 = vset.pattern.permute.xlu0 0
      %472 = vperm.xlu0 %471, %v310
      %v473 = vpop.permute.xlu0 %472
      %476 = vset.pattern.permute.xlu0 0
      %477 = vperm.xlu0 %476, %v311
      %v478 = vpop.permute.xlu0 %477
      %481 = vset.pattern.permute.xlu0 0
      %482 = vperm.xlu0 %481, %v312
      %v483 = vpop.permute.xlu0 %482
      %486 = vset.pattern.permute.xlu0 0
      %487 = vperm.xlu0 %486, %v313
      %v488 = vpop.permute.xlu0 %487
      %491 = vset.pattern.permute.xlu0 0
      %492 = vperm.xlu0 %491, %v314
      %v493 = vpop.permute.xlu0 %492
      %496 = vset.pattern.permute.xlu0 0
      %497 = vperm.xlu0 %496, %v315
      %v498 = vpop.permute.xlu0 %497
      %501 = vset.pattern.permute.xlu0 0
      %502 = vperm.xlu0 %501, %v316
      %v503 = vpop.permute.xlu0 %502
      %506 = vset.pattern.permute.xlu0 0
      %507 = vperm.xlu0 %506, %v317
      %v508 = vpop.permute.xlu0 %507
      %511 = vset.pattern.permute.xlu0 0
      %512 = vperm.xlu0 %511, %v318
      %v513 = vpop.permute.xlu0 %512
      %516 = vset.pattern.permute.xlu0 0
      %517 = vperm.xlu0 %516, %v319
      %v518 = vpop.permute.xlu0 %517
      %521 = vset.pattern.permute.xlu0 0
      %522 = vperm.xlu0 %521, %v320
      %v523 = vpop.permute.xlu0 %522
      %526 = vset.pattern.permute.xlu0 0
      %527 = vperm.xlu0 %526, %v321
      %v528 = vpop.permute.xlu0 %527
      %531 = vset.pattern.permute.xlu0 0
      %532 = vperm.xlu0 %531, %v322
      %v533 = vpop.permute.xlu0 %532
      %536 = vset.pattern.permute.xlu0 0
      %537 = vperm.xlu0 %536, %v323
      %v538 = vpop.permute.xlu0 %537
      %541 = vset.pattern.permute.xlu0 0
      %542 = vperm.xlu0 %541, %v324
      %v543 = vpop.permute.xlu0 %542
      %546 = vset.pattern.permute.xlu0 0
      %547 = vperm.xlu0 %546, %v325
      %v548 = vpop.permute.xlu0 %547
      %551 = vset.pattern.permute.xlu0 0
      %552 = vperm.xlu0 %551, %v326
      %v553 = vpop.permute.xlu0 %552
      %556 = vset.pattern.permute.xlu0 0
      %557 = vperm.xlu0 %556, %v327
      %v558 = vpop.permute.xlu0 %557
      %561 = vset.pattern.permute.xlu0 0
      %562 = vperm.xlu0 %561, %v328
      %v563 = vpop.permute.xlu0 %562
      %566 = vset.pattern.permute.xlu0 0
      %567 = vperm.xlu0 %566, %v329
      %v568 = vpop.permute.xlu0 %567
      %vm570 = vcmask 64512
      %v572 = vsel %vm570, %v234, 0
      %v575 = vsel %vm570, %v235, 0
      %v578 = vsel %vm570, %v236, 0
      %v581 = vsel %vm570, %v237, 0
      %v584 = vsel %vm570, %v238, 0
      %v587 = vsel %vm570, %v239, 0
      %v590 = vsel %vm570, %v240, 0
      %v593 = vsel %vm570, %v241, 0
      %v596 = vsel %vm570, %v242, 0
      %v599 = vsel %vm570, %v243, 0
      %v602 = vsel %vm570, %v244, 0
      %v605 = vsel %vm570, %v245, 0
      %v608 = vsel %vm570, %v246, 0
      %v611 = vsel %vm570, %v247, 0
      %v614 = vsel %vm570, %v248, 0
      %v617 = vsel %vm570, %v249, 0
      %v620 = vsel %vm570, %v250, 0
      %v623 = vsel %vm570, %v251, 0
      %v626 = vsel %vm570, %v252, 0
      %v629 = vsel %vm570, %v253, 0
      %v632 = vsel %vm570, %v254, 0
      %v635 = vsel %vm570, %v255, 0
      %v638 = vsel %vm570, %v256, 0
      %v641 = vsel %vm570, %v257, 0
      %v644 = vsel %vm570, %v258, 0
      %v647 = vsel %vm570, %v259, 0
      %v650 = vsel %vm570, %v260, 0
      %v653 = vsel %vm570, %v261, 0
      %v656 = vsel %vm570, %v262, 0
      %v659 = vsel %vm570, %v263, 0
      %v662 = vsel %vm570, %v264, 0
      %v665 = vsel %vm570, %v265, 0
      %v668 = vsel %vm570, %v266, 0
      %v671 = vsel %vm570, %v267, 0
      %v674 = vsel %vm570, %v268, 0
      %v677 = vsel %vm570, %v269, 0
      %v680 = vsel %vm570, %v270, 0
      %v683 = vsel %vm570, %v271, 0
      %v686 = vsel %vm570, %v272, 0
      %v689 = vsel %vm570, %v273, 0
      %v692 = vsel %vm570, %v274, 0
      %v695 = vsel %vm570, %v275, 0
      %v698 = vsel %vm570, %v276, 0
      %v701 = vsel %vm570, %v277, 0
      %v704 = vsel %vm570, %v278, 0
      %v707 = vsel %vm570, %v279, 0
      %v710 = vsel %vm570, %v280, 0
      %v713 = vsel %vm570, %v281, 0
      %715 = vmatpush.msra.mxu0 0.0
      %716 = vmatpush.msra.mxu0 0.0
      %717 = vmatpush.msra.mxu0 0.0
      %718 = vmatpush.msra.mxu0 0.0
      %719 = vmatpush.msra.mxu0 0.0
      %720 = vmatpush.msra.mxu0 0.0
      %721 = vmatpush.msra.mxu0 0.0
      %722 = vmatpush.msra.mxu0 0.0
      %723 = vmatpush.msra.mxu0 0.0
      %724 = vmatpush.msra.mxu0 0.0
      %725 = vmatpush.msra.mxu0 0.0
      %726 = vmatpush.msra.mxu0 0.0
      %727 = vmatpush.msra.mxu0 0.0
      %728 = vmatpush.msra.mxu0 0.0
      %729 = vmatpush.msra.mxu0 0.0
      %730 = vmatpush.msra.mxu0 %v230
      %731 = vmatmul.f32.gmra.mxu0 %v572
      %v732 = vpop.f32.mrf.mxu0
      %v733 = vadd.f32 %v333, %v732
      %734 = vmatmul.f32.gmra.mxu0 %v575
      %v735 = vpop.f32.mrf.mxu0
      %v736 = vadd.f32 %v338, %v735
      %737 = vmatmul.f32.gmra.mxu0 %v578
      %v738 = vpop.f32.mrf.mxu0
      %v739 = vadd.f32 %v343, %v738
      %740 = vmatmul.f32.gmra.mxu0 %v581
      %v741 = vpop.f32.mrf.mxu0
      %v742 = vadd.f32 %v348, %v741
      %743 = vmatmul.f32.gmra.mxu0 %v584
      %v744 = vpop.f32.mrf.mxu0
      %v745 = vadd.f32 %v353, %v744
      %746 = vmatmul.f32.gmra.mxu0 %v587
      %v747 = vpop.f32.mrf.mxu0
      %v748 = vadd.f32 %v358, %v747
      %749 = vmatmul.f32.gmra.mxu0 %v590
      %v750 = vpop.f32.mrf.mxu0
      %v751 = vadd.f32 %v363, %v750
      %752 = vmatmul.f32.gmra.mxu0 %v593
      %v753 = vpop.f32.mrf.mxu0
      %v754 = vadd.f32 %v368, %v753
      %755 = vmatmul.f32.gmra.mxu0 %v596
      %v756 = vpop.f32.mrf.mxu0
      %v757 = vadd.f32 %v373, %v756
      %758 = vmatmul.f32.gmra.mxu0 %v599
      %v759 = vpop.f32.mrf.mxu0
      %v760 = vadd.f32 %v378, %v759
      %761 = vmatmul.f32.gmra.mxu0 %v602
      %v762 = vpop.f32.mrf.mxu0
      %v763 = vadd.f32 %v383, %v762
      %764 = vmatmul.f32.gmra.mxu0 %v605
      %v765 = vpop.f32.mrf.mxu0
      %v766 = vadd.f32 %v388, %v765
      %767 = vmatmul.f32.gmra.mxu0 %v608
      %v768 = vpop.f32.mrf.mxu0
      %v769 = vadd.f32 %v393, %v768
      %770 = vmatmul.f32.gmra.mxu0 %v611
      %v771 = vpop.f32.mrf.mxu0
      %v772 = vadd.f32 %v398, %v771
      %773 = vmatmul.f32.gmra.mxu0 %v614
      %v774 = vpop.f32.mrf.mxu0
      %v775 = vadd.f32 %v403, %v774
      %776 = vmatmul.f32.gmra.mxu0 %v617
      %v777 = vpop.f32.mrf.mxu0
      %v778 = vadd.f32 %v408, %v777
      %779 = vmatmul.f32.gmra.mxu0 %v620
      %v780 = vpop.f32.mrf.mxu0
      %v781 = vadd.f32 %v413, %v780
      %782 = vmatmul.f32.gmra.mxu0 %v623
      %v783 = vpop.f32.mrf.mxu0
      %v784 = vadd.f32 %v418, %v783
      %785 = vmatmul.f32.gmra.mxu0 %v626
      %v786 = vpop.f32.mrf.mxu0
      %v787 = vadd.f32 %v423, %v786
      %788 = vmatmul.f32.gmra.mxu0 %v629
      %v789 = vpop.f32.mrf.mxu0
      %v790 = vadd.f32 %v428, %v789
      %791 = vmatmul.f32.gmra.mxu0 %v632
      %v792 = vpop.f32.mrf.mxu0
      %v793 = vadd.f32 %v433, %v792
      %794 = vmatmul.f32.gmra.mxu0 %v635
      %v795 = vpop.f32.mrf.mxu0
      %v796 = vadd.f32 %v438, %v795
      %797 = vmatmul.f32.gmra.mxu0 %v638
      %v798 = vpop.f32.mrf.mxu0
      %v799 = vadd.f32 %v443, %v798
      %800 = vmatmul.f32.gmra.mxu0 %v641
      %v801 = vpop.f32.mrf.mxu0
      %v802 = vadd.f32 %v448, %v801
      %803 = vmatmul.f32.gmra.mxu0 %v644
      %v804 = vpop.f32.mrf.mxu0
      %v805 = vadd.f32 %v453, %v804
      %806 = vmatmul.f32.gmra.mxu0 %v647
      %v807 = vpop.f32.mrf.mxu0
      %v808 = vadd.f32 %v458, %v807
      %809 = vmatmul.f32.gmra.mxu0 %v650
      %v810 = vpop.f32.mrf.mxu0
      %v811 = vadd.f32 %v463, %v810
      %812 = vmatmul.f32.gmra.mxu0 %v653
      %v813 = vpop.f32.mrf.mxu0
      %v814 = vadd.f32 %v468, %v813
      %815 = vmatmul.f32.gmra.mxu0 %v656
      %v816 = vpop.f32.mrf.mxu0
      %v817 = vadd.f32 %v473, %v816
      %818 = vmatmul.f32.gmra.mxu0 %v659
      %v819 = vpop.f32.mrf.mxu0
      %v820 = vadd.f32 %v478, %v819
      %821 = vmatmul.f32.gmra.mxu0 %v662
      %v822 = vpop.f32.mrf.mxu0
      %v823 = vadd.f32 %v483, %v822
      %824 = vmatmul.f32.gmra.mxu0 %v665
      %v825 = vpop.f32.mrf.mxu0
      %v826 = vadd.f32 %v488, %v825
      %827 = vmatmul.f32.gmra.mxu0 %v668
      %v828 = vpop.f32.mrf.mxu0
      %v829 = vadd.f32 %v493, %v828
      %830 = vmatmul.f32.gmra.mxu0 %v671
      %v831 = vpop.f32.mrf.mxu0
      %v832 = vadd.f32 %v498, %v831
      %833 = vmatmul.f32.gmra.mxu0 %v674
      %v834 = vpop.f32.mrf.mxu0
      %v835 = vadd.f32 %v503, %v834
      %836 = vmatmul.f32.gmra.mxu0 %v677
      %v837 = vpop.f32.mrf.mxu0
      %v838 = vadd.f32 %v508, %v837
      %839 = vmatmul.f32.gmra.mxu0 %v680
      %v840 = vpop.f32.mrf.mxu0
      %v841 = vadd.f32 %v513, %v840
      %842 = vmatmul.f32.gmra.mxu0 %v683
      %v843 = vpop.f32.mrf.mxu0
      %v844 = vadd.f32 %v518, %v843
      %845 = vmatmul.f32.gmra.mxu0 %v686
      %v846 = vpop.f32.mrf.mxu0
      %v847 = vadd.f32 %v523, %v846
      %848 = vmatmul.f32.gmra.mxu0 %v689
      %v849 = vpop.f32.mrf.mxu0
      %v850 = vadd.f32 %v528, %v849
      %851 = vmatmul.f32.gmra.mxu0 %v692
      %v852 = vpop.f32.mrf.mxu0
      %v853 = vadd.f32 %v533, %v852
      %854 = vmatmul.f32.gmra.mxu0 %v695
      %v855 = vpop.f32.mrf.mxu0
      %v856 = vadd.f32 %v538, %v855
      %857 = vmatmul.f32.gmra.mxu0 %v698
      %v858 = vpop.f32.mrf.mxu0
      %v859 = vadd.f32 %v543, %v858
      %860 = vmatmul.f32.gmra.mxu0 %v701
      %v861 = vpop.f32.mrf.mxu0
      %v862 = vadd.f32 %v548, %v861
      %863 = vmatmul.f32.gmra.mxu0 %v704
      %v864 = vpop.f32.mrf.mxu0
      %v865 = vadd.f32 %v553, %v864
      %866 = vmatmul.f32.gmra.mxu0 %v707
      %v867 = vpop.f32.mrf.mxu0
      %v868 = vadd.f32 %v558, %v867
      %869 = vmatmul.f32.gmra.mxu0 %v710
      %v870 = vpop.f32.mrf.mxu0
      %v871 = vadd.f32 %v563, %v870
      %872 = vmatmul.f32.gmra.mxu0 %v713
      %v873 = vpop.f32.mrf.mxu0
      %v874 = vadd.f32 %v568, %v873
      %875 = vdwg.mxu0
      %876 = vmatpush.msra.mxu0 0.0
      %877 = vmatpush.msra.mxu0 0.0
      %878 = vmatpush.msra.mxu0 0.0
      %879 = vmatpush.msra.mxu0 0.0
      %880 = vmatpush.msra.mxu0 0.0
      %881 = vmatpush.msra.mxu0 0.0
      %882 = vmatpush.msra.mxu0 0.0
      %883 = vmatpush.msra.mxu0 0.0
      %884 = vmatpush.msra.mxu0 0.0
      %885 = vmatpush.msra.mxu0 0.0
      %886 = vmatpush.msra.mxu0 0.0
      %887 = vmatpush.msra.mxu0 0.0
      %888 = vmatpush.msra.mxu0 0.0
      %889 = vmatpush.msra.mxu0 0.0
      %890 = vmatpush.msra.mxu0 0.0
      %891 = vmatpush.msra.mxu0 %v231
      %892 = vmatmul.f32.gmra.mxu0 %v572
      %v893 = vpop.f32.mrf.mxu0
      %v894 = vadd.f32 %v333, %v893
      %895 = vmatmul.f32.gmra.mxu0 %v575
      %v896 = vpop.f32.mrf.mxu0
      %v897 = vadd.f32 %v338, %v896
      %898 = vmatmul.f32.gmra.mxu0 %v578
      %v899 = vpop.f32.mrf.mxu0
      %v900 = vadd.f32 %v343, %v899
      %901 = vmatmul.f32.gmra.mxu0 %v581
      %v902 = vpop.f32.mrf.mxu0
      %v903 = vadd.f32 %v348, %v902
      %904 = vmatmul.f32.gmra.mxu0 %v584
      %v905 = vpop.f32.mrf.mxu0
      %v906 = vadd.f32 %v353, %v905
      %907 = vmatmul.f32.gmra.mxu0 %v587
      %v908 = vpop.f32.mrf.mxu0
      %v909 = vadd.f32 %v358, %v908
      %910 = vmatmul.f32.gmra.mxu0 %v590
      %v911 = vpop.f32.mrf.mxu0
      %v912 = vadd.f32 %v363, %v911
      %913 = vmatmul.f32.gmra.mxu0 %v593
      %v914 = vpop.f32.mrf.mxu0
      %v915 = vadd.f32 %v368, %v914
      %916 = vmatmul.f32.gmra.mxu0 %v596
      %v917 = vpop.f32.mrf.mxu0
      %v918 = vadd.f32 %v373, %v917
      %919 = vmatmul.f32.gmra.mxu0 %v599
      %v920 = vpop.f32.mrf.mxu0
      %v921 = vadd.f32 %v378, %v920
      %922 = vmatmul.f32.gmra.mxu0 %v602
      %v923 = vpop.f32.mrf.mxu0
      %v924 = vadd.f32 %v383, %v923
      %925 = vmatmul.f32.gmra.mxu0 %v605
      %v926 = vpop.f32.mrf.mxu0
      %v927 = vadd.f32 %v388, %v926
      %928 = vmatmul.f32.gmra.mxu0 %v608
      %v929 = vpop.f32.mrf.mxu0
      %v930 = vadd.f32 %v393, %v929
      %931 = vmatmul.f32.gmra.mxu0 %v611
      %v932 = vpop.f32.mrf.mxu0
      %v933 = vadd.f32 %v398, %v932
      %934 = vmatmul.f32.gmra.mxu0 %v614
      %v935 = vpop.f32.mrf.mxu0
      %v936 = vadd.f32 %v403, %v935
      %937 = vmatmul.f32.gmra.mxu0 %v617
      %v938 = vpop.f32.mrf.mxu0
      %v939 = vadd.f32 %v408, %v938
      %940 = vmatmul.f32.gmra.mxu0 %v620
      %v941 = vpop.f32.mrf.mxu0
      %v942 = vadd.f32 %v413, %v941
      %943 = vmatmul.f32.gmra.mxu0 %v623
      %v944 = vpop.f32.mrf.mxu0
      %v945 = vadd.f32 %v418, %v944
      %946 = vmatmul.f32.gmra.mxu0 %v626
      %v947 = vpop.f32.mrf.mxu0
      %v948 = vadd.f32 %v423, %v947
      %949 = vmatmul.f32.gmra.mxu0 %v629
      %v950 = vpop.f32.mrf.mxu0
      %v951 = vadd.f32 %v428, %v950
      %952 = vmatmul.f32.gmra.mxu0 %v632
      %v953 = vpop.f32.mrf.mxu0
      %v954 = vadd.f32 %v433, %v953
      %955 = vmatmul.f32.gmra.mxu0 %v635
      %v956 = vpop.f32.mrf.mxu0
      %v957 = vadd.f32 %v438, %v956
      %958 = vmatmul.f32.gmra.mxu0 %v638
      %v959 = vpop.f32.mrf.mxu0
      %v960 = vadd.f32 %v443, %v959
      %961 = vmatmul.f32.gmra.mxu0 %v641
      %v962 = vpop.f32.mrf.mxu0
      %v963 = vadd.f32 %v448, %v962
      %964 = vmatmul.f32.gmra.mxu0 %v644
      %v965 = vpop.f32.mrf.mxu0
      %v966 = vadd.f32 %v453, %v965
      %967 = vmatmul.f32.gmra.mxu0 %v647
      %v968 = vpop.f32.mrf.mxu0
      %v969 = vadd.f32 %v458, %v968
      %970 = vmatmul.f32.gmra.mxu0 %v650
      %v971 = vpop.f32.mrf.mxu0
      %v972 = vadd.f32 %v463, %v971
      %973 = vmatmul.f32.gmra.mxu0 %v653
      %v974 = vpop.f32.mrf.mxu0
      %v975 = vadd.f32 %v468, %v974
      %976 = vmatmul.f32.gmra.mxu0 %v656
      %v977 = vpop.f32.mrf.mxu0
      %v978 = vadd.f32 %v473, %v977
      %979 = vmatmul.f32.gmra.mxu0 %v659
      %v980 = vpop.f32.mrf.mxu0
      %v981 = vadd.f32 %v478, %v980
      %982 = vmatmul.f32.gmra.mxu0 %v662
      %v983 = vpop.f32.mrf.mxu0
      %v984 = vadd.f32 %v483, %v983
      %985 = vmatmul.f32.gmra.mxu0 %v665
      %v986 = vpop.f32.mrf.mxu0
      %v987 = vadd.f32 %v488, %v986
      %988 = vmatmul.f32.gmra.mxu0 %v668
      %v989 = vpop.f32.mrf.mxu0
      %v990 = vadd.f32 %v493, %v989
      %991 = vmatmul.f32.gmra.mxu0 %v671
      %v992 = vpop.f32.mrf.mxu0
      %v993 = vadd.f32 %v498, %v992
      %994 = vmatmul.f32.gmra.mxu0 %v674
      %v995 = vpop.f32.mrf.mxu0
      %v996 = vadd.f32 %v503, %v995
      %997 = vmatmul.f32.gmra.mxu0 %v677
      %v998 = vpop.f32.mrf.mxu0
      %v999 = vadd.f32 %v508, %v998
      %1000 = vmatmul.f32.gmra.mxu0 %v680
      %v1001 = vpop.f32.mrf.mxu0
      %v1002 = vadd.f32 %v513, %v1001
      %1003 = vmatmul.f32.gmra.mxu0 %v683
      %v1004 = vpop.f32.mrf.mxu0
      %v1005 = vadd.f32 %v518, %v1004
      %1006 = vmatmul.f32.gmra.mxu0 %v686
      %v1007 = vpop.f32.mrf.mxu0
      %v1008 = vadd.f32 %v523, %v1007
      %1009 = vmatmul.f32.gmra.mxu0 %v689
      %v1010 = vpop.f32.mrf.mxu0
      %v1011 = vadd.f32 %v528, %v1010
      %1012 = vmatmul.f32.gmra.mxu0 %v692
      %v1013 = vpop.f32.mrf.mxu0
      %v1014 = vadd.f32 %v533, %v1013
      %1015 = vmatmul.f32.gmra.mxu0 %v695
      %v1016 = vpop.f32.mrf.mxu0
      %v1017 = vadd.f32 %v538, %v1016
      %1018 = vmatmul.f32.gmra.mxu0 %v698
      %v1019 = vpop.f32.mrf.mxu0
      %v1020 = vadd.f32 %v543, %v1019
      %1021 = vmatmul.f32.gmra.mxu0 %v701
      %v1022 = vpop.f32.mrf.mxu0
      %v1023 = vadd.f32 %v548, %v1022
      %1024 = vmatmul.f32.gmra.mxu0 %v704
      %v1025 = vpop.f32.mrf.mxu0
      %v1026 = vadd.f32 %v553, %v1025
      %1027 = vmatmul.f32.gmra.mxu0 %v707
      %v1028 = vpop.f32.mrf.mxu0
      %v1029 = vadd.f32 %v558, %v1028
      %1030 = vmatmul.f32.gmra.mxu0 %v710
      %v1031 = vpop.f32.mrf.mxu0
      %v1032 = vadd.f32 %v563, %v1031
      %1033 = vmatmul.f32.gmra.mxu0 %v713
      %v1034 = vpop.f32.mrf.mxu0
      %v1035 = vadd.f32 %v568, %v1034
      %1036 = vdwg.mxu0
      %1037 = vmatpush.msra.mxu0 0.0
      %1038 = vmatpush.msra.mxu0 0.0
      %1039 = vmatpush.msra.mxu0 0.0
      %1040 = vmatpush.msra.mxu0 0.0
      %1041 = vmatpush.msra.mxu0 0.0
      %1042 = vmatpush.msra.mxu0 0.0
      %1043 = vmatpush.msra.mxu0 0.0
      %1044 = vmatpush.msra.mxu0 0.0
      %1045 = vmatpush.msra.mxu0 0.0
      %1046 = vmatpush.msra.mxu0 0.0
      %1047 = vmatpush.msra.mxu0 0.0
      %1048 = vmatpush.msra.mxu0 0.0
      %1049 = vmatpush.msra.mxu0 0.0
      %1050 = vmatpush.msra.mxu0 0.0
      %1051 = vmatpush.msra.mxu0 0.0
      %1052 = vmatpush.msra.mxu0 %v232
      %1053 = vmatmul.f32.gmra.mxu0 %v572
      %v1054 = vpop.f32.mrf.mxu0
      %v1055 = vadd.f32 %v333, %v1054
      %1056 = vmatmul.f32.gmra.mxu0 %v575
      %v1057 = vpop.f32.mrf.mxu0
      %v1058 = vadd.f32 %v338, %v1057
      %1059 = vmatmul.f32.gmra.mxu0 %v578
      %v1060 = vpop.f32.mrf.mxu0
      %v1061 = vadd.f32 %v343, %v1060
      %1062 = vmatmul.f32.gmra.mxu0 %v581
      %v1063 = vpop.f32.mrf.mxu0
      %v1064 = vadd.f32 %v348, %v1063
      %1065 = vmatmul.f32.gmra.mxu0 %v584
      %v1066 = vpop.f32.mrf.mxu0
      %v1067 = vadd.f32 %v353, %v1066
      %1068 = vmatmul.f32.gmra.mxu0 %v587
      %v1069 = vpop.f32.mrf.mxu0
      %v1070 = vadd.f32 %v358, %v1069
      %1071 = vmatmul.f32.gmra.mxu0 %v590
      %v1072 = vpop.f32.mrf.mxu0
      %v1073 = vadd.f32 %v363, %v1072
      %1074 = vmatmul.f32.gmra.mxu0 %v593
      %v1075 = vpop.f32.mrf.mxu0
      %v1076 = vadd.f32 %v368, %v1075
      %1077 = vmatmul.f32.gmra.mxu0 %v596
      %v1078 = vpop.f32.mrf.mxu0
      %v1079 = vadd.f32 %v373, %v1078
      %1080 = vmatmul.f32.gmra.mxu0 %v599
      %v1081 = vpop.f32.mrf.mxu0
      %v1082 = vadd.f32 %v378, %v1081
      %1083 = vmatmul.f32.gmra.mxu0 %v602
      %v1084 = vpop.f32.mrf.mxu0
      %v1085 = vadd.f32 %v383, %v1084
      %1086 = vmatmul.f32.gmra.mxu0 %v605
      %v1087 = vpop.f32.mrf.mxu0
      %v1088 = vadd.f32 %v388, %v1087
      %1089 = vmatmul.f32.gmra.mxu0 %v608
      %v1090 = vpop.f32.mrf.mxu0
      %v1091 = vadd.f32 %v393, %v1090
      %1092 = vmatmul.f32.gmra.mxu0 %v611
      %v1093 = vpop.f32.mrf.mxu0
      %v1094 = vadd.f32 %v398, %v1093
      %1095 = vmatmul.f32.gmra.mxu0 %v614
      %v1096 = vpop.f32.mrf.mxu0
      %v1097 = vadd.f32 %v403, %v1096
      %1098 = vmatmul.f32.gmra.mxu0 %v617
      %v1099 = vpop.f32.mrf.mxu0
      %v1100 = vadd.f32 %v408, %v1099
      %1101 = vmatmul.f32.gmra.mxu0 %v620
      %v1102 = vpop.f32.mrf.mxu0
      %v1103 = vadd.f32 %v413, %v1102
      %1104 = vmatmul.f32.gmra.mxu0 %v623
      %v1105 = vpop.f32.mrf.mxu0
      %v1106 = vadd.f32 %v418, %v1105
      %1107 = vmatmul.f32.gmra.mxu0 %v626
      %v1108 = vpop.f32.mrf.mxu0
      %v1109 = vadd.f32 %v423, %v1108
      %1110 = vmatmul.f32.gmra.mxu0 %v629
      %v1111 = vpop.f32.mrf.mxu0
      %v1112 = vadd.f32 %v428, %v1111
      %1113 = vmatmul.f32.gmra.mxu0 %v632
      %v1114 = vpop.f32.mrf.mxu0
      %v1115 = vadd.f32 %v433, %v1114
      %1116 = vmatmul.f32.gmra.mxu0 %v635
      %v1117 = vpop.f32.mrf.mxu0
      %v1118 = vadd.f32 %v438, %v1117
      %1119 = vmatmul.f32.gmra.mxu0 %v638
      %v1120 = vpop.f32.mrf.mxu0
      %v1121 = vadd.f32 %v443, %v1120
      %1122 = vmatmul.f32.gmra.mxu0 %v641
      %v1123 = vpop.f32.mrf.mxu0
      %v1124 = vadd.f32 %v448, %v1123
      %1125 = vmatmul.f32.gmra.mxu0 %v644
      %v1126 = vpop.f32.mrf.mxu0
      %v1127 = vadd.f32 %v453, %v1126
      %1128 = vmatmul.f32.gmra.mxu0 %v647
      %v1129 = vpop.f32.mrf.mxu0
      %v1130 = vadd.f32 %v458, %v1129
      %1131 = vmatmul.f32.gmra.mxu0 %v650
      %v1132 = vpop.f32.mrf.mxu0
      %v1133 = vadd.f32 %v463, %v1132
      %1134 = vmatmul.f32.gmra.mxu0 %v653
      %v1135 = vpop.f32.mrf.mxu0
      %v1136 = vadd.f32 %v468, %v1135
      %1137 = vmatmul.f32.gmra.mxu0 %v656
      %v1138 = vpop.f32.mrf.mxu0
      %v1139 = vadd.f32 %v473, %v1138
      %1140 = vmatmul.f32.gmra.mxu0 %v659
      %v1141 = vpop.f32.mrf.mxu0
      %v1142 = vadd.f32 %v478, %v1141
      %1143 = vmatmul.f32.gmra.mxu0 %v662
      %v1144 = vpop.f32.mrf.mxu0
      %v1145 = vadd.f32 %v483, %v1144
      %1146 = vmatmul.f32.gmra.mxu0 %v665
      %v1147 = vpop.f32.mrf.mxu0
      %v1148 = vadd.f32 %v488, %v1147
      %1149 = vmatmul.f32.gmra.mxu0 %v668
      %v1150 = vpop.f32.mrf.mxu0
      %v1151 = vadd.f32 %v493, %v1150
      %1152 = vmatmul.f32.gmra.mxu0 %v671
      %v1153 = vpop.f32.mrf.mxu0
      %v1154 = vadd.f32 %v498, %v1153
      %1155 = vmatmul.f32.gmra.mxu0 %v674
      %v1156 = vpop.f32.mrf.mxu0
      %v1157 = vadd.f32 %v503, %v1156
      %1158 = vmatmul.f32.gmra.mxu0 %v677
      %v1159 = vpop.f32.mrf.mxu0
      %v1160 = vadd.f32 %v508, %v1159
      %1161 = vmatmul.f32.gmra.mxu0 %v680
      %v1162 = vpop.f32.mrf.mxu0
      %v1163 = vadd.f32 %v513, %v1162
      %1164 = vmatmul.f32.gmra.mxu0 %v683
      %v1165 = vpop.f32.mrf.mxu0
      %v1166 = vadd.f32 %v518, %v1165
      %1167 = vmatmul.f32.gmra.mxu0 %v686
      %v1168 = vpop.f32.mrf.mxu0
      %v1169 = vadd.f32 %v523, %v1168
      %1170 = vmatmul.f32.gmra.mxu0 %v689
      %v1171 = vpop.f32.mrf.mxu0
      %v1172 = vadd.f32 %v528, %v1171
      %1173 = vmatmul.f32.gmra.mxu0 %v692
      %v1174 = vpop.f32.mrf.mxu0
      %v1175 = vadd.f32 %v533, %v1174
      %1176 = vmatmul.f32.gmra.mxu0 %v695
      %v1177 = vpop.f32.mrf.mxu0
      %v1178 = vadd.f32 %v538, %v1177
      %1179 = vmatmul.f32.gmra.mxu0 %v698
      %v1180 = vpop.f32.mrf.mxu0
      %v1181 = vadd.f32 %v543, %v1180
      %1182 = vmatmul.f32.gmra.mxu0 %v701
      %v1183 = vpop.f32.mrf.mxu0
      %v1184 = vadd.f32 %v548, %v1183
      %1185 = vmatmul.f32.gmra.mxu0 %v704
      %v1186 = vpop.f32.mrf.mxu0
      %v1187 = vadd.f32 %v553, %v1186
      %1188 = vmatmul.f32.gmra.mxu0 %v707
      %v1189 = vpop.f32.mrf.mxu0
      %v1190 = vadd.f32 %v558, %v1189
      %1191 = vmatmul.f32.gmra.mxu0 %v710
      %v1192 = vpop.f32.mrf.mxu0
      %v1193 = vadd.f32 %v563, %v1192
      %1194 = vmatmul.f32.gmra.mxu0 %v713
      %v1195 = vpop.f32.mrf.mxu0
      %v1196 = vadd.f32 %v568, %v1195
      %1197 = vdwg.mxu0
      %1198 = vmatpush.msra.mxu0 0.0
      %1199 = vmatpush.msra.mxu0 0.0
      %1200 = vmatpush.msra.mxu0 0.0
      %1201 = vmatpush.msra.mxu0 0.0
      %1202 = vmatpush.msra.mxu0 0.0
      %1203 = vmatpush.msra.mxu0 0.0
      %1204 = vmatpush.msra.mxu0 0.0
      %1205 = vmatpush.msra.mxu0 0.0
      %1206 = vmatpush.msra.mxu0 0.0
      %1207 = vmatpush.msra.mxu0 0.0
      %1208 = vmatpush.msra.mxu0 0.0
      %1209 = vmatpush.msra.mxu0 0.0
      %1210 = vmatpush.msra.mxu0 0.0
      %1211 = vmatpush.msra.mxu0 0.0
      %1212 = vmatpush.msra.mxu0 0.0
      %1213 = vmatpush.msra.mxu0 %v233
      %1214 = vmatmul.f32.gmra.mxu0 %v572
      %v1215 = vpop.f32.mrf.mxu0
      %v1216 = vadd.f32 %v333, %v1215
      %1217 = vmatmul.f32.gmra.mxu0 %v575
      %v1218 = vpop.f32.mrf.mxu0
      %v1219 = vadd.f32 %v338, %v1218
      %1220 = vmatmul.f32.gmra.mxu0 %v578
      %v1221 = vpop.f32.mrf.mxu0
      %v1222 = vadd.f32 %v343, %v1221
      %1223 = vmatmul.f32.gmra.mxu0 %v581
      %v1224 = vpop.f32.mrf.mxu0
      %v1225 = vadd.f32 %v348, %v1224
      %1226 = vmatmul.f32.gmra.mxu0 %v584
      %v1227 = vpop.f32.mrf.mxu0
      %v1228 = vadd.f32 %v353, %v1227
      %1229 = vmatmul.f32.gmra.mxu0 %v587
      %v1230 = vpop.f32.mrf.mxu0
      %v1231 = vadd.f32 %v358, %v1230
      %1232 = vmatmul.f32.gmra.mxu0 %v590
      %v1233 = vpop.f32.mrf.mxu0
      %v1234 = vadd.f32 %v363, %v1233
      %1235 = vmatmul.f32.gmra.mxu0 %v593
      %v1236 = vpop.f32.mrf.mxu0
      %v1237 = vadd.f32 %v368, %v1236
      %1238 = vmatmul.f32.gmra.mxu0 %v596
      %v1239 = vpop.f32.mrf.mxu0
      %v1240 = vadd.f32 %v373, %v1239
      %1241 = vmatmul.f32.gmra.mxu0 %v599
      %v1242 = vpop.f32.mrf.mxu0
      %v1243 = vadd.f32 %v378, %v1242
      %1244 = vmatmul.f32.gmra.mxu0 %v602
      %v1245 = vpop.f32.mrf.mxu0
      %v1246 = vadd.f32 %v383, %v1245
      %1247 = vmatmul.f32.gmra.mxu0 %v605
      %v1248 = vpop.f32.mrf.mxu0
      %v1249 = vadd.f32 %v388, %v1248
      %1250 = vmatmul.f32.gmra.mxu0 %v608
      %v1251 = vpop.f32.mrf.mxu0
      %v1252 = vadd.f32 %v393, %v1251
      %1253 = vmatmul.f32.gmra.mxu0 %v611
      %v1254 = vpop.f32.mrf.mxu0
      %v1255 = vadd.f32 %v398, %v1254
      %1256 = vmatmul.f32.gmra.mxu0 %v614
      %v1257 = vpop.f32.mrf.mxu0
      %v1258 = vadd.f32 %v403, %v1257
      %1259 = vmatmul.f32.gmra.mxu0 %v617
      %v1260 = vpop.f32.mrf.mxu0
      %v1261 = vadd.f32 %v408, %v1260
      %1262 = vmatmul.f32.gmra.mxu0 %v620
      %v1263 = vpop.f32.mrf.mxu0
      %v1264 = vadd.f32 %v413, %v1263
      %1265 = vmatmul.f32.gmra.mxu0 %v623
      %v1266 = vpop.f32.mrf.mxu0
      %v1267 = vadd.f32 %v418, %v1266
      %1268 = vmatmul.f32.gmra.mxu0 %v626
      %v1269 = vpop.f32.mrf.mxu0
      %v1270 = vadd.f32 %v423, %v1269
      %1271 = vmatmul.f32.gmra.mxu0 %v629
      %v1272 = vpop.f32.mrf.mxu0
      %v1273 = vadd.f32 %v428, %v1272
      %1274 = vmatmul.f32.gmra.mxu0 %v632
      %v1275 = vpop.f32.mrf.mxu0
      %v1276 = vadd.f32 %v433, %v1275
      %1277 = vmatmul.f32.gmra.mxu0 %v635
      %v1278 = vpop.f32.mrf.mxu0
      %v1279 = vadd.f32 %v438, %v1278
      %1280 = vmatmul.f32.gmra.mxu0 %v638
      %v1281 = vpop.f32.mrf.mxu0
      %v1282 = vadd.f32 %v443, %v1281
      %1283 = vmatmul.f32.gmra.mxu0 %v641
      %v1284 = vpop.f32.mrf.mxu0
      %v1285 = vadd.f32 %v448, %v1284
      %1286 = vmatmul.f32.gmra.mxu0 %v644
      %v1287 = vpop.f32.mrf.mxu0
      %v1288 = vadd.f32 %v453, %v1287
      %1289 = vmatmul.f32.gmra.mxu0 %v647
      %v1290 = vpop.f32.mrf.mxu0
      %v1291 = vadd.f32 %v458, %v1290
      %1292 = vmatmul.f32.gmra.mxu0 %v650
      %v1293 = vpop.f32.mrf.mxu0
      %v1294 = vadd.f32 %v463, %v1293
      %1295 = vmatmul.f32.gmra.mxu0 %v653
      %v1296 = vpop.f32.mrf.mxu0
      %v1297 = vadd.f32 %v468, %v1296
      %1298 = vmatmul.f32.gmra.mxu0 %v656
      %v1299 = vpop.f32.mrf.mxu0
      %v1300 = vadd.f32 %v473, %v1299
      %1301 = vmatmul.f32.gmra.mxu0 %v659
      %v1302 = vpop.f32.mrf.mxu0
      %v1303 = vadd.f32 %v478, %v1302
      %1304 = vmatmul.f32.gmra.mxu0 %v662
      %v1305 = vpop.f32.mrf.mxu0
      %v1306 = vadd.f32 %v483, %v1305
      %1307 = vmatmul.f32.gmra.mxu0 %v665
      %v1308 = vpop.f32.mrf.mxu0
      %v1309 = vadd.f32 %v488, %v1308
      %1310 = vmatmul.f32.gmra.mxu0 %v668
      %v1311 = vpop.f32.mrf.mxu0
      %v1312 = vadd.f32 %v493, %v1311
      %1313 = vmatmul.f32.gmra.mxu0 %v671
      %v1314 = vpop.f32.mrf.mxu0
      %v1315 = vadd.f32 %v498, %v1314
      %1316 = vmatmul.f32.gmra.mxu0 %v674
      %v1317 = vpop.f32.mrf.mxu0
      %v1318 = vadd.f32 %v503, %v1317
      %1319 = vmatmul.f32.gmra.mxu0 %v677
      %v1320 = vpop.f32.mrf.mxu0
      %v1321 = vadd.f32 %v508, %v1320
      %1322 = vmatmul.f32.gmra.mxu0 %v680
      %v1323 = vpop.f32.mrf.mxu0
      %v1324 = vadd.f32 %v513, %v1323
      %1325 = vmatmul.f32.gmra.mxu0 %v683
      %v1326 = vpop.f32.mrf.mxu0
      %v1327 = vadd.f32 %v518, %v1326
      %1328 = vmatmul.f32.gmra.mxu0 %v686
      %v1329 = vpop.f32.mrf.mxu0
      %v1330 = vadd.f32 %v523, %v1329
      %1331 = vmatmul.f32.gmra.mxu0 %v689
      %v1332 = vpop.f32.mrf.mxu0
      %v1333 = vadd.f32 %v528, %v1332
      %1334 = vmatmul.f32.gmra.mxu0 %v692
      %v1335 = vpop.f32.mrf.mxu0
      %v1336 = vadd.f32 %v533, %v1335
      %1337 = vmatmul.f32.gmra.mxu0 %v695
      %v1338 = vpop.f32.mrf.mxu0
      %v1339 = vadd.f32 %v538, %v1338
      %1340 = vmatmul.f32.gmra.mxu0 %v698
      %v1341 = vpop.f32.mrf.mxu0
      %v1342 = vadd.f32 %v543, %v1341
      %1343 = vmatmul.f32.gmra.mxu0 %v701
      %v1344 = vpop.f32.mrf.mxu0
      %v1345 = vadd.f32 %v548, %v1344
      %1346 = vmatmul.f32.gmra.mxu0 %v704
      %v1347 = vpop.f32.mrf.mxu0
      %v1348 = vadd.f32 %v553, %v1347
      %1349 = vmatmul.f32.gmra.mxu0 %v707
      %v1350 = vpop.f32.mrf.mxu0
      %v1351 = vadd.f32 %v558, %v1350
      %1352 = vmatmul.f32.gmra.mxu0 %v710
      %v1353 = vpop.f32.mrf.mxu0
      %v1354 = vadd.f32 %v563, %v1353
      %1355 = vmatmul.f32.gmra.mxu0 %v713
      %v1356 = vpop.f32.mrf.mxu0
      %v1357 = vadd.f32 %v568, %v1356
      %1358 = vdwg.mxu0
      %v1359 = vld [vmem:[%s3] sm:$0x77]
      %v1360 = vld [vmem:[%s3 + $0x8] sm:$0x7]
      %v1361 = vld [vmem:[%s4] sm:$0x7]
      %1363 = vset.pattern.permute.xlu0 0
      %1364 = vperm.xlu0 %1363, %v1361
      %v1365 = vpop.permute.xlu0 %1364
      %1369 = vst [vmem:[#allocation1] ss:$2 sm:$0xff] %v1359
      %s1370 = scalar_lea.vmem [#allocation1], 16
      %1371 = vst [vmem:[%s1370] ss:$2 sm:$0xff] %v1360
      %v1372 = vld.sshfl [vmem:[#allocation1] sm:$0xff pattern:$0x75316420]
      %v1373 = vld.sshfl [vmem:[#allocation1 + $0x8] sm:$0xff pattern:$0x75316420]
      %v1374 = vld.sshfl [vmem:[#allocation1 + $0x10] sm:$0xff pattern:$0x75316420]
      %1378 = vmatpush.msra.mxu0 %v778
      %1379 = vmatpush.msra.mxu0 %v775
      %1380 = vmatpush.msra.mxu0 %v772
      %1381 = vmatpush.msra.mxu0 %v769
      %1382 = vmatpush.msra.mxu0 %v766
      %1383 = vmatpush.msra.mxu0 %v763
      %1384 = vmatpush.msra.mxu0 %v760
      %1385 = vmatpush.msra.mxu0 %v757
      %1386 = vmatpush.msra.mxu0 %v754
      %1387 = vmatpush.msra.mxu0 %v751
      %1388 = vmatpush.msra.mxu0 %v748
      %1389 = vmatpush.msra.mxu0 %v745
      %1390 = vmatpush.msra.mxu0 %v742
      %1391 = vmatpush.msra.mxu0 %v739
      %1392 = vmatpush.msra.mxu0 %v736
      %1393 = vmatpush.msra.mxu0 %v733
      %1394 = vmatmul.f32.gmra.mxu0 %v1372
      %v1395 = vpop.f32.mrf.mxu0
      %v1396 = vadd.f32 %v1365, %v1395
      %1397 = vdwg.mxu0
      %1398 = vmatpush.msra.mxu0 %v826
      %1399 = vmatpush.msra.mxu0 %v823
      %1400 = vmatpush.msra.mxu0 %v820
      %1401 = vmatpush.msra.mxu0 %v817
      %1402 = vmatpush.msra.mxu0 %v814
      %1403 = vmatpush.msra.mxu0 %v811
      %1404 = vmatpush.msra.mxu0 %v808
      %1405 = vmatpush.msra.mxu0 %v805
      %1406 = vmatpush.msra.mxu0 %v802
      %1407 = vmatpush.msra.mxu0 %v799
      %1408 = vmatpush.msra.mxu0 %v796
      %1409 = vmatpush.msra.mxu0 %v793
      %1410 = vmatpush.msra.mxu0 %v790
      %1411 = vmatpush.msra.mxu0 %v787
      %1412 = vmatpush.msra.mxu0 %v784
      %1413 = vmatpush.msra.mxu0 %v781
      %1414 = vmatmul.f32.gmra.mxu0 %v1373
      %v1415 = vpop.f32.mrf.mxu0
      %v1416 = vadd.f32 %v1396, %v1415
      %1417 = vdwg.mxu0
      %1418 = vmatpush.msra.mxu0 %v874
      %1419 = vmatpush.msra.mxu0 %v871
      %1420 = vmatpush.msra.mxu0 %v868
      %1421 = vmatpush.msra.mxu0 %v865
      %1422 = vmatpush.msra.mxu0 %v862
      %1423 = vmatpush.msra.mxu0 %v859
      %1424 = vmatpush.msra.mxu0 %v856
      %1425 = vmatpush.msra.mxu0 %v853
      %1426 = vmatpush.msra.mxu0 %v850
      %1427 = vmatpush.msra.mxu0 %v847
      %1428 = vmatpush.msra.mxu0 %v844
      %1429 = vmatpush.msra.mxu0 %v841
      %1430 = vmatpush.msra.mxu0 %v838
      %1431 = vmatpush.msra.mxu0 %v835
      %1432 = vmatpush.msra.mxu0 %v832
      %1433 = vmatpush.msra.mxu0 %v829
      %1434 = vmatmul.f32.gmra.mxu0 %v1374
      %v1435 = vpop.f32.mrf.mxu0
      %v1436 = vadd.f32 %v1416, %v1435
      %1437 = vdwg.mxu0
      %1438 = vmatpush.msra.mxu0 %v939
      %1439 = vmatpush.msra.mxu0 %v936
      %1440 = vmatpush.msra.mxu0 %v933
      %1441 = vmatpush.msra.mxu0 %v930
      %1442 = vmatpush.msra.mxu0 %v927
      %1443 = vmatpush.msra.mxu0 %v924
      %1444 = vmatpush.msra.mxu0 %v921
      %1445 = vmatpush.msra.mxu0 %v918
      %1446 = vmatpush.msra.mxu0 %v915
      %1447 = vmatpush.msra.mxu0 %v912
      %1448 = vmatpush.msra.mxu0 %v909
      %1449 = vmatpush.msra.mxu0 %v906
      %1450 = vmatpush.msra.mxu0 %v903
      %1451 = vmatpush.msra.mxu0 %v900
      %1452 = vmatpush.msra.mxu0 %v897
      %1453 = vmatpush.msra.mxu0 %v894
      %1454 = vmatmul.f32.gmra.mxu0 %v1372
      %v1455 = vpop.f32.mrf.mxu0
      %v1456 = vadd.f32 %v1365, %v1455
      %1457 = vdwg.mxu0
      %1458 = vmatpush.msra.mxu0 %v987
      %1459 = vmatpush.msra.mxu0 %v984
      %1460 = vmatpush.msra.mxu0 %v981
      %1461 = vmatpush.msra.mxu0 %v978
      %1462 = vmatpush.msra.mxu0 %v975
      %1463 = vmatpush.msra.mxu0 %v972
      %1464 = vmatpush.msra.mxu0 %v969
      %1465 = vmatpush.msra.mxu0 %v966
      %1466 = vmatpush.msra.mxu0 %v963
      %1467 = vmatpush.msra.mxu0 %v960
      %1468 = vmatpush.msra.mxu0 %v957
      %1469 = vmatpush.msra.mxu0 %v954
      %1470 = vmatpush.msra.mxu0 %v951
      %1471 = vmatpush.msra.mxu0 %v948
      %1472 = vmatpush.msra.mxu0 %v945
      %1473 = vmatpush.msra.mxu0 %v942
      %1474 = vmatmul.f32.gmra.mxu0 %v1373
      %v1475 = vpop.f32.mrf.mxu0
      %v1476 = vadd.f32 %v1456, %v1475
      %1477 = vdwg.mxu0
      %1478 = vmatpush.msra.mxu0 %v1035
      %1479 = vmatpush.msra.mxu0 %v1032
      %1480 = vmatpush.msra.mxu0 %v1029
      %1481 = vmatpush.msra.mxu0 %v1026
      %1482 = vmatpush.msra.mxu0 %v1023
      %1483 = vmatpush.msra.mxu0 %v1020
      %1484 = vmatpush.msra.mxu0 %v1017
      %1485 = vmatpush.msra.mxu0 %v1014
      %1486 = vmatpush.msra.mxu0 %v1011
      %1487 = vmatpush.msra.mxu0 %v1008
      %1488 = vmatpush.msra.mxu0 %v1005
      %1489 = vmatpush.msra.mxu0 %v1002
      %1490 = vmatpush.msra.mxu0 %v999
      %1491 = vmatpush.msra.mxu0 %v996
      %1492 = vmatpush.msra.mxu0 %v993
      %1493 = vmatpush.msra.mxu0 %v990
      %1494 = vmatmul.f32.gmra.mxu0 %v1374
      %v1495 = vpop.f32.mrf.mxu0
      %v1496 = vadd.f32 %v1476, %v1495
      %1497 = vdwg.mxu0
      %1498 = vmatpush.msra.mxu0 %v1100
      %1499 = vmatpush.msra.mxu0 %v1097
      %1500 = vmatpush.msra.mxu0 %v1094
      %1501 = vmatpush.msra.mxu0 %v1091
      %1502 = vmatpush.msra.mxu0 %v1088
      %1503 = vmatpush.msra.mxu0 %v1085
      %1504 = vmatpush.msra.mxu0 %v1082
      %1505 = vmatpush.msra.mxu0 %v1079
      %1506 = vmatpush.msra.mxu0 %v1076
      %1507 = vmatpush.msra.mxu0 %v1073
      %1508 = vmatpush.msra.mxu0 %v1070
      %1509 = vmatpush.msra.mxu0 %v1067
      %1510 = vmatpush.msra.mxu0 %v1064
      %1511 = vmatpush.msra.mxu0 %v1061
      %1512 = vmatpush.msra.mxu0 %v1058
      %1513 = vmatpush.msra.mxu0 %v1055
      %1514 = vmatmul.f32.gmra.mxu0 %v1372
      %v1515 = vpop.f32.mrf.mxu0
      %v1516 = vadd.f32 %v1365, %v1515
      %1517 = vdwg.mxu0
      %1518 = vmatpush.msra.mxu0 %v1148
      %1519 = vmatpush.msra.mxu0 %v1145
      %1520 = vmatpush.msra.mxu0 %v1142
      %1521 = vmatpush.msra.mxu0 %v1139
      %1522 = vmatpush.msra.mxu0 %v1136
      %1523 = vmatpush.msra.mxu0 %v1133
      %1524 = vmatpush.msra.mxu0 %v1130
      %1525 = vmatpush.msra.mxu0 %v1127
      %1526 = vmatpush.msra.mxu0 %v1124
      %1527 = vmatpush.msra.mxu0 %v1121
      %1528 = vmatpush.msra.mxu0 %v1118
      %1529 = vmatpush.msra.mxu0 %v1115
      %1530 = vmatpush.msra.mxu0 %v1112
      %1531 = vmatpush.msra.mxu0 %v1109
      %1532 = vmatpush.msra.mxu0 %v1106
      %1533 = vmatpush.msra.mxu0 %v1103
      %1534 = vmatmul.f32.gmra.mxu0 %v1373
      %v1535 = vpop.f32.mrf.mxu0
      %v1536 = vadd.f32 %v1516, %v1535
      %1537 = vdwg.mxu0
      %1538 = vmatpush.msra.mxu0 %v1196
      %1539 = vmatpush.msra.mxu0 %v1193
      %1540 = vmatpush.msra.mxu0 %v1190
      %1541 = vmatpush.msra.mxu0 %v1187
      %1542 = vmatpush.msra.mxu0 %v1184
      %1543 = vmatpush.msra.mxu0 %v1181
      %1544 = vmatpush.msra.mxu0 %v1178
      %1545 = vmatpush.msra.mxu0 %v1175
      %1546 = vmatpush.msra.mxu0 %v1172
      %1547 = vmatpush.msra.mxu0 %v1169
      %1548 = vmatpush.msra.mxu0 %v1166
      %1549 = vmatpush.msra.mxu0 %v1163
      %1550 = vmatpush.msra.mxu0 %v1160
      %1551 = vmatpush.msra.mxu0 %v1157
      %1552 = vmatpush.msra.mxu0 %v1154
      %1553 = vmatpush.msra.mxu0 %v1151
      %1554 = vmatmul.f32.gmra.mxu0 %v1374
      %v1555 = vpop.f32.mrf.mxu0
      %v1556 = vadd.f32 %v1536, %v1555
      %1557 = vdwg.mxu0
      %1558 = vmatpush.msra.mxu0 %v1261
      %1559 = vmatpush.msra.mxu0 %v1258
      %1560 = vmatpush.msra.mxu0 %v1255
      %1561 = vmatpush.msra.mxu0 %v1252
      %1562 = vmatpush.msra.mxu0 %v1249
      %1563 = vmatpush.msra.mxu0 %v1246
      %1564 = vmatpush.msra.mxu0 %v1243
      %1565 = vmatpush.msra.mxu0 %v1240
      %1566 = vmatpush.msra.mxu0 %v1237
      %1567 = vmatpush.msra.mxu0 %v1234
      %1568 = vmatpush.msra.mxu0 %v1231
      %1569 = vmatpush.msra.mxu0 %v1228
      %1570 = vmatpush.msra.mxu0 %v1225
      %1571 = vmatpush.msra.mxu0 %v1222
      %1572 = vmatpush.msra.mxu0 %v1219
      %1573 = vmatpush.msra.mxu0 %v1216
      %1574 = vmatmul.f32.gmra.mxu0 %v1372
      %v1575 = vpop.f32.mrf.mxu0
      %v1576 = vadd.f32 %v1365, %v1575
      %1577 = vdwg.mxu0
      %1578 = vmatpush.msra.mxu0 %v1309
      %1579 = vmatpush.msra.mxu0 %v1306
      %1580 = vmatpush.msra.mxu0 %v1303
      %1581 = vmatpush.msra.mxu0 %v1300
      %1582 = vmatpush.msra.mxu0 %v1297
      %1583 = vmatpush.msra.mxu0 %v1294
      %1584 = vmatpush.msra.mxu0 %v1291
      %1585 = vmatpush.msra.mxu0 %v1288
      %1586 = vmatpush.msra.mxu0 %v1285
      %1587 = vmatpush.msra.mxu0 %v1282
      %1588 = vmatpush.msra.mxu0 %v1279
      %1589 = vmatpush.msra.mxu0 %v1276
      %1590 = vmatpush.msra.mxu0 %v1273
      %1591 = vmatpush.msra.mxu0 %v1270
      %1592 = vmatpush.msra.mxu0 %v1267
      %1593 = vmatpush.msra.mxu0 %v1264
      %1594 = vmatmul.f32.gmra.mxu0 %v1373
      %v1595 = vpop.f32.mrf.mxu0
      %v1596 = vadd.f32 %v1576, %v1595
      %1597 = vdwg.mxu0
      %1598 = vmatpush.msra.mxu0 %v1357
      %1599 = vmatpush.msra.mxu0 %v1354
      %1600 = vmatpush.msra.mxu0 %v1351
      %1601 = vmatpush.msra.mxu0 %v1348
      %1602 = vmatpush.msra.mxu0 %v1345
      %1603 = vmatpush.msra.mxu0 %v1342
      %1604 = vmatpush.msra.mxu0 %v1339
      %1605 = vmatpush.msra.mxu0 %v1336
      %1606 = vmatpush.msra.mxu0 %v1333
      %1607 = vmatpush.msra.mxu0 %v1330
      %1608 = vmatpush.msra.mxu0 %v1327
      %1609 = vmatpush.msra.mxu0 %v1324
      %1610 = vmatpush.msra.mxu0 %v1321
      %1611 = vmatpush.msra.mxu0 %v1318
      %1612 = vmatpush.msra.mxu0 %v1315
      %1613 = vmatpush.msra.mxu0 %v1312
      %1614 = vmatmul.f32.gmra.mxu0 %v1374
      %v1615 = vpop.f32.mrf.mxu0
      %v1616 = vadd.f32 %v1596, %v1615
      %1617 = vdwg.mxu0
      %v1622 = vrot.slane %v1496, 4
      %v1623 = vrot.slane %v1616, 4
      %vm1624 = vcmask 1043456
      %v1625 = vsel %vm1624, %v1436, %v1622
      %v1626 = vsel %vm1624, %v1556, %v1623
      %1629 = vst [vmem:[%s226] sm:$0x77] %v1625
      %1630 = vst [vmem:[%s226 + $0x8] sm:$0x77] %v1626
      %s1631 = smul.u32 4, %s16
      %p1632 = scmp.lt.s32.totalorder %s1631, 7
      %s1633 = scalar_select %p1632, %s1631, 7
      %s1634 = smul.addr %s1633, 4
      %s1635 = scalar_lea.vmem %s5, %s1634
      // Predicated region
      $region41: #{ffno3d_forward.21} parent=39 // pred_check
        %p1636 = pneg %p144
      $region42: #{ffno3d_forward.21} parent=39 // pred_check_branch
        %1638 = sbr.rel (%p1636) target = $region44
      $region43: #{ffno3d_forward.21} parent=39 // pred_region
        %s1639 = smul.u32 4, %s16
      $region44: #{ffno3d_forward.21} parent=39 // pred_fallthru
        _
    $region40: #{ffno3d_forward.21} parent=5 // pred_fallthru
      _
    %p1640 = scmp.le.s32.totalorder 2, %s11
    // Predicated region
    $region45: #{ffno3d_forward.21} parent=5 // pred_check
      %p1641 = pneg %p1640
    $region46: #{ffno3d_forward.21} parent=5 // pred_check_branch
      %1643 = sbr.rel (%p1641) target = $region48
    $region47: #{ffno3d_forward.21} parent=5 // pred_region
      %s1644 = ssub.s32 %s11, 2
      // Predicated region
      $region49: #{ffno3d_forward.21} parent=47 // pred_check
        %p1645 = pneg %p150
      $region50: #{ffno3d_forward.21} parent=47 // pred_check_branch
        %1647 = sbr.rel (%p1645) target = $region52
      $region51: #{ffno3d_forward.21} parent=47 // pred_region
        %s1648 = smul.u32 4, %s17
        %p1649 = scmp.lt.s32.totalorder %s1648, 7
        %s1650 = scalar_select %p1649, %s1648, 7
        %s1651 = smul.addr %s1650, 4
        %s1652 = scalar_lea.vmem %s5, %s1651
      $region52: #{ffno3d_forward.21} parent=47 // pred_fallthru
        _
    $region48: #{ffno3d_forward.21} parent=5 // pred_fallthru
      _
  $region6: #{ffno3d_forward.21} parent=0 // loop_footer
    %s15 = sadd.s32 1, %s11
  $region7: #{ffno3d_forward.21} parent=0 // loop_footer_branch
    %10 = sbr.rel target = $region3
  $region8: #{ffno3d_forward.21} parent=0 // loop_exit
    _

</llo_original>
